<compile_context>
chip_gen: v7x
topology: tpu7x:2x2x1
jax: 0.10.0
libtpu: 0.0.40
codegen_flags: <defaults>
</compile_context>

<pallas_src>
import numpy as np
import jax
import jax.numpy as jnp
from jax import lax
from jax.experimental import pallas as pl
from jax.experimental.pallas import tpu as pltpu

POOL_K = 5
POOL_S = 3
OUT_HW = 4                      # (14 - 5) // 3 + 1
N_POS = OUT_HW * OUT_HW         # 16 pooled positions
RED_C = 128                     # 1x1 reduction conv output channels
FLAT = N_POS * RED_C            # 2048 = fc1 in_features
FC1_OUT = 1024
BN_EPS = 1e-3
TJ = 256                        # fc1 output-column tile streamed per grid step


def _pooling_matrix(spatial):
    """(16, H*W) matrix whose row p averages the 5x5 window of AvgPool(5, s=3)."""
    pm = np.zeros((N_POS, spatial * spatial), np.float32)
    inv = 1.0 / (POOL_K * POOL_K)
    for i in range(OUT_HW):
        for j in range(OUT_HW):
            p = i * OUT_HW + j
            for r in range(POOL_S * i, POOL_S * i + POOL_K):
                for c in range(POOL_S * j, POOL_S * j + POOL_K):
                    pm[p, r * spatial + c] = inv
    return jnp.asarray(pm)


def prepare_params(params, spatial=14):
    """One-time host-side prep: fold eval-mode BN into the conv weight, permute
    w1 rows to the kernel's flat ordering, cast w1 to bf16, build pooling matrix."""
    scale = params["gamma"] / jnp.sqrt(params["rvar"] + BN_EPS)
    shift = params["beta"] - params["rmean"] * scale
    nf = params["w2"].shape[1]
    # PyTorch flatten column = k*16 + p ; kernel flat column = p*128 + k.
    w1p = (params["w1"].reshape(RED_C, N_POS, FC1_OUT)
           .transpose(1, 0, 2).reshape(FLAT, FC1_OUT))
    return {
        "pmat": _pooling_matrix(spatial),                             # (16, HW) f32
        "wc": (params["wc"] * scale[:, None]).astype(jnp.float32),    # (128, Cin)
        "shift": shift.reshape(1, RED_C).astype(jnp.float32),         # (1, 128)
        "w1": w1p.astype(jnp.bfloat16),                               # (2048, 1024) bf16
        "b1": params["b1"].reshape(1, FC1_OUT).astype(jnp.float32),   # (1, 1024)
        "w2": params["w2"].astype(jnp.float32),                       # (1024, nf)
        "b2": params["b2"].reshape(1, nf).astype(jnp.float32),        # (1, nf)
    }


def auxiliary_block_forward(x_nchw, prep):
    """Fused forward pass. x_nchw: (N, Cin, 14, 14) float32."""
    n, cin, hh, ww = x_nchw.shape
    assert hh == ww and (hh - POOL_K) // POOL_S + 1 == OUT_HW, "spatial must be 14"
    assert FC1_OUT % TJ == 0
    hw = hh * ww
    x2 = x_nchw.reshape(n * cin, hw)          # lane-dense: H*W in lanes (free reshape)

    nb = 8 if n % 8 == 0 else n               # samples per batch block
    nblk = n // nb
    jblk = FC1_OUT // TJ
    nf = prep["w2"].shape[1]

    def kernel(x_ref, pmat_ref, wc_ref, shift_ref, w1_ref, b1_ref, w2_ref,
               b2_ref, o_ref, flat_ref, acc_ref):
        j = pl.program_id(1)

        # ---- phase A (once per batch block): pool + 1x1 conv + BN + ReLU ----
        @pl.when(j == 0)
        def _init():
            acc_ref[...] = jnp.zeros_like(acc_ref)
            pmat = pmat_ref[...]                      # (16, HW)
            wc = wc_ref[...]                          # (128, Cin), BN scale folded
            shift = shift_ref[...]                    # (1, 128)
            for s in range(nb):                       # static unroll over samples
                x_s = x_ref[s * cin:(s + 1) * cin, :]                    # (Cin, HW)
                pooled_t = lax.dot_general(                              # (16, Cin)
                    pmat, x_s, (((1,), (1,)), ((), ())),
                    preferred_element_type=jnp.float32)
                feat_t = lax.dot_general(                                # (16, 128)
                    pooled_t, wc, (((1,), (1,)), ((), ())),
                    preferred_element_type=jnp.float32)
                feat_t = jnp.maximum(feat_t + shift, 0.0)
                for p in range(N_POS):                # flat column = p*128 + k
                    flat_ref[s:s + 1, p * RED_C:(p + 1) * RED_C] = feat_t[p:p + 1, :]

        # ---- phase B (every step): fc1 column tile + ReLU + fc2 partial ----
        h = jnp.dot(flat_ref[...].astype(jnp.bfloat16), w1_ref[...],
                    preferred_element_type=jnp.float32)                  # (nb, TJ)
        h = jnp.maximum(h + b1_ref[...], 0.0)
        # TODO(synk): nn.Dropout(p=0.7) is identity in eval mode; training-mode
        # stochastic masking is not modeled here.
        acc_ref[...] += jnp.dot(h, w2_ref[...], preferred_element_type=jnp.float32)

        @pl.when(j == pl.num_programs(1) - 1)
        def _finish():
            o_ref[...] = acc_ref[...] + b2_ref[...]

    flops = int(2 * n * N_POS * hw * cin          # pooling matmuls
                + 2 * n * N_POS * cin * RED_C     # 1x1 conv
                + 2 * n * FLAT * FC1_OUT          # fc1
                + 2 * n * FC1_OUT * nf)           # fc2
    bytes_accessed = int(sum(int(a.size) * a.dtype.itemsize for a in
                             (x2, prep["pmat"], prep["wc"], prep["shift"],
                              prep["w1"], prep["b1"], prep["w2"], prep["b2"]))
                         + n * nf * 4)

    return pl.pallas_call(
        kernel,
        out_shape=jax.ShapeDtypeStruct((n, nf), jnp.float32),
        grid_spec=pltpu.PrefetchScalarGridSpec(
            num_scalar_prefetch=0,
            grid=(nblk, jblk),
            in_specs=[
                pl.BlockSpec((nb * cin, hw), lambda b, j: (b, 0)),    # x (lane-dense)
                pl.BlockSpec((N_POS, hw), lambda b, j: (0, 0)),       # pooling matrix
                pl.BlockSpec((RED_C, cin), lambda b, j: (0, 0)),      # folded conv weight
                pl.BlockSpec((1, RED_C), lambda b, j: (0, 0)),        # BN shift
                pl.BlockSpec((FLAT, TJ), lambda b, j: (0, j)),        # w1 (bf16, streamed)
                pl.BlockSpec((1, TJ), lambda b, j: (0, j)),           # b1
                pl.BlockSpec((TJ, nf), lambda b, j: (j, 0)),          # w2
                pl.BlockSpec((1, nf), lambda b, j: (0, 0)),           # b2
            ],
            out_specs=pl.BlockSpec((nb, nf), lambda b, j: (b, 0)),
            scratch_shapes=[
                pltpu.VMEM((nb, FLAT), jnp.float32),   # flattened reduction output
                pltpu.VMEM((nb, nf), jnp.float32),     # fc2 accumulator
            ],
        ),
        compiler_params=pltpu.CompilerParams(
            dimension_semantics=("parallel", "arbitrary"),
            vmem_limit_bytes=32 * 1024 * 1024,
        ),
        cost_estimate=pl.CostEstimate(flops=flops, transcendentals=0,
                                      bytes_accessed=bytes_accessed),
    )(x2, prep["pmat"], prep["wc"], prep["shift"], prep["w1"], prep["b1"],
      prep["w2"], prep["b2"])


# ---------------------------------------------------------------------------
# Pure-JAX reference (mirrors the PyTorch module in eval mode, NCHW).
# ---------------------------------------------------------------------------
def reference(x_nchw, params):
    n = x_nchw.shape[0]
    pooled = jnp.stack([
        jnp.stack([
            jnp.mean(x_nchw[:, :, POOL_S * i:POOL_S * i + POOL_K,
                            POOL_S * j:POOL_S * j + POOL_K], axis=(2, 3))
            for j in range(OUT_HW)], axis=-1)
        for i in range(OUT_HW)], axis=-2)                         # (N, Cin, 4, 4)
    y = jnp.einsum('nchw,kc->nkhw', pooled, params["wc"])
    y = (y - params["rmean"][None, :, None, None]) / jnp.sqrt(
        params["rvar"][None, :, None, None] + BN_EPS)
    y = y * params["gamma"][None, :, None, None] + params["beta"][None, :, None, None]
    y = jnp.maximum(y, 0.0)
    flat = y.reshape(n, -1)
    h = jnp.maximum(flat @ params["w1"] + params["b1"], 0.0)
    return h @ params["w2"] + params["b2"]


if __name__ == "__main__":
    batch = 2
    in_channels = 4
    num_features = 16
    spatial = 14            # required so that AvgPool(5, stride=3) -> 4x4

    key = jax.random.PRNGKey(0)
    ks = jax.random.split(key, 10)

    x = jax.random.normal(ks[0], (batch, in_channels, spatial, spatial),
                          dtype=jnp.float32)

    params = {
        # Conv2d(in_channels, 128, kernel_size=1, bias=False) -> squeezed weight
        "wc": 0.2 * jax.random.normal(ks[1], (RED_C, in_channels), jnp.float32),
        # BatchNorm2d(128, eps=1e-3) eval-mode statistics / affine params
        "gamma": 1.0 + 0.1 * jax.random.normal(ks[2], (RED_C,), jnp.float32),
        "beta": 0.05 * jax.random.normal(ks[3], (RED_C,), jnp.float32),
        "rmean": 0.1 * jax.random.normal(ks[4], (RED_C,), jnp.float32),
        "rvar": 0.5 + jnp.abs(jax.random.normal(ks[5], (RED_C,), jnp.float32)),
        # Linear(2048 -> 1024)
        "w1": jax.random.normal(ks[6], (FLAT, FC1_OUT), jnp.float32)
              / jnp.sqrt(FLAT).astype(jnp.float32),
        "b1": 0.01 * jax.random.normal(ks[7], (FC1_OUT,), jnp.float32),
        # Linear(1024 -> num_features)
        "w2": jax.random.normal(ks[8], (FC1_OUT, num_features), jnp.float32)
              / jnp.sqrt(FC1_OUT).astype(jnp.float32),
        "b2": 0.01 * jax.random.normal(ks[9], (num_features,), jnp.float32),
    }

    prep = prepare_params(params, spatial=spatial)

    out = jax.block_until_ready(auxiliary_block_forward(x, prep))
    ref = jax.block_until_ready(reference(x, params))

    assert out.shape == (batch, num_features), out.shape
    assert jnp.allclose(out, ref, rtol=2e-2, atol=2e-2), (
        float(jnp.max(jnp.abs(out - ref))))

    print("KERNEL_OK")
</pallas_src>

<mosaic_0001>
module attributes {stable_mosaic.version = 11 : i64} {
  func.func @kernel(%arg0: i32, %arg1: i32, %arg2: memref<8x196xf32, #tpu.memory_space<vmem>>, %arg3: memref<16x196xf32, #tpu.memory_space<vmem>>, %arg4: memref<128x4xf32, #tpu.memory_space<vmem>>, %arg5: memref<1x128xf32, #tpu.memory_space<vmem>>, %arg6: memref<2048x256xbf16, #tpu.memory_space<vmem>>, %arg7: memref<1x256xf32, #tpu.memory_space<vmem>>, %arg8: memref<256x16xf32, #tpu.memory_space<vmem>>, %arg9: memref<1x16xf32, #tpu.memory_space<vmem>>, %arg10: memref<2x16xf32, #tpu.memory_space<vmem>>, %arg11: memref<2x2048xf32, #tpu.memory_space<vmem>>, %arg12: memref<2x16xf32, #tpu.memory_space<vmem>>) attributes {dimension_semantics = [#tpu.dimension_semantics<parallel>, #tpu.dimension_semantics<arbitrary>], iteration_bounds = array<i64: 1, 4>, scalar_prefetch = 0 : i64, scratch_operands = 2 : i64, tpu.core_type = #tpu.core_type<tc>, window_params = [{transform_indices = @transform_0, window_bounds = array<i64: 8, 196>}, {pipeline_mode = #tpu.pipeline_mode<synchronous>, transform_indices = @transform_1, window_bounds = array<i64: 16, 196>}, {pipeline_mode = #tpu.pipeline_mode<synchronous>, transform_indices = @transform_2, window_bounds = array<i64: 128, 4>}, {pipeline_mode = #tpu.pipeline_mode<synchronous>, transform_indices = @transform_3, window_bounds = array<i64: 1, 128>}, {transform_indices = @transform_4, window_bounds = array<i64: 2048, 256>}, {transform_indices = @transform_5, window_bounds = array<i64: 1, 256>}, {transform_indices = @transform_6, window_bounds = array<i64: 256, 16>}, {pipeline_mode = #tpu.pipeline_mode<synchronous>, transform_indices = @transform_7, window_bounds = array<i64: 1, 16>}, {transform_indices = @transform_8, window_bounds = array<i64: 2, 16>}]} {
    %c0_i32 = arith.constant 0 : i32
    %0 = arith.cmpi eq, %arg1, %c0_i32 : i32
    %1 = arith.extui %0 : i1 to i32
    %c0_i32_0 = arith.constant 0 : i32
    %2 = arith.cmpi ne, %1, %c0_i32_0 : i32
    scf.if %2 {
      %cst_15 = arith.constant 0.000000e+00 : f32
      %20 = vector.broadcast %cst_15 : f32 to vector<2x16xf32>
      %c0_16 = arith.constant 0 : index
      %c0_17 = arith.constant 0 : index
      %21 = vector.load %arg12[%c0_16, %c0_17] : memref<2x16xf32, #tpu.memory_space<vmem>>, vector<2x16xf32>
      tpu.vector_store %arg12[%c0_16, %c0_17], %20 {strides = array<i32>} : memref<2x16xf32, #tpu.memory_space<vmem>>, vector<2x16xf32>,
      %c0_18 = arith.constant 0 : index
      %c0_19 = arith.constant 0 : index
      %22 = vector.load %arg3[%c0_18, %c0_19] : memref<16x196xf32, #tpu.memory_space<vmem>>, vector<16x196xf32>
      %c0_20 = arith.constant 0 : index
      %c0_21 = arith.constant 0 : index
      %23 = vector.load %arg4[%c0_20, %c0_21] : memref<128x4xf32, #tpu.memory_space<vmem>>, vector<128x4xf32>
      %c0_22 = arith.constant 0 : index
      %c0_23 = arith.constant 0 : index
      %24 = vector.load %arg5[%c0_22, %c0_23] : memref<1x128xf32, #tpu.memory_space<vmem>>, vector<1x128xf32>
      %c0_24 = arith.constant 0 : index
      %c0_25 = arith.constant 0 : index
      %25 = vector.load %arg2[%c0_24, %c0_25] : memref<8x196xf32, #tpu.memory_space<vmem>>, vector<4x196xf32>
      %cst_26 = arith.constant dense<0.000000e+00> : vector<16x4xf32>
      %26 = tpu.matmul %22, %25, %cst_26 {dimension_numbers = #tpu.dot_dimension_numbers<[1], [1], [0], [0], [0, 0, 1, 0], [], []>} : vector<16x196xf32>, vector<4x196xf32>, vector<16x4xf32> -> vector<16x4xf32>
      %cst_27 = arith.constant dense<0.000000e+00> : vector<16x128xf32>
      %27 = tpu.matmul %26, %23, %cst_27 {dimension_numbers = #tpu.dot_dimension_numbers<[1], [1], [0], [0], [0, 0, 1, 0], [], []>} : vector<16x4xf32>, vector<128x4xf32>, vector<16x128xf32> -> vector<16x128xf32>
      %28 = vector.broadcast %24 : vector<1x128xf32> to vector<16x128xf32>
      %29 = arith.addf %27, %28 : vector<16x128xf32>
      %cst_28 = arith.constant 0.000000e+00 : f32
      %30 = vector.broadcast %cst_28 : f32 to vector<16x128xf32>
      %31 = arith.maximumf %29, %30 : vector<16x128xf32>
      %32 = vector.extract_strided_slice %31 {offsets = [0, 0], sizes = [1, 128], strides = [1, 1]} : vector<16x128xf32> to vector<1x128xf32>
      %c0_29 = arith.constant 0 : index
      %c0_30 = arith.constant 0 : index
      %33 = vector.load %arg11[%c0_29, %c0_30] : memref<2x2048xf32, #tpu.memory_space<vmem>>, vector<1x128xf32>
      tpu.vector_store %arg11[%c0_29, %c0_30], %32 {strides = array<i32>} : memref<2x2048xf32, #tpu.memory_space<vmem>>, vector<1x128xf32>,
      %34 = vector.extract_strided_slice %31 {offsets = [1, 0], sizes = [1, 128], strides = [1, 1]} : vector<16x128xf32> to vector<1x128xf32>
      %c0_31 = arith.constant 0 : index
      %c128 = arith.constant 128 : index
      %35 = vector.load %arg11[%c0_31, %c128] : memref<2x2048xf32, #tpu.memory_space<vmem>>, vector<1x128xf32>
      tpu.vector_store %arg11[%c0_31, %c128], %34 {strides = array<i32>} : memref<2x2048xf32, #tpu.memory_space<vmem>>, vector<1x128xf32>,
      %36 = vector.extract_strided_slice %31 {offsets = [2, 0], sizes = [1, 128], strides = [1, 1]} : vector<16x128xf32> to vector<1x128xf32>
      %c0_32 = arith.constant 0 : index
      %c256 = arith.constant 256 : index
      %37 = vector.load %arg11[%c0_32, %c256] : memref<2x2048xf32, #tpu.memory_space<vmem>>, vector<1x128xf32>
      tpu.vector_store %arg11[%c0_32, %c256], %36 {strides = array<i32>} : memref<2x2048xf32, #tpu.memory_space<vmem>>, vector<1x128xf32>,
      %38 = vector.extract_strided_slice %31 {offsets = [3, 0], sizes = [1, 128], strides = [1, 1]} : vector<16x128xf32> to vector<1x128xf32>
      %c0_33 = arith.constant 0 : index
      %c384 = arith.constant 384 : index
      %39 = vector.load %arg11[%c0_33, %c384] : memref<2x2048xf32, #tpu.memory_space<vmem>>, vector<1x128xf32>
      tpu.vector_store %arg11[%c0_33, %c384], %38 {strides = array<i32>} : memref<2x2048xf32, #tpu.memory_space<vmem>>, vector<1x128xf32>,
      %40 = vector.extract_strided_slice %31 {offsets = [4, 0], sizes = [1, 128], strides = [1, 1]} : vector<16x128xf32> to vector<1x128xf32>
      %c0_34 = arith.constant 0 : index
      %c512 = arith.constant 512 : index
      %41 = vector.load %arg11[%c0_34, %c512] : memref<2x2048xf32, #tpu.memory_space<vmem>>, vector<1x128xf32>
      tpu.vector_store %arg11[%c0_34, %c512], %40 {strides = array<i32>} : memref<2x2048xf32, #tpu.memory_space<vmem>>, vector<1x128xf32>,
      %42 = vector.extract_strided_slice %31 {offsets = [5, 0], sizes = [1, 128], strides = [1, 1]} : vector<16x128xf32> to vector<1x128xf32>
      %c0_35 = arith.constant 0 : index
      %c640 = arith.constant 640 : index
      %43 = vector.load %arg11[%c0_35, %c640] : memref<2x2048xf32, #tpu.memory_space<vmem>>, vector<1x128xf32>
      tpu.vector_store %arg11[%c0_35, %c640], %42 {strides = array<i32>} : memref<2x2048xf32, #tpu.memory_space<vmem>>, vector<1x128xf32>,
      %44 = vector.extract_strided_slice %31 {offsets = [6, 0], sizes = [1, 128], strides = [1, 1]} : vector<16x128xf32> to vector<1x128xf32>
      %c0_36 = arith.constant 0 : index
      %c768 = arith.constant 768 : index
      %45 = vector.load %arg11[%c0_36, %c768] : memref<2x2048xf32, #tpu.memory_space<vmem>>, vector<1x128xf32>
      tpu.vector_store %arg11[%c0_36, %c768], %44 {strides = array<i32>} : memref<2x2048xf32, #tpu.memory_space<vmem>>, vector<1x128xf32>,
      %46 = vector.extract_strided_slice %31 {offsets = [7, 0], sizes = [1, 128], strides = [1, 1]} : vector<16x128xf32> to vector<1x128xf32>
      %c0_37 = arith.constant 0 : index
      %c896 = arith.constant 896 : index
      %47 = vector.load %arg11[%c0_37, %c896] : memref<2x2048xf32, #tpu.memory_space<vmem>>, vector<1x128xf32>
      tpu.vector_store %arg11[%c0_37, %c896], %46 {strides = array<i32>} : memref<2x2048xf32, #tpu.memory_space<vmem>>, vector<1x128xf32>,
      %48 = vector.extract_strided_slice %31 {offsets = [8, 0], sizes = [1, 128], strides = [1, 1]} : vector<16x128xf32> to vector<1x128xf32>
      %c0_38 = arith.constant 0 : index
      %c1024 = arith.constant 1024 : index
      %49 = vector.load %arg11[%c0_38, %c1024] : memref<2x2048xf32, #tpu.memory_space<vmem>>, vector<1x128xf32>
      tpu.vector_store %arg11[%c0_38, %c1024], %48 {strides = array<i32>} : memref<2x2048xf32, #tpu.memory_space<vmem>>, vector<1x128xf32>,
      %50 = vector.extract_strided_slice %31 {offsets = [9, 0], sizes = [1, 128], strides = [1, 1]} : vector<16x128xf32> to vector<1x128xf32>
      %c0_39 = arith.constant 0 : index
      %c1152 = arith.constant 1152 : index
      %51 = vector.load %arg11[%c0_39, %c1152] : memref<2x2048xf32, #tpu.memory_space<vmem>>, vector<1x128xf32>
      tpu.vector_store %arg11[%c0_39, %c1152], %50 {strides = array<i32>} : memref<2x2048xf32, #tpu.memory_space<vmem>>, vector<1x128xf32>,
      %52 = vector.extract_strided_slice %31 {offsets = [10, 0], sizes = [1, 128], strides = [1, 1]} : vector<16x128xf32> to vector<1x128xf32>
      %c0_40 = arith.constant 0 : index
      %c1280 = arith.constant 1280 : index
      %53 = vector.load %arg11[%c0_40, %c1280] : memref<2x2048xf32, #tpu.memory_space<vmem>>, vector<1x128xf32>
      tpu.vector_store %arg11[%c0_40, %c1280], %52 {strides = array<i32>} : memref<2x2048xf32, #tpu.memory_space<vmem>>, vector<1x128xf32>,
      %54 = vector.extract_strided_slice %31 {offsets = [11, 0], sizes = [1, 128], strides = [1, 1]} : vector<16x128xf32> to vector<1x128xf32>
      %c0_41 = arith.constant 0 : index
      %c1408 = arith.constant 1408 : index
      %55 = vector.load %arg11[%c0_41, %c1408] : memref<2x2048xf32, #tpu.memory_space<vmem>>, vector<1x128xf32>
      tpu.vector_store %arg11[%c0_41, %c1408], %54 {strides = array<i32>} : memref<2x2048xf32, #tpu.memory_space<vmem>>, vector<1x128xf32>,
      %56 = vector.extract_strided_slice %31 {offsets = [12, 0], sizes = [1, 128], strides = [1, 1]} : vector<16x128xf32> to vector<1x128xf32>
      %c0_42 = arith.constant 0 : index
      %c1536 = arith.constant 1536 : index
      %57 = vector.load %arg11[%c0_42, %c1536] : memref<2x2048xf32, #tpu.memory_space<vmem>>, vector<1x128xf32>
      tpu.vector_store %arg11[%c0_42, %c1536], %56 {strides = array<i32>} : memref<2x2048xf32, #tpu.memory_space<vmem>>, vector<1x128xf32>,
      %58 = vector.extract_strided_slice %31 {offsets = [13, 0], sizes = [1, 128], strides = [1, 1]} : vector<16x128xf32> to vector<1x128xf32>
      %c0_43 = arith.constant 0 : index
      %c1664 = arith.constant 1664 : index
      %59 = vector.load %arg11[%c0_43, %c1664] : memref<2x2048xf32, #tpu.memory_space<vmem>>, vector<1x128xf32>
      tpu.vector_store %arg11[%c0_43, %c1664], %58 {strides = array<i32>} : memref<2x2048xf32, #tpu.memory_space<vmem>>, vector<1x128xf32>,
      %60 = vector.extract_strided_slice %31 {offsets = [14, 0], sizes = [1, 128], strides = [1, 1]} : vector<16x128xf32> to vector<1x128xf32>
      %c0_44 = arith.constant 0 : index
      %c1792 = arith.constant 1792 : index
      %61 = vector.load %arg11[%c0_44, %c1792] : memref<2x2048xf32, #tpu.memory_space<vmem>>, vector<1x128xf32>
      tpu.vector_store %arg11[%c0_44, %c1792], %60 {strides = array<i32>} : memref<2x2048xf32, #tpu.memory_space<vmem>>, vector<1x128xf32>,
      %62 = vector.extract_strided_slice %31 {offsets = [15, 0], sizes = [1, 128], strides = [1, 1]} : vector<16x128xf32> to vector<1x128xf32>
      %c0_45 = arith.constant 0 : index
      %c1920 = arith.constant 1920 : index
      %63 = vector.load %arg11[%c0_45, %c1920] : memref<2x2048xf32, #tpu.memory_space<vmem>>, vector<1x128xf32>
      tpu.vector_store %arg11[%c0_45, %c1920], %62 {strides = array<i32>} : memref<2x2048xf32, #tpu.memory_space<vmem>>, vector<1x128xf32>,
      %c4 = arith.constant 4 : index
      %c0_46 = arith.constant 0 : index
      %64 = vector.load %arg2[%c4, %c0_46] : memref<8x196xf32, #tpu.memory_space<vmem>>, vector<4x196xf32>
      %cst_47 = arith.constant dense<0.000000e+00> : vector<16x4xf32>
      %65 = tpu.matmul %22, %64, %cst_47 {dimension_numbers = #tpu.dot_dimension_numbers<[1], [1], [0], [0], [0, 0, 1, 0], [], []>} : vector<16x196xf32>, vector<4x196xf32>, vector<16x4xf32> -> vector<16x4xf32>
      %cst_48 = arith.constant dense<0.000000e+00> : vector<16x128xf32>
      %66 = tpu.matmul %65, %23, %cst_48 {dimension_numbers = #tpu.dot_dimension_numbers<[1], [1], [0], [0], [0, 0, 1, 0], [], []>} : vector<16x4xf32>, vector<128x4xf32>, vector<16x128xf32> -> vector<16x128xf32>
      %67 = vector.broadcast %24 : vector<1x128xf32> to vector<16x128xf32>
      %68 = arith.addf %66, %67 : vector<16x128xf32>
      %cst_49 = arith.constant 0.000000e+00 : f32
      %69 = vector.broadcast %cst_49 : f32 to vector<16x128xf32>
      %70 = arith.maximumf %68, %69 : vector<16x128xf32>
      %71 = vector.extract_strided_slice %70 {offsets = [0, 0], sizes = [1, 128], strides = [1, 1]} : vector<16x128xf32> to vector<1x128xf32>
      %c1 = arith.constant 1 : index
      %c0_50 = arith.constant 0 : index
      %72 = vector.load %arg11[%c1, %c0_50] : memref<2x2048xf32, #tpu.memory_space<vmem>>, vector<1x128xf32>
      tpu.vector_store %arg11[%c1, %c0_50], %71 {strides = array<i32>} : memref<2x2048xf32, #tpu.memory_space<vmem>>, vector<1x128xf32>,
      %73 = vector.extract_strided_slice %70 {offsets = [1, 0], sizes = [1, 128], strides = [1, 1]} : vector<16x128xf32> to vector<1x128xf32>
      %c1_51 = arith.constant 1 : index
      %c128_52 = arith.constant 128 : index
      %74 = vector.load %arg11[%c1_51, %c128_52] : memref<2x2048xf32, #tpu.memory_space<vmem>>, vector<1x128xf32>
      tpu.vector_store %arg11[%c1_51, %c128_52], %73 {strides = array<i32>} : memref<2x2048xf32, #tpu.memory_space<vmem>>, vector<1x128xf32>,
      %75 = vector.extract_strided_slice %70 {offsets = [2, 0], sizes = [1, 128], strides = [1, 1]} : vector<16x128xf32> to vector<1x128xf32>
      %c1_53 = arith.constant 1 : index
      %c256_54 = arith.constant 256 : index
      %76 = vector.load %arg11[%c1_53, %c256_54] : memref<2x2048xf32, #tpu.memory_space<vmem>>, vector<1x128xf32>
      tpu.vector_store %arg11[%c1_53, %c256_54], %75 {strides = array<i32>} : memref<2x2048xf32, #tpu.memory_space<vmem>>, vector<1x128xf32>,
      %77 = vector.extract_strided_slice %70 {offsets = [3, 0], sizes = [1, 128], strides = [1, 1]} : vector<16x128xf32> to vector<1x128xf32>
      %c1_55 = arith.constant 1 : index
      %c384_56 = arith.constant 384 : index
      %78 = vector.load %arg11[%c1_55, %c384_56] : memref<2x2048xf32, #tpu.memory_space<vmem>>, vector<1x128xf32>
      tpu.vector_store %arg11[%c1_55, %c384_56], %77 {strides = array<i32>} : memref<2x2048xf32, #tpu.memory_space<vmem>>, vector<1x128xf32>,
      %79 = vector.extract_strided_slice %70 {offsets = [4, 0], sizes = [1, 128], strides = [1, 1]} : vector<16x128xf32> to vector<1x128xf32>
      %c1_57 = arith.constant 1 : index
      %c512_58 = arith.constant 512 : index
      %80 = vector.load %arg11[%c1_57, %c512_58] : memref<2x2048xf32, #tpu.memory_space<vmem>>, vector<1x128xf32>
      tpu.vector_store %arg11[%c1_57, %c512_58], %79 {strides = array<i32>} : memref<2x2048xf32, #tpu.memory_space<vmem>>, vector<1x128xf32>,
      %81 = vector.extract_strided_slice %70 {offsets = [5, 0], sizes = [1, 128], strides = [1, 1]} : vector<16x128xf32> to vector<1x128xf32>
      %c1_59 = arith.constant 1 : index
      %c640_60 = arith.constant 640 : index
      %82 = vector.load %arg11[%c1_59, %c640_60] : memref<2x2048xf32, #tpu.memory_space<vmem>>, vector<1x128xf32>
      tpu.vector_store %arg11[%c1_59, %c640_60], %81 {strides = array<i32>} : memref<2x2048xf32, #tpu.memory_space<vmem>>, vector<1x128xf32>,
      %83 = vector.extract_strided_slice %70 {offsets = [6, 0], sizes = [1, 128], strides = [1, 1]} : vector<16x128xf32> to vector<1x128xf32>
      %c1_61 = arith.constant 1 : index
      %c768_62 = arith.constant 768 : index
      %84 = vector.load %arg11[%c1_61, %c768_62] : memref<2x2048xf32, #tpu.memory_space<vmem>>, vector<1x128xf32>
      tpu.vector_store %arg11[%c1_61, %c768_62], %83 {strides = array<i32>} : memref<2x2048xf32, #tpu.memory_space<vmem>>, vector<1x128xf32>,
      %85 = vector.extract_strided_slice %70 {offsets = [7, 0], sizes = [1, 128], strides = [1, 1]} : vector<16x128xf32> to vector<1x128xf32>
      %c1_63 = arith.constant 1 : index
      %c896_64 = arith.constant 896 : index
      %86 = vector.load %arg11[%c1_63, %c896_64] : memref<2x2048xf32, #tpu.memory_space<vmem>>, vector<1x128xf32>
      tpu.vector_store %arg11[%c1_63, %c896_64], %85 {strides = array<i32>} : memref<2x2048xf32, #tpu.memory_space<vmem>>, vector<1x128xf32>,
      %87 = vector.extract_strided_slice %70 {offsets = [8, 0], sizes = [1, 128], strides = [1, 1]} : vector<16x128xf32> to vector<1x128xf32>
      %c1_65 = arith.constant 1 : index
      %c1024_66 = arith.constant 1024 : index
      %88 = vector.load %arg11[%c1_65, %c1024_66] : memref<2x2048xf32, #tpu.memory_space<vmem>>, vector<1x128xf32>
      tpu.vector_store %arg11[%c1_65, %c1024_66], %87 {strides = array<i32>} : memref<2x2048xf32, #tpu.memory_space<vmem>>, vector<1x128xf32>,
      %89 = vector.extract_strided_slice %70 {offsets = [9, 0], sizes = [1, 128], strides = [1, 1]} : vector<16x128xf32> to vector<1x128xf32>
      %c1_67 = arith.constant 1 : index
      %c1152_68 = arith.constant 1152 : index
      %90 = vector.load %arg11[%c1_67, %c1152_68] : memref<2x2048xf32, #tpu.memory_space<vmem>>, vector<1x128xf32>
      tpu.vector_store %arg11[%c1_67, %c1152_68], %89 {strides = array<i32>} : memref<2x2048xf32, #tpu.memory_space<vmem>>, vector<1x128xf32>,
      %91 = vector.extract_strided_slice %70 {offsets = [10, 0], sizes = [1, 128], strides = [1, 1]} : vector<16x128xf32> to vector<1x128xf32>
      %c1_69 = arith.constant 1 : index
      %c1280_70 = arith.constant 1280 : index
      %92 = vector.load %arg11[%c1_69, %c1280_70] : memref<2x2048xf32, #tpu.memory_space<vmem>>, vector<1x128xf32>
      tpu.vector_store %arg11[%c1_69, %c1280_70], %91 {strides = array<i32>} : memref<2x2048xf32, #tpu.memory_space<vmem>>, vector<1x128xf32>,
      %93 = vector.extract_strided_slice %70 {offsets = [11, 0], sizes = [1, 128], strides = [1, 1]} : vector<16x128xf32> to vector<1x128xf32>
      %c1_71 = arith.constant 1 : index
      %c1408_72 = arith.constant 1408 : index
      %94 = vector.load %arg11[%c1_71, %c1408_72] : memref<2x2048xf32, #tpu.memory_space<vmem>>, vector<1x128xf32>
      tpu.vector_store %arg11[%c1_71, %c1408_72], %93 {strides = array<i32>} : memref<2x2048xf32, #tpu.memory_space<vmem>>, vector<1x128xf32>,
      %95 = vector.extract_strided_slice %70 {offsets = [12, 0], sizes = [1, 128], strides = [1, 1]} : vector<16x128xf32> to vector<1x128xf32>
      %c1_73 = arith.constant 1 : index
      %c1536_74 = arith.constant 1536 : index
      %96 = vector.load %arg11[%c1_73, %c1536_74] : memref<2x2048xf32, #tpu.memory_space<vmem>>, vector<1x128xf32>
      tpu.vector_store %arg11[%c1_73, %c1536_74], %95 {strides = array<i32>} : memref<2x2048xf32, #tpu.memory_space<vmem>>, vector<1x128xf32>,
      %97 = vector.extract_strided_slice %70 {offsets = [13, 0], sizes = [1, 128], strides = [1, 1]} : vector<16x128xf32> to vector<1x128xf32>
      %c1_75 = arith.constant 1 : index
      %c1664_76 = arith.constant 1664 : index
      %98 = vector.load %arg11[%c1_75, %c1664_76] : memref<2x2048xf32, #tpu.memory_space<vmem>>, vector<1x128xf32>
      tpu.vector_store %arg11[%c1_75, %c1664_76], %97 {strides = array<i32>} : memref<2x2048xf32, #tpu.memory_space<vmem>>, vector<1x128xf32>,
      %99 = vector.extract_strided_slice %70 {offsets = [14, 0], sizes = [1, 128], strides = [1, 1]} : vector<16x128xf32> to vector<1x128xf32>
      %c1_77 = arith.constant 1 : index
      %c1792_78 = arith.constant 1792 : index
      %100 = vector.load %arg11[%c1_77, %c1792_78] : memref<2x2048xf32, #tpu.memory_space<vmem>>, vector<1x128xf32>
      tpu.vector_store %arg11[%c1_77, %c1792_78], %99 {strides = array<i32>} : memref<2x2048xf32, #tpu.memory_space<vmem>>, vector<1x128xf32>,
      %101 = vector.extract_strided_slice %70 {offsets = [15, 0], sizes = [1, 128], strides = [1, 1]} : vector<16x128xf32> to vector<1x128xf32>
      %c1_79 = arith.constant 1 : index
      %c1920_80 = arith.constant 1920 : index
      %102 = vector.load %arg11[%c1_79, %c1920_80] : memref<2x2048xf32, #tpu.memory_space<vmem>>, vector<1x128xf32>
      tpu.vector_store %arg11[%c1_79, %c1920_80], %101 {strides = array<i32>} : memref<2x2048xf32, #tpu.memory_space<vmem>>, vector<1x128xf32>,
    } else {
    }
    %c0 = arith.constant 0 : index
    %c0_1 = arith.constant 0 : index
    %3 = vector.load %arg11[%c0, %c0_1] : memref<2x2048xf32, #tpu.memory_space<vmem>>, vector<2x2048xf32>
    %4 = arith.truncf %3 : vector<2x2048xf32> to vector<2x2048xbf16>
    %c0_2 = arith.constant 0 : index
    %c0_3 = arith.constant 0 : index
    %5 = vector.load %arg6[%c0_2, %c0_3] : memref<2048x256xbf16, #tpu.memory_space<vmem>>, vector<2048x256xbf16>
    %cst = arith.constant dense<0.000000e+00> : vector<2x256xf32>
    %6 = tpu.matmul %4, %5, %cst {dimension_numbers = #tpu.dot_dimension_numbers<[1], [0], [0], [1], [0, 0, 1, 1], [], []>} : vector<2x2048xbf16>, vector<2048x256xbf16>, vector<2x256xf32> -> vector<2x256xf32>
    %c0_4 = arith.constant 0 : index
    %c0_5 = arith.constant 0 : index
    %7 = vector.load %arg7[%c0_4, %c0_5] : memref<1x256xf32, #tpu.memory_space<vmem>>, vector<1x256xf32>
    %8 = vector.broadcast %7 : vector<1x256xf32> to vector<2x256xf32>
    %9 = arith.addf %6, %8 : vector<2x256xf32>
    %cst_6 = arith.constant 0.000000e+00 : f32
    %10 = vector.broadcast %cst_6 : f32 to vector<2x256xf32>
    %11 = arith.maximumf %9, %10 : vector<2x256xf32>
    %c0_7 = arith.constant 0 : index
    %c0_8 = arith.constant 0 : index
    %12 = vector.load %arg12[%c0_7, %c0_8] : memref<2x16xf32, #tpu.memory_space<vmem>>, vector<2x16xf32>
    %c0_9 = arith.constant 0 : index
    %c0_10 = arith.constant 0 : index
    %13 = vector.load %arg8[%c0_9, %c0_10] : memref<256x16xf32, #tpu.memory_space<vmem>>, vector<256x16xf32>
    %cst_11 = arith.constant dense<0.000000e+00> : vector<2x16xf32>
    %14 = tpu.matmul %11, %13, %cst_11 {dimension_numbers = #tpu.dot_dimension_numbers<[1], [0], [0], [1], [0, 0, 1, 1], [], []>} : vector<2x256xf32>, vector<256x16xf32>, vector<2x16xf32> -> vector<2x16xf32>
    %15 = arith.addf %12, %14 : vector<2x16xf32>
    %c0_12 = arith.constant 0 : index
    %c0_13 = arith.constant 0 : index
    %16 = vector.load %arg12[%c0_12, %c0_13] : memref<2x16xf32, #tpu.memory_space<vmem>>, vector<2x16xf32>
    tpu.vector_store %arg12[%c0_12, %c0_13], %15 {strides = array<i32>} : memref<2x16xf32, #tpu.memory_space<vmem>>, vector<2x16xf32>,
    %c3_i32 = arith.constant 3 : i32
    %17 = arith.cmpi eq, %arg1, %c3_i32 : i32
    %18 = arith.extui %17 : i1 to i32
    %c0_i32_14 = arith.constant 0 : i32
    %19 = arith.cmpi ne, %18, %c0_i32_14 : i32
    scf.if %19 {
      %c0_15 = arith.constant 0 : index
      %c0_16 = arith.constant 0 : index
      %20 = vector.load %arg12[%c0_15, %c0_16] : memref<2x16xf32, #tpu.memory_space<vmem>>, vector<2x16xf32>
      %c0_17 = arith.constant 0 : index
      %c0_18 = arith.constant 0 : index
      %21 = vector.load %arg9[%c0_17, %c0_18] : memref<1x16xf32, #tpu.memory_space<vmem>>, vector<1x16xf32>
      %22 = vector.broadcast %21 : vector<1x16xf32> to vector<2x16xf32>
      %23 = arith.addf %20, %22 : vector<2x16xf32>
      %c0_19 = arith.constant 0 : index
      %c0_20 = arith.constant 0 : index
      %24 = vector.load %arg10[%c0_19, %c0_20] : memref<2x16xf32, #tpu.memory_space<vmem>>, vector<2x16xf32>
      tpu.vector_store %arg10[%c0_19, %c0_20], %23 {strides = array<i32>} : memref<2x16xf32, #tpu.memory_space<vmem>>, vector<2x16xf32>,
    } else {
    }
    return
  }
  func.func @transform_0(%arg0: i32, %arg1: i32) -> (i32, i32) {
    %c0_i32 = arith.constant 0 : i32
    %c0_i32_0 = arith.constant 0 : i32
    return %arg0, %c0_i32 : i32, i32
  }
  func.func @transform_1(%arg0: i32, %arg1: i32) -> (i32, i32) {
    %c0_i32 = arith.constant 0 : i32
    %c0_i32_0 = arith.constant 0 : i32
    %c0_i32_1 = arith.constant 0 : i32
    return %c0_i32, %c0_i32_0 : i32, i32
  }
  func.func @transform_2(%arg0: i32, %arg1: i32) -> (i32, i32) {
    %c0_i32 = arith.constant 0 : i32
    %c0_i32_0 = arith.constant 0 : i32
    %c0_i32_1 = arith.constant 0 : i32
    return %c0_i32, %c0_i32_0 : i32, i32
  }
  func.func @transform_3(%arg0: i32, %arg1: i32) -> (i32, i32) {
    %c0_i32 = arith.constant 0 : i32
    %c0_i32_0 = arith.constant 0 : i32
    %c0_i32_1 = arith.constant 0 : i32
    return %c0_i32, %c0_i32_0 : i32, i32
  }
  func.func @transform_4(%arg0: i32, %arg1: i32) -> (i32, i32) {
    %c0_i32 = arith.constant 0 : i32
    %c0_i32_0 = arith.constant 0 : i32
    return %c0_i32, %arg1 : i32, i32
  }
  func.func @transform_5(%arg0: i32, %arg1: i32) -> (i32, i32) {
    %c0_i32 = arith.constant 0 : i32
    %c0_i32_0 = arith.constant 0 : i32
    return %c0_i32, %arg1 : i32, i32
  }
  func.func @transform_6(%arg0: i32, %arg1: i32) -> (i32, i32) {
    %c0_i32 = arith.constant 0 : i32
    %c0_i32_0 = arith.constant 0 : i32
    return %arg1, %c0_i32 : i32, i32
  }
  func.func @transform_7(%arg0: i32, %arg1: i32) -> (i32, i32) {
    %c0_i32 = arith.constant 0 : i32
    %c0_i32_0 = arith.constant 0 : i32
    %c0_i32_1 = arith.constant 0 : i32
    return %c0_i32, %c0_i32_0 : i32, i32
  }
  func.func @transform_8(%arg0: i32, %arg1: i32) -> (i32, i32) {
    %c0_i32 = arith.constant 0 : i32
    %c0_i32_0 = arith.constant 0 : i32
    return %arg0, %c0_i32 : i32, i32
  }
}

</mosaic_0001>

<llo_original>
// kernel: tpu_custom_call.1
$region0: #{tpu_custom_call.1}
  #allocation0 [shape = 'u32[]', space=smem, size = 0x4, offset = 0x4, fixed_abs, tag = 'smem constant byte address 0x4 - core index']
  #allocation1 [shape = 'u32[144,128]{1,0:T(1,128)}', space=vmem, size = 0x12000, scoped, tag = 'internal scratch']
  #allocation2 [shape = 'f32[2,2048]{1,0:T(2,128)}', space=vmem, size = 0x4000, scoped, tag = 'scratch operand']
  #allocation3 [shape = 'f32[2,16]{1,0:T(2,128)}', space=vmem, size = 0x400, scoped, tag = 'scratch operand']
  %s0 = inlined_call_operand.hbm [shape: f32[8,196], index: 0, kind: input, shape index: {}]
  %s1 = inlined_call_operand.hbm [shape: f32[16,196], index: 1, kind: input, shape index: {}]
  %s2 = inlined_call_operand.vmem [shape: f32[128,4], index: 2, kind: input, shape index: {}]
  %s3 = inlined_call_operand.hbm [shape: f32[1,128], index: 3, kind: input, shape index: {}]
  %s4 = inlined_call_operand.hbm [shape: bf16[2048,1024], index: 4, kind: input, shape index: {}]
  %s5 = inlined_call_operand.hbm [shape: f32[1,1024], index: 5, kind: input, shape index: {}]
  %s6 = inlined_call_operand.vmem [shape: f32[1024,16], index: 6, kind: input, shape index: {}]
  %s7 = inlined_call_operand.hbm [shape: f32[1,16], index: 7, kind: input, shape index: {}]
  %s8 = inlined_call_operand.hbm [shape: f32[2,16], index: 8, kind: output, shape index: {}]
  %s9 = sld [smem:[#allocation0]]
  $region97: #{tpu_custom_call.1} parent=0
    _
  %s11 = ssub.s32 1, %s9
  %s12 = scalar_select 0, %s11, %s9
  $region1: #{tpu_custom_call.1} parent=0
    #allocation4 [shape = 'u8[8192]{0}', space=vmem, size = 0x2000, scoped, tag = 'input window, operand 0, single buffered']
    #allocation5 [shape = 's32[2]{0}', space=sflag, size = 0x8, scoped, tag = 'scoped memory for tpu_custom_call.1']
    #allocation6 [shape = 's32[2]{0}', space=sflag, size = 0x8, scoped, tag = 'scoped memory for tpu_custom_call.1']
    #allocation7 [shape = 'u8[16384]{0}', space=vmem, size = 0x4000, scoped, tag = 'input window, operand 1, single buffered']
    #allocation8 [shape = 's32[1]{0}', space=sflag, size = 0x4, scoped, tag = 'scoped memory for tpu_custom_call.1']
    #allocation9 [shape = 'u8[512]{0}', space=vmem, size = 0x400, scoped, tag = 'input window, operand 3, single buffered']
    #allocation10 [shape = 'u8[2097152]{0}', space=vmem, size = 0x200000, scoped, tag = 'input window, operand 4']
    #allocation11 [shape = 's32[2]{0}', space=sflag, size = 0x8, scoped, tag = 'scoped memory for tpu_custom_call.1']
    #allocation12 [shape = 'u8[2048]{0}', space=vmem, size = 0x800, scoped, tag = 'input window, operand 5']
    #allocation13 [shape = 'u8[512]{0}', space=vmem, size = 0x400, scoped, tag = 'input window, operand 7, single buffered']
    #allocation14 [shape = 's32[1]{0}', space=sflag, size = 0x4, scoped, tag = 'scoped memory for tpu_custom_call.1']
    #allocation15 [shape = 'u8[1024]{0}', space=vmem, size = 0x400, scoped, tag = 'output window, operand 0, single buffered']
    %13 = vsyncpa [#allocation5], 0
    %14 = vsyncpa [#allocation8], 0
    %15 = vsyncpa [#allocation11], 0
    %s16 = scalar_lea.sflag [#allocation11], 1
    %17 = vsyncpa %s16, 0
    %18 = vsyncpa [#allocation14], 0
    %19 = vsyncpa [#allocation6], 0
    loop: start=0, step=1, limit=6
    $region2: #{tpu_custom_call.1} parent=1 // loop_pre_header
      _
    $region3: #{tpu_custom_call.1} parent=1 // loop_header
      %s21 = sphi 0, %s25
      %p22 = scmp.ge.s32.totalorder %s21, 6
      %s28 = sphi 0, %s40
      %s29 = sphi 0, %s36
      %s30 = sphi 0, %s28
      %s31 = sphi 0, %s29
      %s32 = sphi 0, %s30
      %s33 = sphi 0, %s31
      %s43 = sphi 0, %s45
      %s46 = sphi 0, %s43
      %s47 = sphi 0, %s46
      %s63 = sphi 0, %s47
      %s67 = sphi 0, %s67
      %s69 = sphi 0, %s67
      %s70 = sphi 0, %s69
      %s84 = sphi 0, %s70
      %s88 = sphi 0, %s88
      %s90 = sphi 0, %s88
      %s91 = sphi 0, %s90
      %s105 = sphi 0, %s91
      %s109 = sphi 0, %s109
      %s111 = sphi 0, %s109
      %s112 = sphi 0, %s111
      %s126 = sphi 0, %s112
      %s132 = sphi 0, %s134
      %s135 = sphi 0, %s132
      %s136 = sphi 0, %s135
      %s152 = sphi 0, %s136
      %s158 = sphi 0, %s160
      %s161 = sphi 0, %s158
      %s162 = sphi 0, %s161
      %s178 = sphi 0, %s162
      %s184 = sphi 0, %s186
      %s187 = sphi 0, %s184
      %s188 = sphi 0, %s187
      %s204 = sphi 0, %s188
      %s208 = sphi 0, %s208
      %s210 = sphi 0, %s208
      %s211 = sphi 0, %s210
      %s225 = sphi 0, %s211
      %s231 = sphi 0, %s233
      %s234 = sphi 0, %s231
      %s235 = sphi 0, %s234
      %s251 = sphi 0, %s235
    $region4: #{tpu_custom_call.1} parent=1 // loop_header_branch
      %24 = sbr.rel (%p22) target = $region8
    $region5: #{tpu_custom_call.1} parent=1 // loop_body
      %s26 = ssub.s32 %s21, 1
      %s27 = ssub.s32 %s21, 2
      %s34 = sadd.s32 1, %s29
      %p35 = scmp.ge.s32.totalorder %s34, 4
      %s36 = scalar_select %p35, 0, %s34
      %s37 = sadd.s32 1, %s28
      %s38 = scalar_select %p35, %s37, %s28
      %p39 = scmp.ge.s32.totalorder %s38, 1
      %s40 = scalar_select %p39, 0, %s38
      %s41 = ssub.s32 %s28, %s40
      %p42 = scmp.eq.s32.totalorder %s41, 0
      %s44 = sadd.s32 %s43, 1
      %s45 = scalar_select %p42, %s43, %s44
      %p48 = pneg %p42
      %p49 = scmp.eq.s32.totalorder %s21, 3
      %p50 = por %p48, %p49
      %p51 = scmp.ne.s32.totalorder %s43, %s46
      %p52 = scmp.eq.s32.totalorder %s21, 0
      %p53 = por %p51, %p52
      %p54 = scmp.ne.s32.totalorder %s43, %s46
      %p55 = scmp.eq.s32.totalorder %s26, 3
      %p56 = por %p54, %p55
      %p57 = scmp.ne.s32.totalorder %s46, %s47
      %p58 = scmp.eq.s32.totalorder %s26, 0
      %p59 = por %p57, %p58
      %p60 = scmp.ne.s32.totalorder %s46, %s47
      %p61 = scmp.eq.s32.totalorder %s27, 3
      %p62 = por %p60, %p61
      %p64 = scmp.ne.s32.totalorder %s47, %s63
      %p65 = scmp.eq.s32.totalorder %s27, 0
      %p66 = por %p64, %p65
      %s68 = sadd.s32 %s67, 1
      %p71 = scmp.eq.s32.totalorder %s21, 3
      %p72 = scmp.ne.s32.totalorder %s67, %s69
      %p73 = scmp.eq.s32.totalorder %s21, 0
      %p74 = por %p72, %p73
      %p75 = scmp.ne.s32.totalorder %s67, %s69
      %p76 = scmp.eq.s32.totalorder %s26, 3
      %p77 = por %p75, %p76
      %p78 = scmp.ne.s32.totalorder %s69, %s70
      %p79 = scmp.eq.s32.totalorder %s26, 0
      %p80 = por %p78, %p79
      %p81 = scmp.ne.s32.totalorder %s69, %s70
      %p82 = scmp.eq.s32.totalorder %s27, 3
      %p83 = por %p81, %p82
      %p85 = scmp.ne.s32.totalorder %s70, %s84
      %p86 = scmp.eq.s32.totalorder %s27, 0
      %p87 = por %p85, %p86
      %s89 = sadd.s32 %s88, 1
      %p92 = scmp.eq.s32.totalorder %s21, 3
      %p93 = scmp.ne.s32.totalorder %s88, %s90
      %p94 = scmp.eq.s32.totalorder %s21, 0
      %p95 = por %p93, %p94
      %p96 = scmp.ne.s32.totalorder %s88, %s90
      %p97 = scmp.eq.s32.totalorder %s26, 3
      %p98 = por %p96, %p97
      %p99 = scmp.ne.s32.totalorder %s90, %s91
      %p100 = scmp.eq.s32.totalorder %s26, 0
      %p101 = por %p99, %p100
      %p102 = scmp.ne.s32.totalorder %s90, %s91
      %p103 = scmp.eq.s32.totalorder %s27, 3
      %p104 = por %p102, %p103
      %p106 = scmp.ne.s32.totalorder %s91, %s105
      %p107 = scmp.eq.s32.totalorder %s27, 0
      %p108 = por %p106, %p107
      %s110 = sadd.s32 %s109, 1
      %p113 = scmp.eq.s32.totalorder %s21, 3
      %p114 = scmp.ne.s32.totalorder %s109, %s111
      %p115 = scmp.eq.s32.totalorder %s21, 0
      %p116 = por %p114, %p115
      %p117 = scmp.ne.s32.totalorder %s109, %s111
      %p118 = scmp.eq.s32.totalorder %s26, 3
      %p119 = por %p117, %p118
      %p120 = scmp.ne.s32.totalorder %s111, %s112
      %p121 = scmp.eq.s32.totalorder %s26, 0
      %p122 = por %p120, %p121
      %p123 = scmp.ne.s32.totalorder %s111, %s112
      %p124 = scmp.eq.s32.totalorder %s27, 3
      %p125 = por %p123, %p124
      %p127 = scmp.ne.s32.totalorder %s112, %s126
      %p128 = scmp.eq.s32.totalorder %s27, 0
      %p129 = por %p127, %p128
      %s130 = ssub.s32 %s29, %s36
      %p131 = scmp.eq.s32.totalorder %s130, 0
      %s133 = sadd.s32 %s132, 1
      %s134 = scalar_select %p131, %s132, %s133
      %p137 = pneg %p131
      %p138 = scmp.eq.s32.totalorder %s21, 3
      %p139 = por %p137, %p138
      %p140 = scmp.ne.s32.totalorder %s132, %s135
      %p141 = scmp.eq.s32.totalorder %s21, 0
      %p142 = por %p140, %p141
      %p143 = scmp.ne.s32.totalorder %s132, %s135
      %p144 = scmp.eq.s32.totalorder %s26, 3
      %p145 = por %p143, %p144
      %p146 = scmp.ne.s32.totalorder %s135, %s136
      %p147 = scmp.eq.s32.totalorder %s26, 0
      %p148 = por %p146, %p147
      %p149 = scmp.ne.s32.totalorder %s135, %s136
      %p150 = scmp.eq.s32.totalorder %s27, 3
      %p151 = por %p149, %p150
      %p153 = scmp.ne.s32.totalorder %s136, %s152
      %p154 = scmp.eq.s32.totalorder %s27, 0
      %p155 = por %p153, %p154
      %s156 = ssub.s32 %s29, %s36
      %p157 = scmp.eq.s32.totalorder %s156, 0
      %s159 = sadd.s32 %s158, 1
      %s160 = scalar_select %p157, %s158, %s159
      %p163 = pneg %p157
      %p164 = scmp.eq.s32.totalorder %s21, 3
      %p165 = por %p163, %p164
      %p166 = scmp.ne.s32.totalorder %s158, %s161
      %p167 = scmp.eq.s32.totalorder %s21, 0
      %p168 = por %p166, %p167
      %p169 = scmp.ne.s32.totalorder %s158, %s161
      %p170 = scmp.eq.s32.totalorder %s26, 3
      %p171 = por %p169, %p170
      %p172 = scmp.ne.s32.totalorder %s161, %s162
      %p173 = scmp.eq.s32.totalorder %s26, 0
      %p174 = por %p172, %p173
      %p175 = scmp.ne.s32.totalorder %s161, %s162
      %p176 = scmp.eq.s32.totalorder %s27, 3
      %p177 = por %p175, %p176
      %p179 = scmp.ne.s32.totalorder %s162, %s178
      %p180 = scmp.eq.s32.totalorder %s27, 0
      %p181 = por %p179, %p180
      %s182 = ssub.s32 %s29, %s36
      %p183 = scmp.eq.s32.totalorder %s182, 0
      %s185 = sadd.s32 %s184, 1
      %s186 = scalar_select %p183, %s184, %s185
      %p189 = pneg %p183
      %p190 = scmp.eq.s32.totalorder %s21, 3
      %p191 = por %p189, %p190
      %p192 = scmp.ne.s32.totalorder %s184, %s187
      %p193 = scmp.eq.s32.totalorder %s21, 0
      %p194 = por %p192, %p193
      %p195 = scmp.ne.s32.totalorder %s184, %s187
      %p196 = scmp.eq.s32.totalorder %s26, 3
      %p197 = por %p195, %p196
      %p198 = scmp.ne.s32.totalorder %s187, %s188
      %p199 = scmp.eq.s32.totalorder %s26, 0
      %p200 = por %p198, %p199
      %p201 = scmp.ne.s32.totalorder %s187, %s188
      %p202 = scmp.eq.s32.totalorder %s27, 3
      %p203 = por %p201, %p202
      %p205 = scmp.ne.s32.totalorder %s188, %s204
      %p206 = scmp.eq.s32.totalorder %s27, 0
      %p207 = por %p205, %p206
      %s209 = sadd.s32 %s208, 1
      %p212 = scmp.eq.s32.totalorder %s21, 3
      %p213 = scmp.ne.s32.totalorder %s208, %s210
      %p214 = scmp.eq.s32.totalorder %s21, 0
      %p215 = por %p213, %p214
      %p216 = scmp.ne.s32.totalorder %s208, %s210
      %p217 = scmp.eq.s32.totalorder %s26, 3
      %p218 = por %p216, %p217
      %p219 = scmp.ne.s32.totalorder %s210, %s211
      %p220 = scmp.eq.s32.totalorder %s26, 0
      %p221 = por %p219, %p220
      %p222 = scmp.ne.s32.totalorder %s210, %s211
      %p223 = scmp.eq.s32.totalorder %s27, 3
      %p224 = por %p222, %p223
      %p226 = scmp.ne.s32.totalorder %s211, %s225
      %p227 = scmp.eq.s32.totalorder %s27, 0
      %p228 = por %p226, %p227
      %s229 = ssub.s32 %s28, %s40
      %p230 = scmp.eq.s32.totalorder %s229, 0
      %s232 = sadd.s32 %s231, 1
      %s233 = scalar_select %p230, %s231, %s232
      %p236 = pneg %p230
      %p237 = scmp.eq.s32.totalorder %s21, 3
      %p238 = por %p236, %p237
      %p239 = scmp.ne.s32.totalorder %s231, %s234
      %p240 = scmp.eq.s32.totalorder %s21, 0
      %p241 = por %p239, %p240
      %p242 = scmp.ne.s32.totalorder %s231, %s234
      %p243 = scmp.eq.s32.totalorder %s26, 3
      %p244 = por %p242, %p243
      %p245 = scmp.ne.s32.totalorder %s234, %s235
      %p246 = scmp.eq.s32.totalorder %s26, 0
      %p247 = por %p245, %p246
      %p248 = scmp.ne.s32.totalorder %s234, %s235
      %p249 = scmp.eq.s32.totalorder %s27, 3
      %p250 = por %p248, %p249
      %p252 = scmp.ne.s32.totalorder %s235, %s251
      %p253 = scmp.eq.s32.totalorder %s27, 0
      %p254 = por %p252, %p253
      %p255 = scmp.le.s32.totalorder 1, %s21
      %p256 = scmp.lt.s32.totalorder %s21, 5
      %p257 = pnand %p255, %p256
      %p258 = pneg %p257
      // Predicated region
      $region9: #{tpu_custom_call.1} parent=5 // pred_check
        _
      $region10: #{tpu_custom_call.1} parent=5 // pred_check_branch
        %260 = sbr.rel (%p257) target = $region12
      $region11: #{tpu_custom_call.1} parent=5 // pred_region
        %s261 = ssub.s32 %s21, 1
        // Predicated region
        $region13: #{tpu_custom_call.1} parent=11 // pred_check
          %p262 = pneg %p59
        $region14: #{tpu_custom_call.1} parent=11 // pred_check_branch
          %264 = sbr.rel (%p262) target = $region16
        $region15: #{tpu_custom_call.1} parent=11 // pred_region
          %s266 = ssub.s32 256, 256
          %267 = vsyncadd [#allocation5], %s266
          %s268 = smul.addr %s30, 2
          %s269 = smul.addr %s268, 128
          %s270 = scalar_lea.hbm %s0, %s269
          %s272 = sshll.u32 [#allocation4], 4
          %s273 = int_to_ptr.vmem [resolvable:$true] %s272
          %275 = dma.hbm_to_vmem [thread:$0]  %s270, 256, %s273, [#allocation5]
        $region16: #{tpu_custom_call.1} parent=11 // pred_fallthru
          _
        // Predicated region
        $region17: #{tpu_custom_call.1} parent=11 // pred_check
          %p276 = pneg %p80
        $region18: #{tpu_custom_call.1} parent=11 // pred_check_branch
          %278 = sbr.rel (%p276) target = $region20
        $region19: #{tpu_custom_call.1} parent=11 // pred_region
          %s280 = ssub.s32 512, 512
          %281 = vsyncadd [#allocation8], %s280
          %s282 = sshll.u32 [#allocation7], 4
          %s283 = int_to_ptr.vmem [resolvable:$true] %s282
          %288 = dma.hbm_to_vmem [thread:$0]  %s1, 512, %s283, [#allocation8], 256, 256, 16
        $region20: #{tpu_custom_call.1} parent=11 // pred_fallthru
          _
        // Predicated region
        $region21: #{tpu_custom_call.1} parent=11 // pred_check
          %p289 = pneg %p101
        $region22: #{tpu_custom_call.1} parent=11 // pred_check_branch
          %291 = sbr.rel (%p289) target = $region24
        $region23: #{tpu_custom_call.1} parent=11 // pred_region
          _
        $region24: #{tpu_custom_call.1} parent=11 // pred_fallthru
          _
        // Predicated region
        $region25: #{tpu_custom_call.1} parent=11 // pred_check
          %p292 = pneg %p122
        $region26: #{tpu_custom_call.1} parent=11 // pred_check_branch
          %294 = sbr.rel (%p292) target = $region28
        $region27: #{tpu_custom_call.1} parent=11 // pred_region
          %s296 = ssub.s32 16, 16
          %297 = vsyncadd [#allocation8], %s296
          %s299 = sshll.u32 [#allocation9], 4
          %s300 = int_to_ptr.vmem [resolvable:$true] %s299
          %302 = dma.hbm_to_vmem [thread:$0]  %s3, 16, %s300, [#allocation8]
        $region28: #{tpu_custom_call.1} parent=11 // pred_fallthru
          _
        // Predicated region
        $region29: #{tpu_custom_call.1} parent=11 // pred_check
          %p303 = pneg %p221
        $region30: #{tpu_custom_call.1} parent=11 // pred_check_branch
          %305 = sbr.rel (%p303) target = $region32
        $region31: #{tpu_custom_call.1} parent=11 // pred_region
          %s307 = ssub.s32 16, 16
          %308 = vsyncadd [#allocation14], %s307
          %s310 = sshll.u32 [#allocation13], 4
          %s311 = int_to_ptr.vmem [resolvable:$true] %s310
          %313 = dma.hbm_to_vmem [thread:$0]  %s7, 16, %s311, [#allocation14]
        $region32: #{tpu_custom_call.1} parent=11 // pred_fallthru
          _
      $region12: #{tpu_custom_call.1} parent=5 // pred_fallthru
        _
      %p314 = scmp.lt.s32.totalorder %s21, 4
      // Predicated region
      $region33: #{tpu_custom_call.1} parent=5 // pred_check
        %p315 = pneg %p314
      $region34: #{tpu_custom_call.1} parent=5 // pred_check_branch
        %317 = sbr.rel (%p315) target = $region36
      $region35: #{tpu_custom_call.1} parent=5 // pred_region
        // Predicated region
        $region37: #{tpu_custom_call.1} parent=35 // pred_check
          %p318 = pneg %p142
        $region38: #{tpu_custom_call.1} parent=35 // pred_check_branch
          %320 = sbr.rel (%p318) target = $region40
        $region39: #{tpu_custom_call.1} parent=35 // pred_region
          %s321 = sand.u32 %s21, 1
          %s322 = scalar_lea.sflag [#allocation11], %s321
          %s323 = sand.u32 %s132, 1
          %s324 = smul.addr %s323, 2048
          %s325 = scalar_lea.vmem [#allocation10], %s324
          %s326 = smul.u32 2, %s29
          %s328 = ssub.s32 32768, 32768
          %329 = vsyncadd %s322, %s328
          %s330 = smul.addr %s326, 64
          %s331 = scalar_lea.hbm %s4, %s330
          %s332 = sshll.u32 %s325, 4
          %s333 = int_to_ptr.vmem [resolvable:$true] %s332
          %338 = dma.hbm_to_vmem [thread:$0]  %s331, 32768, %s333, %s322, 512, 128, 8
        $region40: #{tpu_custom_call.1} parent=35 // pred_fallthru
          _
        // Predicated region
        $region41: #{tpu_custom_call.1} parent=35 // pred_check
          %p339 = pneg %p168
        $region42: #{tpu_custom_call.1} parent=35 // pred_check_branch
          %341 = sbr.rel (%p339) target = $region44
        $region43: #{tpu_custom_call.1} parent=35 // pred_region
          %s342 = sand.u32 %s21, 1
          %s343 = scalar_lea.sflag [#allocation11], %s342
          %s344 = sand.u32 %s158, 1
          %s345 = smul.addr %s344, 2
          %s346 = scalar_lea.vmem [#allocation12], %s345
          %s347 = smul.u32 2, %s29
          %s349 = ssub.s32 32, 32
          %350 = vsyncadd %s343, %s349
          %s351 = smul.addr %s347, 16
          %s352 = scalar_lea.hbm %s5, %s351
          %s354 = sshll.u32 %s346, 4
          %s355 = int_to_ptr.vmem [resolvable:$true] %s354
          %357 = dma.hbm_to_vmem [thread:$0]  %s352, 32, %s355, %s343
        $region44: #{tpu_custom_call.1} parent=35 // pred_fallthru
          _
        // Predicated region
        $region45: #{tpu_custom_call.1} parent=35 // pred_check
          %p358 = pneg %p194
        $region46: #{tpu_custom_call.1} parent=35 // pred_check_branch
          %360 = sbr.rel (%p358) target = $region48
        $region47: #{tpu_custom_call.1} parent=35 // pred_region
          %s361 = smul.u32 32, %s29
          %p362 = scmp.lt.s32.totalorder %s361, 127
          %s363 = scalar_select %p362, %s361, 127
          %s364 = smul.addr %s363, 8
          %s365 = scalar_lea.vmem %s6, %s364
          %s366 = smul.u32 32, %s29
        $region48: #{tpu_custom_call.1} parent=35 // pred_fallthru
          _
      $region36: #{tpu_custom_call.1} parent=5 // pred_fallthru
        _
      %p367 = scmp.le.s32.totalorder 1, %s21
      %p368 = scmp.lt.s32.totalorder %s21, 5
      %p369 = pnand %p367, %p368
      %p370 = pneg %p369
      // Predicated region
      $region49: #{tpu_custom_call.1} parent=5 // pred_check
        _
      $region50: #{tpu_custom_call.1} parent=5 // pred_check_branch
        %372 = sbr.rel (%p369) target = $region52
      $region51: #{tpu_custom_call.1} parent=5 // pred_region
        %s373 = ssub.s32 %s21, 1
        // Predicated region
        $region53: #{tpu_custom_call.1} parent=51 // pred_check
          %p374 = pneg %p59
        $region54: #{tpu_custom_call.1} parent=51 // pred_check_branch
          %376 = sbr.rel (%p374) target = $region56
        $region55: #{tpu_custom_call.1} parent=51 // pred_region
          %377 = dma.done [#allocation5], 256
        $region56: #{tpu_custom_call.1} parent=51 // pred_fallthru
          _
        // Predicated region
        $region57: #{tpu_custom_call.1} parent=51 // pred_check
          %p378 = pneg %p80
        $region58: #{tpu_custom_call.1} parent=51 // pred_check_branch
          %380 = sbr.rel (%p378) target = $region60
        $region59: #{tpu_custom_call.1} parent=51 // pred_region
          %381 = dma.done [#allocation8], 512
        $region60: #{tpu_custom_call.1} parent=51 // pred_fallthru
          _
        // Predicated region
        $region61: #{tpu_custom_call.1} parent=51 // pred_check
          %p382 = pneg %p122
        $region62: #{tpu_custom_call.1} parent=51 // pred_check_branch
          %384 = sbr.rel (%p382) target = $region64
        $region63: #{tpu_custom_call.1} parent=51 // pred_region
          %385 = dma.done [#allocation8], 16
        $region64: #{tpu_custom_call.1} parent=51 // pred_fallthru
          _
        %s386 = sand.u32 %s26, 1
        %s387 = scalar_lea.sflag [#allocation11], %s386
        %s388 = sand.u32 %s135, 1
        %s389 = smul.addr %s388, 2048
        %s390 = scalar_lea.vmem [#allocation10], %s389
        // Predicated region
        $region65: #{tpu_custom_call.1} parent=51 // pred_check
          %p391 = pneg %p148
        $region66: #{tpu_custom_call.1} parent=51 // pred_check_branch
          %393 = sbr.rel (%p391) target = $region68
        $region67: #{tpu_custom_call.1} parent=51 // pred_region
          %394 = dma.done %s387, 32768
        $region68: #{tpu_custom_call.1} parent=51 // pred_fallthru
          _
        %s395 = sand.u32 %s26, 1
        %s396 = scalar_lea.sflag [#allocation11], %s395
        %s397 = sand.u32 %s161, 1
        %s398 = smul.addr %s397, 2
        %s399 = scalar_lea.vmem [#allocation12], %s398
        // Predicated region
        $region69: #{tpu_custom_call.1} parent=51 // pred_check
          %p400 = pneg %p174
        $region70: #{tpu_custom_call.1} parent=51 // pred_check_branch
          %402 = sbr.rel (%p400) target = $region72
        $region71: #{tpu_custom_call.1} parent=51 // pred_region
          %403 = dma.done %s396, 32
        $region72: #{tpu_custom_call.1} parent=51 // pred_fallthru
          _
        // Predicated region
        $region73: #{tpu_custom_call.1} parent=51 // pred_check
          %p404 = pneg %p221
        $region74: #{tpu_custom_call.1} parent=51 // pred_check_branch
          %406 = sbr.rel (%p404) target = $region76
        $region75: #{tpu_custom_call.1} parent=51 // pred_region
          %407 = dma.done [#allocation14], 16
        $region76: #{tpu_custom_call.1} parent=51 // pred_fallthru
          _
        %p408 = pneg %p59
        %p409 = pneg %p56
        %p410 = pneg %p80
        %p411 = pneg %p77
        %p412 = pneg %p101
        %p413 = pneg %p98
        %p414 = pneg %p122
        %p415 = pneg %p119
        %s416 = sand.u32 %s26, 1
        %s417 = scalar_lea.sflag [#allocation11], %s416
        %s418 = sand.u32 %s135, 1
        %s419 = smul.addr %s418, 2048
        %s420 = scalar_lea.vmem [#allocation10], %s419
        %p421 = pneg %p148
        %p422 = pneg %p145
        %s423 = sand.u32 %s26, 1
        %s424 = scalar_lea.sflag [#allocation11], %s423
        %s425 = sand.u32 %s161, 1
        %s426 = smul.addr %s425, 2
        %s427 = scalar_lea.vmem [#allocation12], %s426
        %p428 = pneg %p174
        %p429 = pneg %p171
        %s430 = smul.u32 32, %s31
        %p431 = scmp.lt.s32.totalorder %s430, 127
        %s432 = scalar_select %p431, %s430, 127
        %s433 = smul.addr %s432, 8
        %s434 = scalar_lea.vmem %s6, %s433
        %p435 = pneg %p200
        %p436 = pneg %p197
        %p437 = pneg %p221
        %p438 = pneg %p218
        %p439 = pneg %p247
        %p440 = pneg %p244
        %s441 = smul.u32 2, %s31
        %s442 = smul.u32 2, %s31
        %s443 = smul.u32 32, %s31
        %p444 = scmp.lt.s32.totalorder %s443, 127
        %s445 = scalar_select %p444, %s443, 127
        %s446 = smul.addr %s445, 8
        %s447 = scalar_lea.vmem %s6, %s446
        %s448 = smul.u32 32, %s31
        %p449 = scmp.eq.s32.totalorder %s31, 0
        // Predicated region
        $region77: #{tpu_custom_call.1} parent=51 // pred_check
          %p450 = pneg %p449
        $region78: #{tpu_custom_call.1} parent=51 // pred_check_branch
          %452 = sbr.rel (%p450) target = $region80
        $region79: #{tpu_custom_call.1} parent=51 // pred_region
          %vm453 = vcmask 123904
          %454 = vst.msk [vmem:[#allocation3] sm:$0x3] %vm453, 0.0
          %v455 = vld [vmem:[#allocation7] sm:$0xff]
          %v456 = vld [vmem:[#allocation7 + $0x8] sm:$0xff]
          %v457 = vld [vmem:[#allocation7 + $0x10] sm:$0xff]
          %v458 = vld [vmem:[#allocation7 + $0x18] sm:$0xff]
          %v459 = vld [vmem:[%s2] sm:$0xff]
          %v460 = vld [vmem:[%s2 + $0x8] sm:$0xff]
          %v461 = vld [vmem:[%s2 + $0x10] sm:$0xff]
          %v462 = vld [vmem:[%s2 + $0x18] sm:$0xff]
          %v463 = vld [vmem:[%s2 + $0x20] sm:$0xff]
          %v464 = vld [vmem:[%s2 + $0x28] sm:$0xff]
          %v465 = vld [vmem:[%s2 + $0x30] sm:$0xff]
          %v466 = vld [vmem:[%s2 + $0x38] sm:$0xff]
          %v467 = vld [vmem:[%s2 + $0x40] sm:$0xff]
          %v468 = vld [vmem:[%s2 + $0x48] sm:$0xff]
          %v469 = vld [vmem:[%s2 + $0x50] sm:$0xff]
          %v470 = vld [vmem:[%s2 + $0x58] sm:$0xff]
          %v471 = vld [vmem:[%s2 + $0x60] sm:$0xff]
          %v472 = vld [vmem:[%s2 + $0x68] sm:$0xff]
          %v473 = vld [vmem:[%s2 + $0x70] sm:$0xff]
          %v474 = vld [vmem:[%s2 + $0x78] sm:$0xff]
          %v475 = vld [vmem:[#allocation9] sm:$0x1]
          %v476 = vld [vmem:[#allocation4] sm:$0xf]
          %v477 = vld [vmem:[#allocation4 + $0x8] sm:$0xf]
          %vm478 = vcmask 556032
          %v480 = vsel %vm478, %v456, 0
          %v483 = vsel %vm478, %v458, 0
          %v486 = vsel %vm478, %v477, 0
          %488 = vmatprep.subr.mxu0 %v486
          %489 = vmatpush1.xpose.msra.mxu0 %v476
          %490 = vmatprep.subr.mxu0 0.0
          %491 = vmatpush1.xpose.msra.mxu0 0.0
          %492 = vmatprep.subr.mxu0 0.0
          %493 = vmatpush1.xpose.msra.mxu0 0.0
          %494 = vmatprep.subr.mxu0 0.0
          %495 = vmatpush1.xpose.msra.mxu0 0.0
          %496 = vmatprep.subr.mxu0 0.0
          %497 = vmatpush1.xpose.msra.mxu0 0.0
          %498 = vmatprep.subr.mxu0 0.0
          %499 = vmatpush1.xpose.msra.mxu0 0.0
          %500 = vmatprep.subr.mxu0 0.0
          %501 = vmatpush1.xpose.msra.mxu0 0.0
          %502 = vmatprep.subr.mxu0 0.0
          %503 = vmatpush1.xpose.msra.mxu0 0.0
          %504 = vmatprep.subr.mxu0 0.0
          %505 = vmatpush1.xpose.msra.mxu0 0.0
          %506 = vmatprep.subr.mxu0 0.0
          %507 = vmatpush1.xpose.msra.mxu0 0.0
          %508 = vmatprep.subr.mxu0 0.0
          %509 = vmatpush1.xpose.msra.mxu0 0.0
          %510 = vmatprep.subr.mxu0 0.0
          %511 = vmatpush1.xpose.msra.mxu0 0.0
          %512 = vmatprep.subr.mxu0 0.0
          %513 = vmatpush1.xpose.msra.mxu0 0.0
          %514 = vmatprep.subr.mxu0 0.0
          %515 = vmatpush1.xpose.msra.mxu0 0.0
          %516 = vmatprep.subr.mxu0 0.0
          %517 = vmatpush1.xpose.msra.mxu0 0.0
          %518 = vmatprep.subr.mxu0 0.0
          %519 = vmatpush1.xpose.msra.mxu0 0.0
          %520 = vmatprep.subr.mxu0 0.0
          %521 = vmatpush1.xpose.msra.mxu0 0.0
          %522 = vmatprep.subr.mxu0 0.0
          %523 = vmatpush1.xpose.msra.mxu0 0.0
          %524 = vmatprep.subr.mxu0 0.0
          %525 = vmatpush1.xpose.msra.mxu0 0.0
          %526 = vmatprep.subr.mxu0 0.0
          %527 = vmatpush1.xpose.msra.mxu0 0.0
          %528 = vmatprep.subr.mxu0 0.0
          %529 = vmatpush1.xpose.msra.mxu0 0.0
          %530 = vmatprep.subr.mxu0 0.0
          %531 = vmatpush1.xpose.msra.mxu0 0.0
          %532 = vmatprep.subr.mxu0 0.0
          %533 = vmatpush1.xpose.msra.mxu0 0.0
          %534 = vmatprep.subr.mxu0 0.0
          %535 = vmatpush1.xpose.msra.mxu0 0.0
          %536 = vmatprep.subr.mxu0 0.0
          %537 = vmatpush1.xpose.msra.mxu0 0.0
          %538 = vmatprep.subr.mxu0 0.0
          %539 = vmatpush1.xpose.msra.mxu0 0.0
          %540 = vmatprep.subr.mxu0 0.0
          %541 = vmatpush1.xpose.msra.mxu0 0.0
          %542 = vmatprep.subr.mxu0 0.0
          %543 = vmatpush1.xpose.msra.mxu0 0.0
          %544 = vmatprep.subr.mxu0 0.0
          %545 = vmatpush1.xpose.msra.mxu0 0.0
          %546 = vmatprep.subr.mxu0 0.0
          %547 = vmatpush1.xpose.msra.mxu0 0.0
          %548 = vmatprep.subr.mxu0 0.0
          %549 = vmatpush1.xpose.msra.mxu0 0.0
          %550 = vmatprep.subr.mxu0 0.0
          %551 = vmatpush1.xpose.msra.mxu0 0.0
          %552 = vmatprep.mubr.f32.mxu0 %v480
          %553 = vmatmul.mubr.f32.gmra.mrb[0].mxu0 %v455
          %v554 = vpop.f32.mrb[0].mxu0
          %v555 = vadd.f32 0.0, %v554
          %v556 = vpop.f32.mrb[0].mxu0
          %557 = vmatprep.mubr.f32.mxu0 %v483
          %558 = vmatmul.mubr.f32.gmra.mrb[0].mxu0 %v457
          %v559 = vpop.f32.mrb[0].mxu0
          %v560 = vadd.f32 0.0, %v559
          %v561 = vpop.f32.mrb[0].mxu0
          %562 = vdwg.mxu0
          %v564 = vlaneseq
          %v565 = vshrl.u32 %v564, 7
          %v566 = vsub.s32 0, %v565
          %v567 = vrot.slane %v475, %v566
          %vm569 = vcmask 31744
          %v571 = vsel %vm569, %v555, 0
          %v574 = vsel %vm569, %v560, 0
          %v577 = vsel %vm569, %v459, 0
          %v580 = vsel %vm569, %v460, 0
          %v583 = vsel %vm569, %v461, 0
          %v586 = vsel %vm569, %v462, 0
          %v589 = vsel %vm569, %v463, 0
          %v592 = vsel %vm569, %v464, 0
          %v595 = vsel %vm569, %v465, 0
          %v598 = vsel %vm569, %v466, 0
          %v601 = vsel %vm569, %v467, 0
          %v604 = vsel %vm569, %v468, 0
          %v607 = vsel %vm569, %v469, 0
          %v610 = vsel %vm569, %v470, 0
          %v613 = vsel %vm569, %v471, 0
          %v616 = vsel %vm569, %v472, 0
          %v619 = vsel %vm569, %v473, 0
          %v622 = vsel %vm569, %v474, 0
          %624 = vmatprep.subr.mxu0 0.0
          %625 = vmatpush1.xpose.msra.mxu0 %v577
          %626 = vmatprep.subr.mxu0 0.0
          %627 = vmatpush1.xpose.msra.mxu0 %v580
          %628 = vmatprep.subr.mxu0 0.0
          %629 = vmatpush1.xpose.msra.mxu0 %v583
          %630 = vmatprep.subr.mxu0 0.0
          %631 = vmatpush1.xpose.msra.mxu0 %v586
          %632 = vmatprep.subr.mxu0 0.0
          %633 = vmatpush1.xpose.msra.mxu0 %v589
          %634 = vmatprep.subr.mxu0 0.0
          %635 = vmatpush1.xpose.msra.mxu0 %v592
          %636 = vmatprep.subr.mxu0 0.0
          %637 = vmatpush1.xpose.msra.mxu0 %v595
          %638 = vmatprep.subr.mxu0 0.0
          %639 = vmatpush1.xpose.msra.mxu0 %v598
          %640 = vmatprep.subr.mxu0 0.0
          %641 = vmatpush1.xpose.msra.mxu0 %v601
          %642 = vmatprep.subr.mxu0 0.0
          %643 = vmatpush1.xpose.msra.mxu0 %v604
          %644 = vmatprep.subr.mxu0 0.0
          %645 = vmatpush1.xpose.msra.mxu0 %v607
          %646 = vmatprep.subr.mxu0 0.0
          %647 = vmatpush1.xpose.msra.mxu0 %v610
          %648 = vmatprep.subr.mxu0 0.0
          %649 = vmatpush1.xpose.msra.mxu0 %v613
          %650 = vmatprep.subr.mxu0 0.0
          %651 = vmatpush1.xpose.msra.mxu0 %v616
          %652 = vmatprep.subr.mxu0 0.0
          %653 = vmatpush1.xpose.msra.mxu0 %v619
          %654 = vmatprep.subr.mxu0 0.0
          %655 = vmatpush1.xpose.msra.mxu0 %v622
          %656 = vmatprep.subr.mxu0 0.0
          %657 = vmatpush1.xpose.msra.mxu0 0.0
          %658 = vmatprep.subr.mxu0 0.0
          %659 = vmatpush1.xpose.msra.mxu0 0.0
          %660 = vmatprep.subr.mxu0 0.0
          %661 = vmatpush1.xpose.msra.mxu0 0.0
          %662 = vmatprep.subr.mxu0 0.0
          %663 = vmatpush1.xpose.msra.mxu0 0.0
          %664 = vmatprep.subr.mxu0 0.0
          %665 = vmatpush1.xpose.msra.mxu0 0.0
          %666 = vmatprep.subr.mxu0 0.0
          %667 = vmatpush1.xpose.msra.mxu0 0.0
          %668 = vmatprep.subr.mxu0 0.0
          %669 = vmatpush1.xpose.msra.mxu0 0.0
          %670 = vmatprep.subr.mxu0 0.0
          %671 = vmatpush1.xpose.msra.mxu0 0.0
          %672 = vmatprep.subr.mxu0 0.0
          %673 = vmatpush1.xpose.msra.mxu0 0.0
          %674 = vmatprep.subr.mxu0 0.0
          %675 = vmatpush1.xpose.msra.mxu0 0.0
          %676 = vmatprep.subr.mxu0 0.0
          %677 = vmatpush1.xpose.msra.mxu0 0.0
          %678 = vmatprep.subr.mxu0 0.0
          %679 = vmatpush1.xpose.msra.mxu0 0.0
          %680 = vmatprep.subr.mxu0 0.0
          %681 = vmatpush1.xpose.msra.mxu0 0.0
          %682 = vmatprep.subr.mxu0 0.0
          %683 = vmatpush1.xpose.msra.mxu0 0.0
          %684 = vmatprep.subr.mxu0 0.0
          %685 = vmatpush1.xpose.msra.mxu0 0.0
          %686 = vmatprep.subr.mxu0 0.0
          %687 = vmatpush1.xpose.msra.mxu0 0.0
          %688 = vmatprep.mubr.f32.mxu0 0.0
          %689 = vmatmul.mubr.f32.gmra.mrb[0].mxu0 %v571
          %v690 = vpop.f32.mrb[0].mxu0
          %v691 = vadd.f32 %v567, %v690
          %v692 = vpop.f32.mrb[0].mxu0
          %693 = vmatprep.mubr.f32.mxu0 0.0
          %694 = vmatmul.mubr.f32.gmra.mrb[0].mxu0 %v574
          %v695 = vpop.f32.mrb[0].mxu0
          %v696 = vadd.f32 %v567, %v695
          %v697 = vpop.f32.mrb[0].mxu0
          %698 = vdwg.mxu0
          %v699 = vmax.f32 %v691, 0.0
          %v700 = vmax.f32 %v696, 0.0
          %701 = vst [vmem:[#allocation2] sm:$0x1] %v699
          %v704 = vunpack.c.l.s4 1983009808
          %v705 = vunpack.c.0.s8 %v704
          %v706 = vlaneseq
          %v707 = vshrl.u32 %v706, 7
          %v708 = vsub.s32 %v705, %v707
          %v709 = vrot.slane %v699, %v708
          %v710 = vrot.slane %v709, 7
          %v711 = vrot.slane %v710, 2
          %713 = vst [vmem:[#allocation2 + $0x2] sm:$0x1] %v711
          %v714 = vcombine.high %v709, %v709
          %716 = vst [vmem:[#allocation2 + $0x4] sm:$0x1] %v714
          %v717 = vrot.slane %v714, 7
          %v718 = vrot.slane %v717, 2
          %720 = vst [vmem:[#allocation2 + $0x6] sm:$0x1] %v718
          %v721 = vcombine.high %v699, %v699
          %v723 = vunpack.c.l.s4 1983009808
          %v724 = vunpack.c.0.s8 %v723
          %v725 = vlaneseq
          %v726 = vshrl.u32 %v725, 7
          %v727 = vsub.s32 %v724, %v726
          %v728 = vrot.slane %v721, %v727
          %730 = vst [vmem:[#allocation2 + $0x8] sm:$0x1] %v728
          %v731 = vrot.slane %v728, 7
          %v732 = vrot.slane %v731, 2
          %734 = vst [vmem:[#allocation2 + $0xa] sm:$0x1] %v732
          %v735 = vcombine.high %v728, %v728
          %737 = vst [vmem:[#allocation2 + $0xc] sm:$0x1] %v735
          %v738 = vrot.slane %v735, 7
          %v739 = vrot.slane %v738, 2
          %741 = vst [vmem:[#allocation2 + $0xe] sm:$0x1] %v739
          %742 = vst [vmem:[#allocation2 + $0x10] sm:$0x1] %v700
          %v745 = vunpack.c.l.s4 1983009808
          %v746 = vunpack.c.0.s8 %v745
          %v747 = vlaneseq
          %v748 = vshrl.u32 %v747, 7
          %v749 = vsub.s32 %v746, %v748
          %v750 = vrot.slane %v700, %v749
          %v751 = vrot.slane %v750, 7
          %v752 = vrot.slane %v751, 2
          %754 = vst [vmem:[#allocation2 + $0x12] sm:$0x1] %v752
          %v755 = vcombine.high %v750, %v750
          %757 = vst [vmem:[#allocation2 + $0x14] sm:$0x1] %v755
          %v758 = vrot.slane %v755, 7
          %v759 = vrot.slane %v758, 2
          %761 = vst [vmem:[#allocation2 + $0x16] sm:$0x1] %v759
          %v762 = vcombine.high %v700, %v700
          %v764 = vunpack.c.l.s4 1983009808
          %v765 = vunpack.c.0.s8 %v764
          %v766 = vlaneseq
          %v767 = vshrl.u32 %v766, 7
          %v768 = vsub.s32 %v765, %v767
          %v769 = vrot.slane %v762, %v768
          %771 = vst [vmem:[#allocation2 + $0x18] sm:$0x1] %v769
          %v772 = vrot.slane %v769, 7
          %v773 = vrot.slane %v772, 2
          %775 = vst [vmem:[#allocation2 + $0x1a] sm:$0x1] %v773
          %v776 = vcombine.high %v769, %v769
          %778 = vst [vmem:[#allocation2 + $0x1c] sm:$0x1] %v776
          %v779 = vrot.slane %v776, 7
          %v780 = vrot.slane %v779, 2
          %782 = vst [vmem:[#allocation2 + $0x1e] sm:$0x1] %v780
          %v783 = vld [vmem:[#allocation4] sm:$0xf0]
          %v784 = vld [vmem:[#allocation4 + $0x8] sm:$0xf0]
          %v787 = vrot.slane %v783, 4
          %v788 = vrot.slane %v784, 4
          %v790 = vsel %vm478, %v788, 0
          %792 = vmatprep.subr.mxu0 %v790
          %793 = vmatpush1.xpose.msra.mxu0 %v787
          %794 = vmatprep.subr.mxu0 0.0
          %795 = vmatpush1.xpose.msra.mxu0 0.0
          %796 = vmatprep.subr.mxu0 0.0
          %797 = vmatpush1.xpose.msra.mxu0 0.0
          %798 = vmatprep.subr.mxu0 0.0
          %799 = vmatpush1.xpose.msra.mxu0 0.0
          %800 = vmatprep.subr.mxu0 0.0
          %801 = vmatpush1.xpose.msra.mxu0 0.0
          %802 = vmatprep.subr.mxu0 0.0
          %803 = vmatpush1.xpose.msra.mxu0 0.0
          %804 = vmatprep.subr.mxu0 0.0
          %805 = vmatpush1.xpose.msra.mxu0 0.0
          %806 = vmatprep.subr.mxu0 0.0
          %807 = vmatpush1.xpose.msra.mxu0 0.0
          %808 = vmatprep.subr.mxu0 0.0
          %809 = vmatpush1.xpose.msra.mxu0 0.0
          %810 = vmatprep.subr.mxu0 0.0
          %811 = vmatpush1.xpose.msra.mxu0 0.0
          %812 = vmatprep.subr.mxu0 0.0
          %813 = vmatpush1.xpose.msra.mxu0 0.0
          %814 = vmatprep.subr.mxu0 0.0
          %815 = vmatpush1.xpose.msra.mxu0 0.0
          %816 = vmatprep.subr.mxu0 0.0
          %817 = vmatpush1.xpose.msra.mxu0 0.0
          %818 = vmatprep.subr.mxu0 0.0
          %819 = vmatpush1.xpose.msra.mxu0 0.0
          %820 = vmatprep.subr.mxu0 0.0
          %821 = vmatpush1.xpose.msra.mxu0 0.0
          %822 = vmatprep.subr.mxu0 0.0
          %823 = vmatpush1.xpose.msra.mxu0 0.0
          %824 = vmatprep.subr.mxu0 0.0
          %825 = vmatpush1.xpose.msra.mxu0 0.0
          %826 = vmatprep.subr.mxu0 0.0
          %827 = vmatpush1.xpose.msra.mxu0 0.0
          %828 = vmatprep.subr.mxu0 0.0
          %829 = vmatpush1.xpose.msra.mxu0 0.0
          %830 = vmatprep.subr.mxu0 0.0
          %831 = vmatpush1.xpose.msra.mxu0 0.0
          %832 = vmatprep.subr.mxu0 0.0
          %833 = vmatpush1.xpose.msra.mxu0 0.0
          %834 = vmatprep.subr.mxu0 0.0
          %835 = vmatpush1.xpose.msra.mxu0 0.0
          %836 = vmatprep.subr.mxu0 0.0
          %837 = vmatpush1.xpose.msra.mxu0 0.0
          %838 = vmatprep.subr.mxu0 0.0
          %839 = vmatpush1.xpose.msra.mxu0 0.0
          %840 = vmatprep.subr.mxu0 0.0
          %841 = vmatpush1.xpose.msra.mxu0 0.0
          %842 = vmatprep.subr.mxu0 0.0
          %843 = vmatpush1.xpose.msra.mxu0 0.0
          %844 = vmatprep.subr.mxu0 0.0
          %845 = vmatpush1.xpose.msra.mxu0 0.0
          %846 = vmatprep.subr.mxu0 0.0
          %847 = vmatpush1.xpose.msra.mxu0 0.0
          %848 = vmatprep.subr.mxu0 0.0
          %849 = vmatpush1.xpose.msra.mxu0 0.0
          %850 = vmatprep.subr.mxu0 0.0
          %851 = vmatpush1.xpose.msra.mxu0 0.0
          %852 = vmatprep.subr.mxu0 0.0
          %853 = vmatpush1.xpose.msra.mxu0 0.0
          %854 = vmatprep.subr.mxu0 0.0
          %855 = vmatpush1.xpose.msra.mxu0 0.0
          %856 = vmatprep.mubr.f32.mxu0 %v480
          %857 = vmatmul.mubr.f32.gmra.mrb[0].mxu0 %v455
          %v858 = vpop.f32.mrb[0].mxu0
          %v859 = vadd.f32 0.0, %v858
          %v860 = vpop.f32.mrb[0].mxu0
          %861 = vmatprep.mubr.f32.mxu0 %v483
          %862 = vmatmul.mubr.f32.gmra.mrb[0].mxu0 %v457
          %v863 = vpop.f32.mrb[0].mxu0
          %v864 = vadd.f32 0.0, %v863
          %v865 = vpop.f32.mrb[0].mxu0
          %866 = vdwg.mxu0
          %v868 = vsel %vm569, %v859, 0
          %v871 = vsel %vm569, %v864, 0
          %873 = vmatprep.subr.mxu0 0.0
          %874 = vmatpush1.xpose.msra.mxu0 %v577
          %875 = vmatprep.subr.mxu0 0.0
          %876 = vmatpush1.xpose.msra.mxu0 %v580
          %877 = vmatprep.subr.mxu0 0.0
          %878 = vmatpush1.xpose.msra.mxu0 %v583
          %879 = vmatprep.subr.mxu0 0.0
          %880 = vmatpush1.xpose.msra.mxu0 %v586
          %881 = vmatprep.subr.mxu0 0.0
          %882 = vmatpush1.xpose.msra.mxu0 %v589
          %883 = vmatprep.subr.mxu0 0.0
          %884 = vmatpush1.xpose.msra.mxu0 %v592
          %885 = vmatprep.subr.mxu0 0.0
          %886 = vmatpush1.xpose.msra.mxu0 %v595
          %887 = vmatprep.subr.mxu0 0.0
          %888 = vmatpush1.xpose.msra.mxu0 %v598
          %889 = vmatprep.subr.mxu0 0.0
          %890 = vmatpush1.xpose.msra.mxu0 %v601
          %891 = vmatprep.subr.mxu0 0.0
          %892 = vmatpush1.xpose.msra.mxu0 %v604
          %893 = vmatprep.subr.mxu0 0.0
          %894 = vmatpush1.xpose.msra.mxu0 %v607
          %895 = vmatprep.subr.mxu0 0.0
          %896 = vmatpush1.xpose.msra.mxu0 %v610
          %897 = vmatprep.subr.mxu0 0.0
          %898 = vmatpush1.xpose.msra.mxu0 %v613
          %899 = vmatprep.subr.mxu0 0.0
          %900 = vmatpush1.xpose.msra.mxu0 %v616
          %901 = vmatprep.subr.mxu0 0.0
          %902 = vmatpush1.xpose.msra.mxu0 %v619
          %903 = vmatprep.subr.mxu0 0.0
          %904 = vmatpush1.xpose.msra.mxu0 %v622
          %905 = vmatprep.subr.mxu0 0.0
          %906 = vmatpush1.xpose.msra.mxu0 0.0
          %907 = vmatprep.subr.mxu0 0.0
          %908 = vmatpush1.xpose.msra.mxu0 0.0
          %909 = vmatprep.subr.mxu0 0.0
          %910 = vmatpush1.xpose.msra.mxu0 0.0
          %911 = vmatprep.subr.mxu0 0.0
          %912 = vmatpush1.xpose.msra.mxu0 0.0
          %913 = vmatprep.subr.mxu0 0.0
          %914 = vmatpush1.xpose.msra.mxu0 0.0
          %915 = vmatprep.subr.mxu0 0.0
          %916 = vmatpush1.xpose.msra.mxu0 0.0
          %917 = vmatprep.subr.mxu0 0.0
          %918 = vmatpush1.xpose.msra.mxu0 0.0
          %919 = vmatprep.subr.mxu0 0.0
          %920 = vmatpush1.xpose.msra.mxu0 0.0
          %921 = vmatprep.subr.mxu0 0.0
          %922 = vmatpush1.xpose.msra.mxu0 0.0
          %923 = vmatprep.subr.mxu0 0.0
          %924 = vmatpush1.xpose.msra.mxu0 0.0
          %925 = vmatprep.subr.mxu0 0.0
          %926 = vmatpush1.xpose.msra.mxu0 0.0
          %927 = vmatprep.subr.mxu0 0.0
          %928 = vmatpush1.xpose.msra.mxu0 0.0
          %929 = vmatprep.subr.mxu0 0.0
          %930 = vmatpush1.xpose.msra.mxu0 0.0
          %931 = vmatprep.subr.mxu0 0.0
          %932 = vmatpush1.xpose.msra.mxu0 0.0
          %933 = vmatprep.subr.mxu0 0.0
          %934 = vmatpush1.xpose.msra.mxu0 0.0
          %935 = vmatprep.subr.mxu0 0.0
          %936 = vmatpush1.xpose.msra.mxu0 0.0
          %937 = vmatprep.mubr.f32.mxu0 0.0
          %938 = vmatmul.mubr.f32.gmra.mrb[0].mxu0 %v868
          %v939 = vpop.f32.mrb[0].mxu0
          %v940 = vadd.f32 %v567, %v939
          %v941 = vpop.f32.mrb[0].mxu0
          %942 = vmatprep.mubr.f32.mxu0 0.0
          %943 = vmatmul.mubr.f32.gmra.mrb[0].mxu0 %v871
          %v944 = vpop.f32.mrb[0].mxu0
          %v945 = vadd.f32 %v567, %v944
          %v946 = vpop.f32.mrb[0].mxu0
          %947 = vdwg.mxu0
          %v948 = vmax.f32 %v940, 0.0
          %v949 = vmax.f32 %v945, 0.0
          %950 = vst [vmem:[#allocation2 + $0x1] sm:$0x1] %v948
          %v953 = vunpack.c.l.s4 1983009808
          %v954 = vunpack.c.0.s8 %v953
          %v955 = vlaneseq
          %v956 = vshrl.u32 %v955, 7
          %v957 = vsub.s32 %v954, %v956
          %v958 = vrot.slane %v948, %v957
          %v959 = vrot.slane %v958, 7
          %v960 = vrot.slane %v959, 2
          %962 = vst [vmem:[#allocation2 + $0x3] sm:$0x1] %v960
          %v963 = vcombine.high %v958, %v958
          %965 = vst [vmem:[#allocation2 + $0x5] sm:$0x1] %v963
          %v966 = vrot.slane %v963, 7
          %v967 = vrot.slane %v966, 2
          %969 = vst [vmem:[#allocation2 + $0x7] sm:$0x1] %v967
          %v970 = vcombine.high %v948, %v948
          %v972 = vunpack.c.l.s4 1983009808
          %v973 = vunpack.c.0.s8 %v972
          %v974 = vlaneseq
          %v975 = vshrl.u32 %v974, 7
          %v976 = vsub.s32 %v973, %v975
          %v977 = vrot.slane %v970, %v976
          %979 = vst [vmem:[#allocation2 + $0x9] sm:$0x1] %v977
          %v980 = vrot.slane %v977, 7
          %v981 = vrot.slane %v980, 2
          %983 = vst [vmem:[#allocation2 + $0xb] sm:$0x1] %v981
          %v984 = vcombine.high %v977, %v977
          %986 = vst [vmem:[#allocation2 + $0xd] sm:$0x1] %v984
          %v987 = vrot.slane %v984, 7
          %v988 = vrot.slane %v987, 2
          %990 = vst [vmem:[#allocation2 + $0xf] sm:$0x1] %v988
          %991 = vst [vmem:[#allocation2 + $0x11] sm:$0x1] %v949
          %v994 = vunpack.c.l.s4 1983009808
          %v995 = vunpack.c.0.s8 %v994
          %v996 = vlaneseq
          %v997 = vshrl.u32 %v996, 7
          %v998 = vsub.s32 %v995, %v997
          %v999 = vrot.slane %v949, %v998
          %v1000 = vrot.slane %v999, 7
          %v1001 = vrot.slane %v1000, 2
          %1003 = vst [vmem:[#allocation2 + $0x13] sm:$0x1] %v1001
          %v1004 = vcombine.high %v999, %v999
          %1006 = vst [vmem:[#allocation2 + $0x15] sm:$0x1] %v1004
          %v1007 = vrot.slane %v1004, 7
          %v1008 = vrot.slane %v1007, 2
          %1010 = vst [vmem:[#allocation2 + $0x17] sm:$0x1] %v1008
          %v1011 = vcombine.high %v949, %v949
          %v1013 = vunpack.c.l.s4 1983009808
          %v1014 = vunpack.c.0.s8 %v1013
          %v1015 = vlaneseq
          %v1016 = vshrl.u32 %v1015, 7
          %v1017 = vsub.s32 %v1014, %v1016
          %v1018 = vrot.slane %v1011, %v1017
          %1020 = vst [vmem:[#allocation2 + $0x19] sm:$0x1] %v1018
          %v1021 = vrot.slane %v1018, 7
          %v1022 = vrot.slane %v1021, 2
          %1024 = vst [vmem:[#allocation2 + $0x1b] sm:$0x1] %v1022
          %v1025 = vcombine.high %v1018, %v1018
          %1027 = vst [vmem:[#allocation2 + $0x1d] sm:$0x1] %v1025
          %v1028 = vrot.slane %v1025, 7
          %v1029 = vrot.slane %v1028, 2
          %1031 = vst [vmem:[#allocation2 + $0x1f] sm:$0x1] %v1029
        $region80: #{tpu_custom_call.1} parent=51 // pred_fallthru
          _
        %v1032 = vld [vmem:[#allocation2] sm:$0xff]
        %v1033 = vld [vmem:[#allocation2 + $0x8] sm:$0xff]
        %v1034 = vld [vmem:[#allocation2 + $0x10] sm:$0xff]
        %v1035 = vld [vmem:[#allocation2 + $0x18] sm:$0xff]
        %v1040 = vcombine.high %v1032, %v1032
        %v1042 = vunpack.c.l.s4 1983009808
        %v1043 = vunpack.c.0.s8 %v1042
        %v1044 = vlaneseq
        %v1045 = vshrl.u32 %v1044, 7
        %v1046 = vsub.s32 %v1043, %v1045
        %v1047 = vrot.slane %v1032, %v1046
        %v1049 = vunpack.c.l.s4 1983009808
        %v1050 = vunpack.c.0.s8 %v1049
        %v1051 = vlaneseq
        %v1052 = vshrl.u32 %v1051, 7
        %v1053 = vsub.s32 %v1050, %v1052
        %v1054 = vrot.slane %v1040, %v1053
        %v1055 = vcombine.high %v1047, %v1047
        %v1056 = vcombine.high %v1054, %v1054
        %v1057 = vcombine.high %v1033, %v1033
        %v1059 = vunpack.c.l.s4 1983009808
        %v1060 = vunpack.c.0.s8 %v1059
        %v1061 = vlaneseq
        %v1062 = vshrl.u32 %v1061, 7
        %v1063 = vsub.s32 %v1060, %v1062
        %v1064 = vrot.slane %v1033, %v1063
        %v1066 = vunpack.c.l.s4 1983009808
        %v1067 = vunpack.c.0.s8 %v1066
        %v1068 = vlaneseq
        %v1069 = vshrl.u32 %v1068, 7
        %v1070 = vsub.s32 %v1067, %v1069
        %v1071 = vrot.slane %v1057, %v1070
        %v1072 = vcombine.high %v1064, %v1064
        %v1073 = vcombine.high %v1071, %v1071
        %v1074 = vcombine.high %v1034, %v1034
        %v1076 = vunpack.c.l.s4 1983009808
        %v1077 = vunpack.c.0.s8 %v1076
        %v1078 = vlaneseq
        %v1079 = vshrl.u32 %v1078, 7
        %v1080 = vsub.s32 %v1077, %v1079
        %v1081 = vrot.slane %v1034, %v1080
        %v1083 = vunpack.c.l.s4 1983009808
        %v1084 = vunpack.c.0.s8 %v1083
        %v1085 = vlaneseq
        %v1086 = vshrl.u32 %v1085, 7
        %v1087 = vsub.s32 %v1084, %v1086
        %v1088 = vrot.slane %v1074, %v1087
        %v1089 = vcombine.high %v1081, %v1081
        %v1090 = vcombine.high %v1088, %v1088
        %v1091 = vcombine.high %v1035, %v1035
        %v1093 = vunpack.c.l.s4 1983009808
        %v1094 = vunpack.c.0.s8 %v1093
        %v1095 = vlaneseq
        %v1096 = vshrl.u32 %v1095, 7
        %v1097 = vsub.s32 %v1094, %v1096
        %v1098 = vrot.slane %v1035, %v1097
        %v1100 = vunpack.c.l.s4 1983009808
        %v1101 = vunpack.c.0.s8 %v1100
        %v1102 = vlaneseq
        %v1103 = vshrl.u32 %v1102, 7
        %v1104 = vsub.s32 %v1101, %v1103
        %v1105 = vrot.slane %v1091, %v1104
        %v1106 = vcombine.high %v1098, %v1098
        %v1107 = vcombine.high %v1105, %v1105
        %v1124 = vpack.c.bf16 %v1047, %v1047
        %v1125 = vpack.c.bf16 %v1055, %v1055
        %v1126 = vpack.c.bf16 %v1054, %v1054
        %v1127 = vpack.c.bf16 %v1056, %v1056
        %v1128 = vpack.c.bf16 %v1064, %v1064
        %v1129 = vpack.c.bf16 %v1072, %v1072
        %v1130 = vpack.c.bf16 %v1071, %v1071
        %v1131 = vpack.c.bf16 %v1073, %v1073
        %v1132 = vpack.c.bf16 %v1081, %v1081
        %v1133 = vpack.c.bf16 %v1089, %v1089
        %v1134 = vpack.c.bf16 %v1088, %v1088
        %v1135 = vpack.c.bf16 %v1090, %v1090
        %v1136 = vpack.c.bf16 %v1098, %v1098
        %v1137 = vpack.c.bf16 %v1106, %v1106
        %v1138 = vpack.c.bf16 %v1105, %v1105
        %v1139 = vpack.c.bf16 %v1107, %v1107
        %v1140 = vld [vmem:[%s390] sm:$0xff]
        %v1141 = vld [vmem:[%s390 + $0x8] sm:$0xff]
        %v1142 = vld [vmem:[%s390 + $0x10] sm:$0xff]
        %v1143 = vld [vmem:[%s390 + $0x18] sm:$0xff]
        %v1144 = vld [vmem:[%s390 + $0x20] sm:$0xff]
        %v1145 = vld [vmem:[%s390 + $0x28] sm:$0xff]
        %v1146 = vld [vmem:[%s390 + $0x30] sm:$0xff]
        %v1147 = vld [vmem:[%s390 + $0x38] sm:$0xff]
        %v1148 = vld [vmem:[%s390 + $0x40] sm:$0xff]
        %v1149 = vld [vmem:[%s390 + $0x48] sm:$0xff]
        %v1150 = vld [vmem:[%s390 + $0x50] sm:$0xff]
        %v1151 = vld [vmem:[%s390 + $0x58] sm:$0xff]
        %v1152 = vld [vmem:[%s390 + $0x60] sm:$0xff]
        %v1153 = vld [vmem:[%s390 + $0x68] sm:$0xff]
        %v1154 = vld [vmem:[%s390 + $0x70] sm:$0xff]
        %v1155 = vld [vmem:[%s390 + $0x78] sm:$0xff]
        %v1156 = vld [vmem:[%s390 + $0x80] sm:$0xff]
        %v1157 = vld [vmem:[%s390 + $0x88] sm:$0xff]
        %v1158 = vld [vmem:[%s390 + $0x90] sm:$0xff]
        %v1159 = vld [vmem:[%s390 + $0x98] sm:$0xff]
        %v1160 = vld [vmem:[%s390 + $0xa0] sm:$0xff]
        %v1161 = vld [vmem:[%s390 + $0xa8] sm:$0xff]
        %v1162 = vld [vmem:[%s390 + $0xb0] sm:$0xff]
        %v1163 = vld [vmem:[%s390 + $0xb8] sm:$0xff]
        %v1164 = vld [vmem:[%s390 + $0xc0] sm:$0xff]
        %v1165 = vld [vmem:[%s390 + $0xc8] sm:$0xff]
        %v1166 = vld [vmem:[%s390 + $0xd0] sm:$0xff]
        %v1167 = vld [vmem:[%s390 + $0xd8] sm:$0xff]
        %v1168 = vld [vmem:[%s390 + $0xe0] sm:$0xff]
        %v1169 = vld [vmem:[%s390 + $0xe8] sm:$0xff]
        %v1170 = vld [vmem:[%s390 + $0xf0] sm:$0xff]
        %v1171 = vld [vmem:[%s390 + $0xf8] sm:$0xff]
        %v1172 = vld [vmem:[%s390 + $0x100] sm:$0xff]
        %v1173 = vld [vmem:[%s390 + $0x108] sm:$0xff]
        %v1174 = vld [vmem:[%s390 + $0x110] sm:$0xff]
        %v1175 = vld [vmem:[%s390 + $0x118] sm:$0xff]
        %v1176 = vld [vmem:[%s390 + $0x120] sm:$0xff]
        %v1177 = vld [vmem:[%s390 + $0x128] sm:$0xff]
        %v1178 = vld [vmem:[%s390 + $0x130] sm:$0xff]
        %v1179 = vld [vmem:[%s390 + $0x138] sm:$0xff]
        %v1180 = vld [vmem:[%s390 + $0x140] sm:$0xff]
        %v1181 = vld [vmem:[%s390 + $0x148] sm:$0xff]
        %v1182 = vld [vmem:[%s390 + $0x150] sm:$0xff]
        %v1183 = vld [vmem:[%s390 + $0x158] sm:$0xff]
        %v1184 = vld [vmem:[%s390 + $0x160] sm:$0xff]
        %v1185 = vld [vmem:[%s390 + $0x168] sm:$0xff]
        %v1186 = vld [vmem:[%s390 + $0x170] sm:$0xff]
        %v1187 = vld [vmem:[%s390 + $0x178] sm:$0xff]
        %v1188 = vld [vmem:[%s390 + $0x180] sm:$0xff]
        %v1189 = vld [vmem:[%s390 + $0x188] sm:$0xff]
        %v1190 = vld [vmem:[%s390 + $0x190] sm:$0xff]
        %v1191 = vld [vmem:[%s390 + $0x198] sm:$0xff]
        %v1192 = vld [vmem:[%s390 + $0x1a0] sm:$0xff]
        %v1193 = vld [vmem:[%s390 + $0x1a8] sm:$0xff]
        %v1194 = vld [vmem:[%s390 + $0x1b0] sm:$0xff]
        %v1195 = vld [vmem:[%s390 + $0x1b8] sm:$0xff]
        %v1196 = vld [vmem:[%s390 + $0x1c0] sm:$0xff]
        %v1197 = vld [vmem:[%s390 + $0x1c8] sm:$0xff]
        %v1198 = vld [vmem:[%s390 + $0x1d0] sm:$0xff]
        %v1199 = vld [vmem:[%s390 + $0x1d8] sm:$0xff]
        %v1200 = vld [vmem:[%s390 + $0x1e0] sm:$0xff]
        %v1201 = vld [vmem:[%s390 + $0x1e8] sm:$0xff]
        %v1202 = vld [vmem:[%s390 + $0x1f0] sm:$0xff]
        %v1203 = vld [vmem:[%s390 + $0x1f8] sm:$0xff]
        %v1204 = vld [vmem:[%s390 + $0x200] sm:$0xff]
        %v1205 = vld [vmem:[%s390 + $0x208] sm:$0xff]
        %v1206 = vld [vmem:[%s390 + $0x210] sm:$0xff]
        %v1207 = vld [vmem:[%s390 + $0x218] sm:$0xff]
        %v1208 = vld [vmem:[%s390 + $0x220] sm:$0xff]
        %v1209 = vld [vmem:[%s390 + $0x228] sm:$0xff]
        %v1210 = vld [vmem:[%s390 + $0x230] sm:$0xff]
        %v1211 = vld [vmem:[%s390 + $0x238] sm:$0xff]
        %v1212 = vld [vmem:[%s390 + $0x240] sm:$0xff]
        %v1213 = vld [vmem:[%s390 + $0x248] sm:$0xff]
        %v1214 = vld [vmem:[%s390 + $0x250] sm:$0xff]
        %v1215 = vld [vmem:[%s390 + $0x258] sm:$0xff]
        %v1216 = vld [vmem:[%s390 + $0x260] sm:$0xff]
        %v1217 = vld [vmem:[%s390 + $0x268] sm:$0xff]
        %v1218 = vld [vmem:[%s390 + $0x270] sm:$0xff]
        %v1219 = vld [vmem:[%s390 + $0x278] sm:$0xff]
        %v1220 = vld [vmem:[%s390 + $0x280] sm:$0xff]
        %v1221 = vld [vmem:[%s390 + $0x288] sm:$0xff]
        %v1222 = vld [vmem:[%s390 + $0x290] sm:$0xff]
        %v1223 = vld [vmem:[%s390 + $0x298] sm:$0xff]
        %v1224 = vld [vmem:[%s390 + $0x2a0] sm:$0xff]
        %v1225 = vld [vmem:[%s390 + $0x2a8] sm:$0xff]
        %v1226 = vld [vmem:[%s390 + $0x2b0] sm:$0xff]
        %v1227 = vld [vmem:[%s390 + $0x2b8] sm:$0xff]
        %v1228 = vld [vmem:[%s390 + $0x2c0] sm:$0xff]
        %v1229 = vld [vmem:[%s390 + $0x2c8] sm:$0xff]
        %v1230 = vld [vmem:[%s390 + $0x2d0] sm:$0xff]
        %v1231 = vld [vmem:[%s390 + $0x2d8] sm:$0xff]
        %v1232 = vld [vmem:[%s390 + $0x2e0] sm:$0xff]
        %v1233 = vld [vmem:[%s390 + $0x2e8] sm:$0xff]
        %v1234 = vld [vmem:[%s390 + $0x2f0] sm:$0xff]
        %v1235 = vld [vmem:[%s390 + $0x2f8] sm:$0xff]
        %v1236 = vld [vmem:[%s390 + $0x300] sm:$0xff]
        %v1237 = vld [vmem:[%s390 + $0x308] sm:$0xff]
        %v1238 = vld [vmem:[%s390 + $0x310] sm:$0xff]
        %v1239 = vld [vmem:[%s390 + $0x318] sm:$0xff]
        %v1240 = vld [vmem:[%s390 + $0x320] sm:$0xff]
        %v1241 = vld [vmem:[%s390 + $0x328] sm:$0xff]
        %v1242 = vld [vmem:[%s390 + $0x330] sm:$0xff]
        %v1243 = vld [vmem:[%s390 + $0x338] sm:$0xff]
        %v1244 = vld [vmem:[%s390 + $0x340] sm:$0xff]
        %v1245 = vld [vmem:[%s390 + $0x348] sm:$0xff]
        %v1246 = vld [vmem:[%s390 + $0x350] sm:$0xff]
        %v1247 = vld [vmem:[%s390 + $0x358] sm:$0xff]
        %v1248 = vld [vmem:[%s390 + $0x360] sm:$0xff]
        %v1249 = vld [vmem:[%s390 + $0x368] sm:$0xff]
        %v1250 = vld [vmem:[%s390 + $0x370] sm:$0xff]
        %v1251 = vld [vmem:[%s390 + $0x378] sm:$0xff]
        %v1252 = vld [vmem:[%s390 + $0x380] sm:$0xff]
        %v1253 = vld [vmem:[%s390 + $0x388] sm:$0xff]
        %v1254 = vld [vmem:[%s390 + $0x390] sm:$0xff]
        %v1255 = vld [vmem:[%s390 + $0x398] sm:$0xff]
        %v1256 = vld [vmem:[%s390 + $0x3a0] sm:$0xff]
        %v1257 = vld [vmem:[%s390 + $0x3a8] sm:$0xff]
        %v1258 = vld [vmem:[%s390 + $0x3b0] sm:$0xff]
        %v1259 = vld [vmem:[%s390 + $0x3b8] sm:$0xff]
        %v1260 = vld [vmem:[%s390 + $0x3c0] sm:$0xff]
        %v1261 = vld [vmem:[%s390 + $0x3c8] sm:$0xff]
        %v1262 = vld [vmem:[%s390 + $0x3d0] sm:$0xff]
        %v1263 = vld [vmem:[%s390 + $0x3d8] sm:$0xff]
        %v1264 = vld [vmem:[%s390 + $0x3e0] sm:$0xff]
        %v1265 = vld [vmem:[%s390 + $0x3e8] sm:$0xff]
        %v1266 = vld [vmem:[%s390 + $0x3f0] sm:$0xff]
        %v1267 = vld [vmem:[%s390 + $0x3f8] sm:$0xff]
        %v1268 = vld [vmem:[%s390 + $0x400] sm:$0xff]
        %v1269 = vld [vmem:[%s390 + $0x408] sm:$0xff]
        %v1270 = vld [vmem:[%s390 + $0x410] sm:$0xff]
        %v1271 = vld [vmem:[%s390 + $0x418] sm:$0xff]
        %v1272 = vld [vmem:[%s390 + $0x420] sm:$0xff]
        %v1273 = vld [vmem:[%s390 + $0x428] sm:$0xff]
        %v1274 = vld [vmem:[%s390 + $0x430] sm:$0xff]
        %v1275 = vld [vmem:[%s390 + $0x438] sm:$0xff]
        %v1276 = vld [vmem:[%s390 + $0x440] sm:$0xff]
        %v1277 = vld [vmem:[%s390 + $0x448] sm:$0xff]
        %v1278 = vld [vmem:[%s390 + $0x450] sm:$0xff]
        %v1279 = vld [vmem:[%s390 + $0x458] sm:$0xff]
        %v1280 = vld [vmem:[%s390 + $0x460] sm:$0xff]
        %v1281 = vld [vmem:[%s390 + $0x468] sm:$0xff]
        %v1282 = vld [vmem:[%s390 + $0x470] sm:$0xff]
        %v1283 = vld [vmem:[%s390 + $0x478] sm:$0xff]
        %v1284 = vld [vmem:[%s390 + $0x480] sm:$0xff]
        %v1285 = vld [vmem:[%s390 + $0x488] sm:$0xff]
        %v1286 = vld [vmem:[%s390 + $0x490] sm:$0xff]
        %v1287 = vld [vmem:[%s390 + $0x498] sm:$0xff]
        %v1288 = vld [vmem:[%s390 + $0x4a0] sm:$0xff]
        %v1289 = vld [vmem:[%s390 + $0x4a8] sm:$0xff]
        %v1290 = vld [vmem:[%s390 + $0x4b0] sm:$0xff]
        %v1291 = vld [vmem:[%s390 + $0x4b8] sm:$0xff]
        %v1292 = vld [vmem:[%s390 + $0x4c0] sm:$0xff]
        %v1293 = vld [vmem:[%s390 + $0x4c8] sm:$0xff]
        %v1294 = vld [vmem:[%s390 + $0x4d0] sm:$0xff]
        %v1295 = vld [vmem:[%s390 + $0x4d8] sm:$0xff]
        %v1296 = vld [vmem:[%s390 + $0x4e0] sm:$0xff]
        %v1297 = vld [vmem:[%s390 + $0x4e8] sm:$0xff]
        %v1298 = vld [vmem:[%s390 + $0x4f0] sm:$0xff]
        %v1299 = vld [vmem:[%s390 + $0x4f8] sm:$0xff]
        %v1300 = vld [vmem:[%s390 + $0x500] sm:$0xff]
        %v1301 = vld [vmem:[%s390 + $0x508] sm:$0xff]
        %v1302 = vld [vmem:[%s390 + $0x510] sm:$0xff]
        %v1303 = vld [vmem:[%s390 + $0x518] sm:$0xff]
        %v1304 = vld [vmem:[%s390 + $0x520] sm:$0xff]
        %v1305 = vld [vmem:[%s390 + $0x528] sm:$0xff]
        %v1306 = vld [vmem:[%s390 + $0x530] sm:$0xff]
        %v1307 = vld [vmem:[%s390 + $0x538] sm:$0xff]
        %v1308 = vld [vmem:[%s390 + $0x540] sm:$0xff]
        %v1309 = vld [vmem:[%s390 + $0x548] sm:$0xff]
        %v1310 = vld [vmem:[%s390 + $0x550] sm:$0xff]
        %v1311 = vld [vmem:[%s390 + $0x558] sm:$0xff]
        %v1312 = vld [vmem:[%s390 + $0x560] sm:$0xff]
        %v1313 = vld [vmem:[%s390 + $0x568] sm:$0xff]
        %v1314 = vld [vmem:[%s390 + $0x570] sm:$0xff]
        %v1315 = vld [vmem:[%s390 + $0x578] sm:$0xff]
        %v1316 = vld [vmem:[%s390 + $0x580] sm:$0xff]
        %v1317 = vld [vmem:[%s390 + $0x588] sm:$0xff]
        %v1318 = vld [vmem:[%s390 + $0x590] sm:$0xff]
        %v1319 = vld [vmem:[%s390 + $0x598] sm:$0xff]
        %v1320 = vld [vmem:[%s390 + $0x5a0] sm:$0xff]
        %v1321 = vld [vmem:[%s390 + $0x5a8] sm:$0xff]
        %v1322 = vld [vmem:[%s390 + $0x5b0] sm:$0xff]
        %v1323 = vld [vmem:[%s390 + $0x5b8] sm:$0xff]
        %v1324 = vld [vmem:[%s390 + $0x5c0] sm:$0xff]
        %v1325 = vld [vmem:[%s390 + $0x5c8] sm:$0xff]
        %v1326 = vld [vmem:[%s390 + $0x5d0] sm:$0xff]
        %v1327 = vld [vmem:[%s390 + $0x5d8] sm:$0xff]
        %v1328 = vld [vmem:[%s390 + $0x5e0] sm:$0xff]
        %v1329 = vld [vmem:[%s390 + $0x5e8] sm:$0xff]
        %v1330 = vld [vmem:[%s390 + $0x5f0] sm:$0xff]
        %v1331 = vld [vmem:[%s390 + $0x5f8] sm:$0xff]
        %v1332 = vld [vmem:[%s390 + $0x600] sm:$0xff]
        %v1333 = vld [vmem:[%s390 + $0x608] sm:$0xff]
        %v1334 = vld [vmem:[%s390 + $0x610] sm:$0xff]
        %v1335 = vld [vmem:[%s390 + $0x618] sm:$0xff]
        %v1336 = vld [vmem:[%s390 + $0x620] sm:$0xff]
        %v1337 = vld [vmem:[%s390 + $0x628] sm:$0xff]
        %v1338 = vld [vmem:[%s390 + $0x630] sm:$0xff]
        %v1339 = vld [vmem:[%s390 + $0x638] sm:$0xff]
        %v1340 = vld [vmem:[%s390 + $0x640] sm:$0xff]
        %v1341 = vld [vmem:[%s390 + $0x648] sm:$0xff]
        %v1342 = vld [vmem:[%s390 + $0x650] sm:$0xff]
        %v1343 = vld [vmem:[%s390 + $0x658] sm:$0xff]
        %v1344 = vld [vmem:[%s390 + $0x660] sm:$0xff]
        %v1345 = vld [vmem:[%s390 + $0x668] sm:$0xff]
        %v1346 = vld [vmem:[%s390 + $0x670] sm:$0xff]
        %v1347 = vld [vmem:[%s390 + $0x678] sm:$0xff]
        %v1348 = vld [vmem:[%s390 + $0x680] sm:$0xff]
        %v1349 = vld [vmem:[%s390 + $0x688] sm:$0xff]
        %v1350 = vld [vmem:[%s390 + $0x690] sm:$0xff]
        %v1351 = vld [vmem:[%s390 + $0x698] sm:$0xff]
        %v1352 = vld [vmem:[%s390 + $0x6a0] sm:$0xff]
        %v1353 = vld [vmem:[%s390 + $0x6a8] sm:$0xff]
        %v1354 = vld [vmem:[%s390 + $0x6b0] sm:$0xff]
        %v1355 = vld [vmem:[%s390 + $0x6b8] sm:$0xff]
        %v1356 = vld [vmem:[%s390 + $0x6c0] sm:$0xff]
        %v1357 = vld [vmem:[%s390 + $0x6c8] sm:$0xff]
        %v1358 = vld [vmem:[%s390 + $0x6d0] sm:$0xff]
        %v1359 = vld [vmem:[%s390 + $0x6d8] sm:$0xff]
        %v1360 = vld [vmem:[%s390 + $0x6e0] sm:$0xff]
        %v1361 = vld [vmem:[%s390 + $0x6e8] sm:$0xff]
        %v1362 = vld [vmem:[%s390 + $0x6f0] sm:$0xff]
        %v1363 = vld [vmem:[%s390 + $0x6f8] sm:$0xff]
        %v1364 = vld [vmem:[%s390 + $0x700] sm:$0xff]
        %v1365 = vld [vmem:[%s390 + $0x708] sm:$0xff]
        %v1366 = vld [vmem:[%s390 + $0x710] sm:$0xff]
        %v1367 = vld [vmem:[%s390 + $0x718] sm:$0xff]
        %v1368 = vld [vmem:[%s390 + $0x720] sm:$0xff]
        %v1369 = vld [vmem:[%s390 + $0x728] sm:$0xff]
        %v1370 = vld [vmem:[%s390 + $0x730] sm:$0xff]
        %v1371 = vld [vmem:[%s390 + $0x738] sm:$0xff]
        %v1372 = vld [vmem:[%s390 + $0x740] sm:$0xff]
        %v1373 = vld [vmem:[%s390 + $0x748] sm:$0xff]
        %v1374 = vld [vmem:[%s390 + $0x750] sm:$0xff]
        %v1375 = vld [vmem:[%s390 + $0x758] sm:$0xff]
        %v1376 = vld [vmem:[%s390 + $0x760] sm:$0xff]
        %v1377 = vld [vmem:[%s390 + $0x768] sm:$0xff]
        %v1378 = vld [vmem:[%s390 + $0x770] sm:$0xff]
        %v1379 = vld [vmem:[%s390 + $0x778] sm:$0xff]
        %v1380 = vld [vmem:[%s390 + $0x780] sm:$0xff]
        %v1381 = vld [vmem:[%s390 + $0x788] sm:$0xff]
        %v1382 = vld [vmem:[%s390 + $0x790] sm:$0xff]
        %v1383 = vld [vmem:[%s390 + $0x798] sm:$0xff]
        %v1384 = vld [vmem:[%s390 + $0x7a0] sm:$0xff]
        %v1385 = vld [vmem:[%s390 + $0x7a8] sm:$0xff]
        %v1386 = vld [vmem:[%s390 + $0x7b0] sm:$0xff]
        %v1387 = vld [vmem:[%s390 + $0x7b8] sm:$0xff]
        %v1388 = vld [vmem:[%s390 + $0x7c0] sm:$0xff]
        %v1389 = vld [vmem:[%s390 + $0x7c8] sm:$0xff]
        %v1390 = vld [vmem:[%s390 + $0x7d0] sm:$0xff]
        %v1391 = vld [vmem:[%s390 + $0x7d8] sm:$0xff]
        %v1392 = vld [vmem:[%s390 + $0x7e0] sm:$0xff]
        %v1393 = vld [vmem:[%s390 + $0x7e8] sm:$0xff]
        %v1394 = vld [vmem:[%s390 + $0x7f0] sm:$0xff]
        %v1395 = vld [vmem:[%s390 + $0x7f8] sm:$0xff]
        %v1396 = vld [vmem:[%s399] sm:$0x3]
        %v1398 = vlaneseq
        %v1399 = vshrl.u32 %v1398, 7
        %v1400 = vsub.s32 0, %v1399
        %v1401 = vrot.slane %v1396, %v1400
        %v1402 = vlaneseq
        %v1403 = vshrl.u32 %v1402, 7
        %v1404 = vsub.s32 1, %v1403
        %v1405 = vrot.slane %v1396, %v1404
        %v1664 = vunpack.c.l.b16 %v1140
        %v1665 = vunpack.c.h.b16 %v1140
        %v1666 = vunpack.c.l.b16 %v1141
        %v1667 = vunpack.c.h.b16 %v1141
        %v1668 = vunpack.c.l.b16 %v1142
        %v1669 = vunpack.c.h.b16 %v1142
        %v1670 = vunpack.c.l.b16 %v1143
        %v1671 = vunpack.c.h.b16 %v1143
        %v1672 = vunpack.c.l.b16 %v1144
        %v1673 = vunpack.c.h.b16 %v1144
        %v1674 = vunpack.c.l.b16 %v1145
        %v1675 = vunpack.c.h.b16 %v1145
        %v1676 = vunpack.c.l.b16 %v1146
        %v1677 = vunpack.c.h.b16 %v1146
        %v1678 = vunpack.c.l.b16 %v1147
        %v1679 = vunpack.c.h.b16 %v1147
        %v1680 = vunpack.c.l.b16 %v1148
        %v1681 = vunpack.c.h.b16 %v1148
        %v1682 = vunpack.c.l.b16 %v1149
        %v1683 = vunpack.c.h.b16 %v1149
        %v1684 = vunpack.c.l.b16 %v1150
        %v1685 = vunpack.c.h.b16 %v1150
        %v1686 = vunpack.c.l.b16 %v1151
        %v1687 = vunpack.c.h.b16 %v1151
        %v1688 = vunpack.c.l.b16 %v1152
        %v1689 = vunpack.c.h.b16 %v1152
        %v1690 = vunpack.c.l.b16 %v1153
        %v1691 = vunpack.c.h.b16 %v1153
        %v1692 = vunpack.c.l.b16 %v1154
        %v1693 = vunpack.c.h.b16 %v1154
        %v1694 = vunpack.c.l.b16 %v1155
        %v1695 = vunpack.c.h.b16 %v1155
        %v1696 = vunpack.c.l.b16 %v1156
        %v1697 = vunpack.c.h.b16 %v1156
        %v1698 = vunpack.c.l.b16 %v1157
        %v1699 = vunpack.c.h.b16 %v1157
        %v1700 = vunpack.c.l.b16 %v1158
        %v1701 = vunpack.c.h.b16 %v1158
        %v1702 = vunpack.c.l.b16 %v1159
        %v1703 = vunpack.c.h.b16 %v1159
        %v1704 = vunpack.c.l.b16 %v1160
        %v1705 = vunpack.c.h.b16 %v1160
        %v1706 = vunpack.c.l.b16 %v1161
        %v1707 = vunpack.c.h.b16 %v1161
        %v1708 = vunpack.c.l.b16 %v1162
        %v1709 = vunpack.c.h.b16 %v1162
        %v1710 = vunpack.c.l.b16 %v1163
        %v1711 = vunpack.c.h.b16 %v1163
        %v1712 = vunpack.c.l.b16 %v1164
        %v1713 = vunpack.c.h.b16 %v1164
        %v1714 = vunpack.c.l.b16 %v1165
        %v1715 = vunpack.c.h.b16 %v1165
        %v1716 = vunpack.c.l.b16 %v1166
        %v1717 = vunpack.c.h.b16 %v1166
        %v1718 = vunpack.c.l.b16 %v1167
        %v1719 = vunpack.c.h.b16 %v1167
        %v1720 = vunpack.c.l.b16 %v1168
        %v1721 = vunpack.c.h.b16 %v1168
        %v1722 = vunpack.c.l.b16 %v1169
        %v1723 = vunpack.c.h.b16 %v1169
        %v1724 = vunpack.c.l.b16 %v1170
        %v1725 = vunpack.c.h.b16 %v1170
        %v1726 = vunpack.c.l.b16 %v1171
        %v1727 = vunpack.c.h.b16 %v1171
        %v1728 = vunpack.c.l.b16 %v1172
        %v1729 = vunpack.c.h.b16 %v1172
        %v1730 = vunpack.c.l.b16 %v1173
        %v1731 = vunpack.c.h.b16 %v1173
        %v1732 = vunpack.c.l.b16 %v1174
        %v1733 = vunpack.c.h.b16 %v1174
        %v1734 = vunpack.c.l.b16 %v1175
        %v1735 = vunpack.c.h.b16 %v1175
        %v1736 = vunpack.c.l.b16 %v1176
        %v1737 = vunpack.c.h.b16 %v1176
        %v1738 = vunpack.c.l.b16 %v1177
        %v1739 = vunpack.c.h.b16 %v1177
        %v1740 = vunpack.c.l.b16 %v1178
        %v1741 = vunpack.c.h.b16 %v1178
        %v1742 = vunpack.c.l.b16 %v1179
        %v1743 = vunpack.c.h.b16 %v1179
        %v1744 = vunpack.c.l.b16 %v1180
        %v1745 = vunpack.c.h.b16 %v1180
        %v1746 = vunpack.c.l.b16 %v1181
        %v1747 = vunpack.c.h.b16 %v1181
        %v1748 = vunpack.c.l.b16 %v1182
        %v1749 = vunpack.c.h.b16 %v1182
        %v1750 = vunpack.c.l.b16 %v1183
        %v1751 = vunpack.c.h.b16 %v1183
        %v1752 = vunpack.c.l.b16 %v1184
        %v1753 = vunpack.c.h.b16 %v1184
        %v1754 = vunpack.c.l.b16 %v1185
        %v1755 = vunpack.c.h.b16 %v1185
        %v1756 = vunpack.c.l.b16 %v1186
        %v1757 = vunpack.c.h.b16 %v1186
        %v1758 = vunpack.c.l.b16 %v1187
        %v1759 = vunpack.c.h.b16 %v1187
        %v1760 = vunpack.c.l.b16 %v1188
        %v1761 = vunpack.c.h.b16 %v1188
        %v1762 = vunpack.c.l.b16 %v1189
        %v1763 = vunpack.c.h.b16 %v1189
        %v1764 = vunpack.c.l.b16 %v1190
        %v1765 = vunpack.c.h.b16 %v1190
        %v1766 = vunpack.c.l.b16 %v1191
        %v1767 = vunpack.c.h.b16 %v1191
        %v1768 = vunpack.c.l.b16 %v1192
        %v1769 = vunpack.c.h.b16 %v1192
        %v1770 = vunpack.c.l.b16 %v1193
        %v1771 = vunpack.c.h.b16 %v1193
        %v1772 = vunpack.c.l.b16 %v1194
        %v1773 = vunpack.c.h.b16 %v1194
        %v1774 = vunpack.c.l.b16 %v1195
        %v1775 = vunpack.c.h.b16 %v1195
        %v1776 = vunpack.c.l.b16 %v1196
        %v1777 = vunpack.c.h.b16 %v1196
        %v1778 = vunpack.c.l.b16 %v1197
        %v1779 = vunpack.c.h.b16 %v1197
        %v1780 = vunpack.c.l.b16 %v1198
        %v1781 = vunpack.c.h.b16 %v1198
        %v1782 = vunpack.c.l.b16 %v1199
        %v1783 = vunpack.c.h.b16 %v1199
        %v1784 = vunpack.c.l.b16 %v1200
        %v1785 = vunpack.c.h.b16 %v1200
        %v1786 = vunpack.c.l.b16 %v1201
        %v1787 = vunpack.c.h.b16 %v1201
        %v1788 = vunpack.c.l.b16 %v1202
        %v1789 = vunpack.c.h.b16 %v1202
        %v1790 = vunpack.c.l.b16 %v1203
        %v1791 = vunpack.c.h.b16 %v1203
        %v1792 = vunpack.c.l.b16 %v1204
        %v1793 = vunpack.c.h.b16 %v1204
        %v1794 = vunpack.c.l.b16 %v1205
        %v1795 = vunpack.c.h.b16 %v1205
        %v1796 = vunpack.c.l.b16 %v1206
        %v1797 = vunpack.c.h.b16 %v1206
        %v1798 = vunpack.c.l.b16 %v1207
        %v1799 = vunpack.c.h.b16 %v1207
        %v1800 = vunpack.c.l.b16 %v1208
        %v1801 = vunpack.c.h.b16 %v1208
        %v1802 = vunpack.c.l.b16 %v1209
        %v1803 = vunpack.c.h.b16 %v1209
        %v1804 = vunpack.c.l.b16 %v1210
        %v1805 = vunpack.c.h.b16 %v1210
        %v1806 = vunpack.c.l.b16 %v1211
        %v1807 = vunpack.c.h.b16 %v1211
        %v1808 = vunpack.c.l.b16 %v1212
        %v1809 = vunpack.c.h.b16 %v1212
        %v1810 = vunpack.c.l.b16 %v1213
        %v1811 = vunpack.c.h.b16 %v1213
        %v1812 = vunpack.c.l.b16 %v1214
        %v1813 = vunpack.c.h.b16 %v1214
        %v1814 = vunpack.c.l.b16 %v1215
        %v1815 = vunpack.c.h.b16 %v1215
        %v1816 = vunpack.c.l.b16 %v1216
        %v1817 = vunpack.c.h.b16 %v1216
        %v1818 = vunpack.c.l.b16 %v1217
        %v1819 = vunpack.c.h.b16 %v1217
        %v1820 = vunpack.c.l.b16 %v1218
        %v1821 = vunpack.c.h.b16 %v1218
        %v1822 = vunpack.c.l.b16 %v1219
        %v1823 = vunpack.c.h.b16 %v1219
        %v1824 = vunpack.c.l.b16 %v1220
        %v1825 = vunpack.c.h.b16 %v1220
        %v1826 = vunpack.c.l.b16 %v1221
        %v1827 = vunpack.c.h.b16 %v1221
        %v1828 = vunpack.c.l.b16 %v1222
        %v1829 = vunpack.c.h.b16 %v1222
        %v1830 = vunpack.c.l.b16 %v1223
        %v1831 = vunpack.c.h.b16 %v1223
        %v1832 = vunpack.c.l.b16 %v1224
        %v1833 = vunpack.c.h.b16 %v1224
        %v1834 = vunpack.c.l.b16 %v1225
        %v1835 = vunpack.c.h.b16 %v1225
        %v1836 = vunpack.c.l.b16 %v1226
        %v1837 = vunpack.c.h.b16 %v1226
        %v1838 = vunpack.c.l.b16 %v1227
        %v1839 = vunpack.c.h.b16 %v1227
        %v1840 = vunpack.c.l.b16 %v1228
        %v1841 = vunpack.c.h.b16 %v1228
        %v1842 = vunpack.c.l.b16 %v1229
        %v1843 = vunpack.c.h.b16 %v1229
        %v1844 = vunpack.c.l.b16 %v1230
        %v1845 = vunpack.c.h.b16 %v1230
        %v1846 = vunpack.c.l.b16 %v1231
        %v1847 = vunpack.c.h.b16 %v1231
        %v1848 = vunpack.c.l.b16 %v1232
        %v1849 = vunpack.c.h.b16 %v1232
        %v1850 = vunpack.c.l.b16 %v1233
        %v1851 = vunpack.c.h.b16 %v1233
        %v1852 = vunpack.c.l.b16 %v1234
        %v1853 = vunpack.c.h.b16 %v1234
        %v1854 = vunpack.c.l.b16 %v1235
        %v1855 = vunpack.c.h.b16 %v1235
        %v1856 = vunpack.c.l.b16 %v1236
        %v1857 = vunpack.c.h.b16 %v1236
        %v1858 = vunpack.c.l.b16 %v1237
        %v1859 = vunpack.c.h.b16 %v1237
        %v1860 = vunpack.c.l.b16 %v1238
        %v1861 = vunpack.c.h.b16 %v1238
        %v1862 = vunpack.c.l.b16 %v1239
        %v1863 = vunpack.c.h.b16 %v1239
        %v1864 = vunpack.c.l.b16 %v1240
        %v1865 = vunpack.c.h.b16 %v1240
        %v1866 = vunpack.c.l.b16 %v1241
        %v1867 = vunpack.c.h.b16 %v1241
        %v1868 = vunpack.c.l.b16 %v1242
        %v1869 = vunpack.c.h.b16 %v1242
        %v1870 = vunpack.c.l.b16 %v1243
        %v1871 = vunpack.c.h.b16 %v1243
        %v1872 = vunpack.c.l.b16 %v1244
        %v1873 = vunpack.c.h.b16 %v1244
        %v1874 = vunpack.c.l.b16 %v1245
        %v1875 = vunpack.c.h.b16 %v1245
        %v1876 = vunpack.c.l.b16 %v1246
        %v1877 = vunpack.c.h.b16 %v1246
        %v1878 = vunpack.c.l.b16 %v1247
        %v1879 = vunpack.c.h.b16 %v1247
        %v1880 = vunpack.c.l.b16 %v1248
        %v1881 = vunpack.c.h.b16 %v1248
        %v1882 = vunpack.c.l.b16 %v1249
        %v1883 = vunpack.c.h.b16 %v1249
        %v1884 = vunpack.c.l.b16 %v1250
        %v1885 = vunpack.c.h.b16 %v1250
        %v1886 = vunpack.c.l.b16 %v1251
        %v1887 = vunpack.c.h.b16 %v1251
        %v1888 = vunpack.c.l.b16 %v1252
        %v1889 = vunpack.c.h.b16 %v1252
        %v1890 = vunpack.c.l.b16 %v1253
        %v1891 = vunpack.c.h.b16 %v1253
        %v1892 = vunpack.c.l.b16 %v1254
        %v1893 = vunpack.c.h.b16 %v1254
        %v1894 = vunpack.c.l.b16 %v1255
        %v1895 = vunpack.c.h.b16 %v1255
        %v1896 = vunpack.c.l.b16 %v1256
        %v1897 = vunpack.c.h.b16 %v1256
        %v1898 = vunpack.c.l.b16 %v1257
        %v1899 = vunpack.c.h.b16 %v1257
        %v1900 = vunpack.c.l.b16 %v1258
        %v1901 = vunpack.c.h.b16 %v1258
        %v1902 = vunpack.c.l.b16 %v1259
        %v1903 = vunpack.c.h.b16 %v1259
        %v1904 = vunpack.c.l.b16 %v1260
        %v1905 = vunpack.c.h.b16 %v1260
        %v1906 = vunpack.c.l.b16 %v1261
        %v1907 = vunpack.c.h.b16 %v1261
        %v1908 = vunpack.c.l.b16 %v1262
        %v1909 = vunpack.c.h.b16 %v1262
        %v1910 = vunpack.c.l.b16 %v1263
        %v1911 = vunpack.c.h.b16 %v1263
        %v1912 = vunpack.c.l.b16 %v1264
        %v1913 = vunpack.c.h.b16 %v1264
        %v1914 = vunpack.c.l.b16 %v1265
        %v1915 = vunpack.c.h.b16 %v1265
        %v1916 = vunpack.c.l.b16 %v1266
        %v1917 = vunpack.c.h.b16 %v1266
        %v1918 = vunpack.c.l.b16 %v1267
        %v1919 = vunpack.c.h.b16 %v1267
        %v1920 = vunpack.c.l.b16 %v1268
        %v1921 = vunpack.c.h.b16 %v1268
        %v1922 = vunpack.c.l.b16 %v1269
        %v1923 = vunpack.c.h.b16 %v1269
        %v1924 = vunpack.c.l.b16 %v1270
        %v1925 = vunpack.c.h.b16 %v1270
        %v1926 = vunpack.c.l.b16 %v1271
        %v1927 = vunpack.c.h.b16 %v1271
        %v1928 = vunpack.c.l.b16 %v1272
        %v1929 = vunpack.c.h.b16 %v1272
        %v1930 = vunpack.c.l.b16 %v1273
        %v1931 = vunpack.c.h.b16 %v1273
        %v1932 = vunpack.c.l.b16 %v1274
        %v1933 = vunpack.c.h.b16 %v1274
        %v1934 = vunpack.c.l.b16 %v1275
        %v1935 = vunpack.c.h.b16 %v1275
        %v1936 = vunpack.c.l.b16 %v1276
        %v1937 = vunpack.c.h.b16 %v1276
        %v1938 = vunpack.c.l.b16 %v1277
        %v1939 = vunpack.c.h.b16 %v1277
        %v1940 = vunpack.c.l.b16 %v1278
        %v1941 = vunpack.c.h.b16 %v1278
        %v1942 = vunpack.c.l.b16 %v1279
        %v1943 = vunpack.c.h.b16 %v1279
        %v1944 = vunpack.c.l.b16 %v1280
        %v1945 = vunpack.c.h.b16 %v1280
        %v1946 = vunpack.c.l.b16 %v1281
        %v1947 = vunpack.c.h.b16 %v1281
        %v1948 = vunpack.c.l.b16 %v1282
        %v1949 = vunpack.c.h.b16 %v1282
        %v1950 = vunpack.c.l.b16 %v1283
        %v1951 = vunpack.c.h.b16 %v1283
        %v1952 = vunpack.c.l.b16 %v1284
        %v1953 = vunpack.c.h.b16 %v1284
        %v1954 = vunpack.c.l.b16 %v1285
        %v1955 = vunpack.c.h.b16 %v1285
        %v1956 = vunpack.c.l.b16 %v1286
        %v1957 = vunpack.c.h.b16 %v1286
        %v1958 = vunpack.c.l.b16 %v1287
        %v1959 = vunpack.c.h.b16 %v1287
        %v1960 = vunpack.c.l.b16 %v1288
        %v1961 = vunpack.c.h.b16 %v1288
        %v1962 = vunpack.c.l.b16 %v1289
        %v1963 = vunpack.c.h.b16 %v1289
        %v1964 = vunpack.c.l.b16 %v1290
        %v1965 = vunpack.c.h.b16 %v1290
        %v1966 = vunpack.c.l.b16 %v1291
        %v1967 = vunpack.c.h.b16 %v1291
        %v1968 = vunpack.c.l.b16 %v1292
        %v1969 = vunpack.c.h.b16 %v1292
        %v1970 = vunpack.c.l.b16 %v1293
        %v1971 = vunpack.c.h.b16 %v1293
        %v1972 = vunpack.c.l.b16 %v1294
        %v1973 = vunpack.c.h.b16 %v1294
        %v1974 = vunpack.c.l.b16 %v1295
        %v1975 = vunpack.c.h.b16 %v1295
        %v1976 = vunpack.c.l.b16 %v1296
        %v1977 = vunpack.c.h.b16 %v1296
        %v1978 = vunpack.c.l.b16 %v1297
        %v1979 = vunpack.c.h.b16 %v1297
        %v1980 = vunpack.c.l.b16 %v1298
        %v1981 = vunpack.c.h.b16 %v1298
        %v1982 = vunpack.c.l.b16 %v1299
        %v1983 = vunpack.c.h.b16 %v1299
        %v1984 = vunpack.c.l.b16 %v1300
        %v1985 = vunpack.c.h.b16 %v1300
        %v1986 = vunpack.c.l.b16 %v1301
        %v1987 = vunpack.c.h.b16 %v1301
        %v1988 = vunpack.c.l.b16 %v1302
        %v1989 = vunpack.c.h.b16 %v1302
        %v1990 = vunpack.c.l.b16 %v1303
        %v1991 = vunpack.c.h.b16 %v1303
        %v1992 = vunpack.c.l.b16 %v1304
        %v1993 = vunpack.c.h.b16 %v1304
        %v1994 = vunpack.c.l.b16 %v1305
        %v1995 = vunpack.c.h.b16 %v1305
        %v1996 = vunpack.c.l.b16 %v1306
        %v1997 = vunpack.c.h.b16 %v1306
        %v1998 = vunpack.c.l.b16 %v1307
        %v1999 = vunpack.c.h.b16 %v1307
        %v2000 = vunpack.c.l.b16 %v1308
        %v2001 = vunpack.c.h.b16 %v1308
        %v2002 = vunpack.c.l.b16 %v1309
        %v2003 = vunpack.c.h.b16 %v1309
        %v2004 = vunpack.c.l.b16 %v1310
        %v2005 = vunpack.c.h.b16 %v1310
        %v2006 = vunpack.c.l.b16 %v1311
        %v2007 = vunpack.c.h.b16 %v1311
        %v2008 = vunpack.c.l.b16 %v1312
        %v2009 = vunpack.c.h.b16 %v1312
        %v2010 = vunpack.c.l.b16 %v1313
        %v2011 = vunpack.c.h.b16 %v1313
        %v2012 = vunpack.c.l.b16 %v1314
        %v2013 = vunpack.c.h.b16 %v1314
        %v2014 = vunpack.c.l.b16 %v1315
        %v2015 = vunpack.c.h.b16 %v1315
        %v2016 = vunpack.c.l.b16 %v1316
        %v2017 = vunpack.c.h.b16 %v1316
        %v2018 = vunpack.c.l.b16 %v1317
        %v2019 = vunpack.c.h.b16 %v1317
        %v2020 = vunpack.c.l.b16 %v1318
        %v2021 = vunpack.c.h.b16 %v1318
        %v2022 = vunpack.c.l.b16 %v1319
        %v2023 = vunpack.c.h.b16 %v1319
        %v2024 = vunpack.c.l.b16 %v1320
        %v2025 = vunpack.c.h.b16 %v1320
        %v2026 = vunpack.c.l.b16 %v1321
        %v2027 = vunpack.c.h.b16 %v1321
        %v2028 = vunpack.c.l.b16 %v1322
        %v2029 = vunpack.c.h.b16 %v1322
        %v2030 = vunpack.c.l.b16 %v1323
        %v2031 = vunpack.c.h.b16 %v1323
        %v2032 = vunpack.c.l.b16 %v1324
        %v2033 = vunpack.c.h.b16 %v1324
        %v2034 = vunpack.c.l.b16 %v1325
        %v2035 = vunpack.c.h.b16 %v1325
        %v2036 = vunpack.c.l.b16 %v1326
        %v2037 = vunpack.c.h.b16 %v1326
        %v2038 = vunpack.c.l.b16 %v1327
        %v2039 = vunpack.c.h.b16 %v1327
        %v2040 = vunpack.c.l.b16 %v1328
        %v2041 = vunpack.c.h.b16 %v1328
        %v2042 = vunpack.c.l.b16 %v1329
        %v2043 = vunpack.c.h.b16 %v1329
        %v2044 = vunpack.c.l.b16 %v1330
        %v2045 = vunpack.c.h.b16 %v1330
        %v2046 = vunpack.c.l.b16 %v1331
        %v2047 = vunpack.c.h.b16 %v1331
        %v2048 = vunpack.c.l.b16 %v1332
        %v2049 = vunpack.c.h.b16 %v1332
        %v2050 = vunpack.c.l.b16 %v1333
        %v2051 = vunpack.c.h.b16 %v1333
        %v2052 = vunpack.c.l.b16 %v1334
        %v2053 = vunpack.c.h.b16 %v1334
        %v2054 = vunpack.c.l.b16 %v1335
        %v2055 = vunpack.c.h.b16 %v1335
        %v2056 = vunpack.c.l.b16 %v1336
        %v2057 = vunpack.c.h.b16 %v1336
        %v2058 = vunpack.c.l.b16 %v1337
        %v2059 = vunpack.c.h.b16 %v1337
        %v2060 = vunpack.c.l.b16 %v1338
        %v2061 = vunpack.c.h.b16 %v1338
        %v2062 = vunpack.c.l.b16 %v1339
        %v2063 = vunpack.c.h.b16 %v1339
        %v2064 = vunpack.c.l.b16 %v1340
        %v2065 = vunpack.c.h.b16 %v1340
        %v2066 = vunpack.c.l.b16 %v1341
        %v2067 = vunpack.c.h.b16 %v1341
        %v2068 = vunpack.c.l.b16 %v1342
        %v2069 = vunpack.c.h.b16 %v1342
        %v2070 = vunpack.c.l.b16 %v1343
        %v2071 = vunpack.c.h.b16 %v1343
        %v2072 = vunpack.c.l.b16 %v1344
        %v2073 = vunpack.c.h.b16 %v1344
        %v2074 = vunpack.c.l.b16 %v1345
        %v2075 = vunpack.c.h.b16 %v1345
        %v2076 = vunpack.c.l.b16 %v1346
        %v2077 = vunpack.c.h.b16 %v1346
        %v2078 = vunpack.c.l.b16 %v1347
        %v2079 = vunpack.c.h.b16 %v1347
        %v2080 = vunpack.c.l.b16 %v1348
        %v2081 = vunpack.c.h.b16 %v1348
        %v2082 = vunpack.c.l.b16 %v1349
        %v2083 = vunpack.c.h.b16 %v1349
        %v2084 = vunpack.c.l.b16 %v1350
        %v2085 = vunpack.c.h.b16 %v1350
        %v2086 = vunpack.c.l.b16 %v1351
        %v2087 = vunpack.c.h.b16 %v1351
        %v2088 = vunpack.c.l.b16 %v1352
        %v2089 = vunpack.c.h.b16 %v1352
        %v2090 = vunpack.c.l.b16 %v1353
        %v2091 = vunpack.c.h.b16 %v1353
        %v2092 = vunpack.c.l.b16 %v1354
        %v2093 = vunpack.c.h.b16 %v1354
        %v2094 = vunpack.c.l.b16 %v1355
        %v2095 = vunpack.c.h.b16 %v1355
        %v2096 = vunpack.c.l.b16 %v1356
        %v2097 = vunpack.c.h.b16 %v1356
        %v2098 = vunpack.c.l.b16 %v1357
        %v2099 = vunpack.c.h.b16 %v1357
        %v2100 = vunpack.c.l.b16 %v1358
        %v2101 = vunpack.c.h.b16 %v1358
        %v2102 = vunpack.c.l.b16 %v1359
        %v2103 = vunpack.c.h.b16 %v1359
        %v2104 = vunpack.c.l.b16 %v1360
        %v2105 = vunpack.c.h.b16 %v1360
        %v2106 = vunpack.c.l.b16 %v1361
        %v2107 = vunpack.c.h.b16 %v1361
        %v2108 = vunpack.c.l.b16 %v1362
        %v2109 = vunpack.c.h.b16 %v1362
        %v2110 = vunpack.c.l.b16 %v1363
        %v2111 = vunpack.c.h.b16 %v1363
        %v2112 = vunpack.c.l.b16 %v1364
        %v2113 = vunpack.c.h.b16 %v1364
        %v2114 = vunpack.c.l.b16 %v1365
        %v2115 = vunpack.c.h.b16 %v1365
        %v2116 = vunpack.c.l.b16 %v1366
        %v2117 = vunpack.c.h.b16 %v1366
        %v2118 = vunpack.c.l.b16 %v1367
        %v2119 = vunpack.c.h.b16 %v1367
        %v2120 = vunpack.c.l.b16 %v1368
        %v2121 = vunpack.c.h.b16 %v1368
        %v2122 = vunpack.c.l.b16 %v1369
        %v2123 = vunpack.c.h.b16 %v1369
        %v2124 = vunpack.c.l.b16 %v1370
        %v2125 = vunpack.c.h.b16 %v1370
        %v2126 = vunpack.c.l.b16 %v1371
        %v2127 = vunpack.c.h.b16 %v1371
        %v2128 = vunpack.c.l.b16 %v1372
        %v2129 = vunpack.c.h.b16 %v1372
        %v2130 = vunpack.c.l.b16 %v1373
        %v2131 = vunpack.c.h.b16 %v1373
        %v2132 = vunpack.c.l.b16 %v1374
        %v2133 = vunpack.c.h.b16 %v1374
        %v2134 = vunpack.c.l.b16 %v1375
        %v2135 = vunpack.c.h.b16 %v1375
        %v2136 = vunpack.c.l.b16 %v1376
        %v2137 = vunpack.c.h.b16 %v1376
        %v2138 = vunpack.c.l.b16 %v1377
        %v2139 = vunpack.c.h.b16 %v1377
        %v2140 = vunpack.c.l.b16 %v1378
        %v2141 = vunpack.c.h.b16 %v1378
        %v2142 = vunpack.c.l.b16 %v1379
        %v2143 = vunpack.c.h.b16 %v1379
        %v2144 = vunpack.c.l.b16 %v1380
        %v2145 = vunpack.c.h.b16 %v1380
        %v2146 = vunpack.c.l.b16 %v1381
        %v2147 = vunpack.c.h.b16 %v1381
        %v2148 = vunpack.c.l.b16 %v1382
        %v2149 = vunpack.c.h.b16 %v1382
        %v2150 = vunpack.c.l.b16 %v1383
        %v2151 = vunpack.c.h.b16 %v1383
        %v2152 = vunpack.c.l.b16 %v1384
        %v2153 = vunpack.c.h.b16 %v1384
        %v2154 = vunpack.c.l.b16 %v1385
        %v2155 = vunpack.c.h.b16 %v1385
        %v2156 = vunpack.c.l.b16 %v1386
        %v2157 = vunpack.c.h.b16 %v1386
        %v2158 = vunpack.c.l.b16 %v1387
        %v2159 = vunpack.c.h.b16 %v1387
        %v2160 = vunpack.c.l.b16 %v1388
        %v2161 = vunpack.c.h.b16 %v1388
        %v2162 = vunpack.c.l.b16 %v1389
        %v2163 = vunpack.c.h.b16 %v1389
        %v2164 = vunpack.c.l.b16 %v1390
        %v2165 = vunpack.c.h.b16 %v1390
        %v2166 = vunpack.c.l.b16 %v1391
        %v2167 = vunpack.c.h.b16 %v1391
        %v2168 = vunpack.c.l.b16 %v1392
        %v2169 = vunpack.c.h.b16 %v1392
        %v2170 = vunpack.c.l.b16 %v1393
        %v2171 = vunpack.c.h.b16 %v1393
        %v2172 = vunpack.c.l.b16 %v1394
        %v2173 = vunpack.c.h.b16 %v1394
        %v2174 = vunpack.c.l.b16 %v1395
        %v2175 = vunpack.c.h.b16 %v1395
        %v2176 = vpack.c.b16 %v1666, %v1664
        %v2177 = vpack.c.b16 %v1667, %v1665
        %v2178 = vpack.c.b16 %v1670, %v1668
        %v2179 = vpack.c.b16 %v1671, %v1669
        %v2180 = vpack.c.b16 %v1674, %v1672
        %v2181 = vpack.c.b16 %v1675, %v1673
        %v2182 = vpack.c.b16 %v1678, %v1676
        %v2183 = vpack.c.b16 %v1679, %v1677
        %v2184 = vpack.c.b16 %v1682, %v1680
        %v2185 = vpack.c.b16 %v1683, %v1681
        %v2186 = vpack.c.b16 %v1686, %v1684
        %v2187 = vpack.c.b16 %v1687, %v1685
        %v2188 = vpack.c.b16 %v1690, %v1688
        %v2189 = vpack.c.b16 %v1691, %v1689
        %v2190 = vpack.c.b16 %v1694, %v1692
        %v2191 = vpack.c.b16 %v1695, %v1693
        %v2192 = vpack.c.b16 %v1698, %v1696
        %v2193 = vpack.c.b16 %v1699, %v1697
        %v2194 = vpack.c.b16 %v1702, %v1700
        %v2195 = vpack.c.b16 %v1703, %v1701
        %v2196 = vpack.c.b16 %v1706, %v1704
        %v2197 = vpack.c.b16 %v1707, %v1705
        %v2198 = vpack.c.b16 %v1710, %v1708
        %v2199 = vpack.c.b16 %v1711, %v1709
        %v2200 = vpack.c.b16 %v1714, %v1712
        %v2201 = vpack.c.b16 %v1715, %v1713
        %v2202 = vpack.c.b16 %v1718, %v1716
        %v2203 = vpack.c.b16 %v1719, %v1717
        %v2204 = vpack.c.b16 %v1722, %v1720
        %v2205 = vpack.c.b16 %v1723, %v1721
        %v2206 = vpack.c.b16 %v1726, %v1724
        %v2207 = vpack.c.b16 %v1727, %v1725
        %v2208 = vpack.c.b16 %v1730, %v1728
        %v2209 = vpack.c.b16 %v1731, %v1729
        %v2210 = vpack.c.b16 %v1734, %v1732
        %v2211 = vpack.c.b16 %v1735, %v1733
        %v2212 = vpack.c.b16 %v1738, %v1736
        %v2213 = vpack.c.b16 %v1739, %v1737
        %v2214 = vpack.c.b16 %v1742, %v1740
        %v2215 = vpack.c.b16 %v1743, %v1741
        %v2216 = vpack.c.b16 %v1746, %v1744
        %v2217 = vpack.c.b16 %v1747, %v1745
        %v2218 = vpack.c.b16 %v1750, %v1748
        %v2219 = vpack.c.b16 %v1751, %v1749
        %v2220 = vpack.c.b16 %v1754, %v1752
        %v2221 = vpack.c.b16 %v1755, %v1753
        %v2222 = vpack.c.b16 %v1758, %v1756
        %v2223 = vpack.c.b16 %v1759, %v1757
        %v2224 = vpack.c.b16 %v1762, %v1760
        %v2225 = vpack.c.b16 %v1763, %v1761
        %v2226 = vpack.c.b16 %v1766, %v1764
        %v2227 = vpack.c.b16 %v1767, %v1765
        %v2228 = vpack.c.b16 %v1770, %v1768
        %v2229 = vpack.c.b16 %v1771, %v1769
        %v2230 = vpack.c.b16 %v1774, %v1772
        %v2231 = vpack.c.b16 %v1775, %v1773
        %v2232 = vpack.c.b16 %v1778, %v1776
        %v2233 = vpack.c.b16 %v1779, %v1777
        %v2234 = vpack.c.b16 %v1782, %v1780
        %v2235 = vpack.c.b16 %v1783, %v1781
        %v2236 = vpack.c.b16 %v1786, %v1784
        %v2237 = vpack.c.b16 %v1787, %v1785
        %v2238 = vpack.c.b16 %v1790, %v1788
        %v2239 = vpack.c.b16 %v1791, %v1789
        %v2240 = vpack.c.b16 %v1794, %v1792
        %v2241 = vpack.c.b16 %v1795, %v1793
        %v2242 = vpack.c.b16 %v1798, %v1796
        %v2243 = vpack.c.b16 %v1799, %v1797
        %v2244 = vpack.c.b16 %v1802, %v1800
        %v2245 = vpack.c.b16 %v1803, %v1801
        %v2246 = vpack.c.b16 %v1806, %v1804
        %v2247 = vpack.c.b16 %v1807, %v1805
        %v2248 = vpack.c.b16 %v1810, %v1808
        %v2249 = vpack.c.b16 %v1811, %v1809
        %v2250 = vpack.c.b16 %v1814, %v1812
        %v2251 = vpack.c.b16 %v1815, %v1813
        %v2252 = vpack.c.b16 %v1818, %v1816
        %v2253 = vpack.c.b16 %v1819, %v1817
        %v2254 = vpack.c.b16 %v1822, %v1820
        %v2255 = vpack.c.b16 %v1823, %v1821
        %v2256 = vpack.c.b16 %v1826, %v1824
        %v2257 = vpack.c.b16 %v1827, %v1825
        %v2258 = vpack.c.b16 %v1830, %v1828
        %v2259 = vpack.c.b16 %v1831, %v1829
        %v2260 = vpack.c.b16 %v1834, %v1832
        %v2261 = vpack.c.b16 %v1835, %v1833
        %v2262 = vpack.c.b16 %v1838, %v1836
        %v2263 = vpack.c.b16 %v1839, %v1837
        %v2264 = vpack.c.b16 %v1842, %v1840
        %v2265 = vpack.c.b16 %v1843, %v1841
        %v2266 = vpack.c.b16 %v1846, %v1844
        %v2267 = vpack.c.b16 %v1847, %v1845
        %v2268 = vpack.c.b16 %v1850, %v1848
        %v2269 = vpack.c.b16 %v1851, %v1849
        %v2270 = vpack.c.b16 %v1854, %v1852
        %v2271 = vpack.c.b16 %v1855, %v1853
        %v2272 = vpack.c.b16 %v1858, %v1856
        %v2273 = vpack.c.b16 %v1859, %v1857
        %v2274 = vpack.c.b16 %v1862, %v1860
        %v2275 = vpack.c.b16 %v1863, %v1861
        %v2276 = vpack.c.b16 %v1866, %v1864
        %v2277 = vpack.c.b16 %v1867, %v1865
        %v2278 = vpack.c.b16 %v1870, %v1868
        %v2279 = vpack.c.b16 %v1871, %v1869
        %v2280 = vpack.c.b16 %v1874, %v1872
        %v2281 = vpack.c.b16 %v1875, %v1873
        %v2282 = vpack.c.b16 %v1878, %v1876
        %v2283 = vpack.c.b16 %v1879, %v1877
        %v2284 = vpack.c.b16 %v1882, %v1880
        %v2285 = vpack.c.b16 %v1883, %v1881
        %v2286 = vpack.c.b16 %v1886, %v1884
        %v2287 = vpack.c.b16 %v1887, %v1885
        %v2288 = vpack.c.b16 %v1890, %v1888
        %v2289 = vpack.c.b16 %v1891, %v1889
        %v2290 = vpack.c.b16 %v1894, %v1892
        %v2291 = vpack.c.b16 %v1895, %v1893
        %v2292 = vpack.c.b16 %v1898, %v1896
        %v2293 = vpack.c.b16 %v1899, %v1897
        %v2294 = vpack.c.b16 %v1902, %v1900
        %v2295 = vpack.c.b16 %v1903, %v1901
        %v2296 = vpack.c.b16 %v1906, %v1904
        %v2297 = vpack.c.b16 %v1907, %v1905
        %v2298 = vpack.c.b16 %v1910, %v1908
        %v2299 = vpack.c.b16 %v1911, %v1909
        %v2300 = vpack.c.b16 %v1914, %v1912
        %v2301 = vpack.c.b16 %v1915, %v1913
        %v2302 = vpack.c.b16 %v1918, %v1916
        %v2303 = vpack.c.b16 %v1919, %v1917
        %v2304 = vpack.c.b16 %v1922, %v1920
        %v2305 = vpack.c.b16 %v1923, %v1921
        %v2306 = vpack.c.b16 %v1926, %v1924
        %v2307 = vpack.c.b16 %v1927, %v1925
        %v2308 = vpack.c.b16 %v1930, %v1928
        %v2309 = vpack.c.b16 %v1931, %v1929
        %v2310 = vpack.c.b16 %v1934, %v1932
        %v2311 = vpack.c.b16 %v1935, %v1933
        %v2312 = vpack.c.b16 %v1938, %v1936
        %v2313 = vpack.c.b16 %v1939, %v1937
        %v2314 = vpack.c.b16 %v1942, %v1940
        %v2315 = vpack.c.b16 %v1943, %v1941
        %v2316 = vpack.c.b16 %v1946, %v1944
        %v2317 = vpack.c.b16 %v1947, %v1945
        %v2318 = vpack.c.b16 %v1950, %v1948
        %v2319 = vpack.c.b16 %v1951, %v1949
        %v2320 = vpack.c.b16 %v1954, %v1952
        %v2321 = vpack.c.b16 %v1955, %v1953
        %v2322 = vpack.c.b16 %v1958, %v1956
        %v2323 = vpack.c.b16 %v1959, %v1957
        %v2324 = vpack.c.b16 %v1962, %v1960
        %v2325 = vpack.c.b16 %v1963, %v1961
        %v2326 = vpack.c.b16 %v1966, %v1964
        %v2327 = vpack.c.b16 %v1967, %v1965
        %v2328 = vpack.c.b16 %v1970, %v1968
        %v2329 = vpack.c.b16 %v1971, %v1969
        %v2330 = vpack.c.b16 %v1974, %v1972
        %v2331 = vpack.c.b16 %v1975, %v1973
        %v2332 = vpack.c.b16 %v1978, %v1976
        %v2333 = vpack.c.b16 %v1979, %v1977
        %v2334 = vpack.c.b16 %v1982, %v1980
        %v2335 = vpack.c.b16 %v1983, %v1981
        %v2336 = vpack.c.b16 %v1986, %v1984
        %v2337 = vpack.c.b16 %v1987, %v1985
        %v2338 = vpack.c.b16 %v1990, %v1988
        %v2339 = vpack.c.b16 %v1991, %v1989
        %v2340 = vpack.c.b16 %v1994, %v1992
        %v2341 = vpack.c.b16 %v1995, %v1993
        %v2342 = vpack.c.b16 %v1998, %v1996
        %v2343 = vpack.c.b16 %v1999, %v1997
        %v2344 = vpack.c.b16 %v2002, %v2000
        %v2345 = vpack.c.b16 %v2003, %v2001
        %v2346 = vpack.c.b16 %v2006, %v2004
        %v2347 = vpack.c.b16 %v2007, %v2005
        %v2348 = vpack.c.b16 %v2010, %v2008
        %v2349 = vpack.c.b16 %v2011, %v2009
        %v2350 = vpack.c.b16 %v2014, %v2012
        %v2351 = vpack.c.b16 %v2015, %v2013
        %v2352 = vpack.c.b16 %v2018, %v2016
        %v2353 = vpack.c.b16 %v2019, %v2017
        %v2354 = vpack.c.b16 %v2022, %v2020
        %v2355 = vpack.c.b16 %v2023, %v2021
        %v2356 = vpack.c.b16 %v2026, %v2024
        %v2357 = vpack.c.b16 %v2027, %v2025
        %v2358 = vpack.c.b16 %v2030, %v2028
        %v2359 = vpack.c.b16 %v2031, %v2029
        %v2360 = vpack.c.b16 %v2034, %v2032
        %v2361 = vpack.c.b16 %v2035, %v2033
        %v2362 = vpack.c.b16 %v2038, %v2036
        %v2363 = vpack.c.b16 %v2039, %v2037
        %v2364 = vpack.c.b16 %v2042, %v2040
        %v2365 = vpack.c.b16 %v2043, %v2041
        %v2366 = vpack.c.b16 %v2046, %v2044
        %v2367 = vpack.c.b16 %v2047, %v2045
        %v2368 = vpack.c.b16 %v2050, %v2048
        %v2369 = vpack.c.b16 %v2051, %v2049
        %v2370 = vpack.c.b16 %v2054, %v2052
        %v2371 = vpack.c.b16 %v2055, %v2053
        %v2372 = vpack.c.b16 %v2058, %v2056
        %v2373 = vpack.c.b16 %v2059, %v2057
        %v2374 = vpack.c.b16 %v2062, %v2060
        %v2375 = vpack.c.b16 %v2063, %v2061
        %v2376 = vpack.c.b16 %v2066, %v2064
        %v2377 = vpack.c.b16 %v2067, %v2065
        %v2378 = vpack.c.b16 %v2070, %v2068
        %v2379 = vpack.c.b16 %v2071, %v2069
        %v2380 = vpack.c.b16 %v2074, %v2072
        %v2381 = vpack.c.b16 %v2075, %v2073
        %v2382 = vpack.c.b16 %v2078, %v2076
        %v2383 = vpack.c.b16 %v2079, %v2077
        %v2384 = vpack.c.b16 %v2082, %v2080
        %v2385 = vpack.c.b16 %v2083, %v2081
        %v2386 = vpack.c.b16 %v2086, %v2084
        %v2387 = vpack.c.b16 %v2087, %v2085
        %v2388 = vpack.c.b16 %v2090, %v2088
        %v2389 = vpack.c.b16 %v2091, %v2089
        %v2390 = vpack.c.b16 %v2094, %v2092
        %v2391 = vpack.c.b16 %v2095, %v2093
        %v2392 = vpack.c.b16 %v2098, %v2096
        %v2393 = vpack.c.b16 %v2099, %v2097
        %v2394 = vpack.c.b16 %v2102, %v2100
        %v2395 = vpack.c.b16 %v2103, %v2101
        %v2396 = vpack.c.b16 %v2106, %v2104
        %v2397 = vpack.c.b16 %v2107, %v2105
        %v2398 = vpack.c.b16 %v2110, %v2108
        %v2399 = vpack.c.b16 %v2111, %v2109
        %v2400 = vpack.c.b16 %v2114, %v2112
        %v2401 = vpack.c.b16 %v2115, %v2113
        %v2402 = vpack.c.b16 %v2118, %v2116
        %v2403 = vpack.c.b16 %v2119, %v2117
        %v2404 = vpack.c.b16 %v2122, %v2120
        %v2405 = vpack.c.b16 %v2123, %v2121
        %v2406 = vpack.c.b16 %v2126, %v2124
        %v2407 = vpack.c.b16 %v2127, %v2125
        %v2408 = vpack.c.b16 %v2130, %v2128
        %v2409 = vpack.c.b16 %v2131, %v2129
        %v2410 = vpack.c.b16 %v2134, %v2132
        %v2411 = vpack.c.b16 %v2135, %v2133
        %v2412 = vpack.c.b16 %v2138, %v2136
        %v2413 = vpack.c.b16 %v2139, %v2137
        %v2414 = vpack.c.b16 %v2142, %v2140
        %v2415 = vpack.c.b16 %v2143, %v2141
        %v2416 = vpack.c.b16 %v2146, %v2144
        %v2417 = vpack.c.b16 %v2147, %v2145
        %v2418 = vpack.c.b16 %v2150, %v2148
        %v2419 = vpack.c.b16 %v2151, %v2149
        %v2420 = vpack.c.b16 %v2154, %v2152
        %v2421 = vpack.c.b16 %v2155, %v2153
        %v2422 = vpack.c.b16 %v2158, %v2156
        %v2423 = vpack.c.b16 %v2159, %v2157
        %v2424 = vpack.c.b16 %v2162, %v2160
        %v2425 = vpack.c.b16 %v2163, %v2161
        %v2426 = vpack.c.b16 %v2166, %v2164
        %v2427 = vpack.c.b16 %v2167, %v2165
        %v2428 = vpack.c.b16 %v2170, %v2168
        %v2429 = vpack.c.b16 %v2171, %v2169
        %v2430 = vpack.c.b16 %v2174, %v2172
        %v2431 = vpack.c.b16 %v2175, %v2173
        %2688 = vmatprep.subr.bf16.mxu0 %v2177
        %2689 = vmatpush1.bf16.msra.mxu0 %v2176
        %2690 = vmatprep.subr.bf16.mxu0 %v2179
        %2691 = vmatpush1.bf16.msra.mxu0 %v2178
        %2692 = vmatprep.subr.bf16.mxu0 %v2181
        %2693 = vmatpush1.bf16.msra.mxu0 %v2180
        %2694 = vmatprep.subr.bf16.mxu0 %v2183
        %2695 = vmatpush1.bf16.msra.mxu0 %v2182
        %2696 = vmatprep.subr.bf16.mxu0 %v2185
        %2697 = vmatpush1.bf16.msra.mxu0 %v2184
        %2698 = vmatprep.subr.bf16.mxu0 %v2187
        %2699 = vmatpush1.bf16.msra.mxu0 %v2186
        %2700 = vmatprep.subr.bf16.mxu0 %v2189
        %2701 = vmatpush1.bf16.msra.mxu0 %v2188
        %2702 = vmatprep.subr.bf16.mxu0 %v2191
        %2703 = vmatpush1.bf16.msra.mxu0 %v2190
        %2704 = vmatprep.subr.bf16.mxu0 %v2193
        %2705 = vmatpush1.bf16.msra.mxu0 %v2192
        %2706 = vmatprep.subr.bf16.mxu0 %v2195
        %2707 = vmatpush1.bf16.msra.mxu0 %v2194
        %2708 = vmatprep.subr.bf16.mxu0 %v2197
        %2709 = vmatpush1.bf16.msra.mxu0 %v2196
        %2710 = vmatprep.subr.bf16.mxu0 %v2199
        %2711 = vmatpush1.bf16.msra.mxu0 %v2198
        %2712 = vmatprep.subr.bf16.mxu0 %v2201
        %2713 = vmatpush1.bf16.msra.mxu0 %v2200
        %2714 = vmatprep.subr.bf16.mxu0 %v2203
        %2715 = vmatpush1.bf16.msra.mxu0 %v2202
        %2716 = vmatprep.subr.bf16.mxu0 %v2205
        %2717 = vmatpush1.bf16.msra.mxu0 %v2204
        %2718 = vmatprep.subr.bf16.mxu0 %v2207
        %2719 = vmatpush1.bf16.msra.mxu0 %v2206
        %2720 = vmatprep.mubr.bf16.mxu0 %v1125
        %2721 = vmatmul.mubr.bf16.gmra.mrb[0].mxu0 %v1124
        %v2722 = vpop.f32.mrb[0].mxu0
        %v2723 = vadd.f32 %v1401, %v2722
        %v2724 = vpop.f32.mrb[0].mxu0
        %v2725 = vadd.f32 %v1405, %v2724
        %v2726 = vpop.f32.mrb[0].mxu0
        %v2727 = vpop.f32.mrb[0].mxu0
        %2728 = vdwg.mxu0
        %2729 = vmatprep.subr.bf16.mxu0 %v2209
        %2730 = vmatpush1.bf16.msra.mxu0 %v2208
        %2731 = vmatprep.subr.bf16.mxu0 %v2211
        %2732 = vmatpush1.bf16.msra.mxu0 %v2210
        %2733 = vmatprep.subr.bf16.mxu0 %v2213
        %2734 = vmatpush1.bf16.msra.mxu0 %v2212
        %2735 = vmatprep.subr.bf16.mxu0 %v2215
        %2736 = vmatpush1.bf16.msra.mxu0 %v2214
        %2737 = vmatprep.subr.bf16.mxu0 %v2217
        %2738 = vmatpush1.bf16.msra.mxu0 %v2216
        %2739 = vmatprep.subr.bf16.mxu0 %v2219
        %2740 = vmatpush1.bf16.msra.mxu0 %v2218
        %2741 = vmatprep.subr.bf16.mxu0 %v2221
        %2742 = vmatpush1.bf16.msra.mxu0 %v2220
        %2743 = vmatprep.subr.bf16.mxu0 %v2223
        %2744 = vmatpush1.bf16.msra.mxu0 %v2222
        %2745 = vmatprep.subr.bf16.mxu0 %v2225
        %2746 = vmatpush1.bf16.msra.mxu0 %v2224
        %2747 = vmatprep.subr.bf16.mxu0 %v2227
        %2748 = vmatpush1.bf16.msra.mxu0 %v2226
        %2749 = vmatprep.subr.bf16.mxu0 %v2229
        %2750 = vmatpush1.bf16.msra.mxu0 %v2228
        %2751 = vmatprep.subr.bf16.mxu0 %v2231
        %2752 = vmatpush1.bf16.msra.mxu0 %v2230
        %2753 = vmatprep.subr.bf16.mxu0 %v2233
        %2754 = vmatpush1.bf16.msra.mxu0 %v2232
        %2755 = vmatprep.subr.bf16.mxu0 %v2235
        %2756 = vmatpush1.bf16.msra.mxu0 %v2234
        %2757 = vmatprep.subr.bf16.mxu0 %v2237
        %2758 = vmatpush1.bf16.msra.mxu0 %v2236
        %2759 = vmatprep.subr.bf16.mxu0 %v2239
        %2760 = vmatpush1.bf16.msra.mxu0 %v2238
        %2761 = vmatprep.mubr.bf16.mxu0 %v1127
        %2762 = vmatmul.mubr.bf16.gmra.mrb[0].mxu0 %v1126
        %v2763 = vpop.f32.mrb[0].mxu0
        %v2764 = vadd.f32 %v2723, %v2763
        %v2765 = vpop.f32.mrb[0].mxu0
        %v2766 = vadd.f32 %v2725, %v2765
        %v2767 = vpop.f32.mrb[0].mxu0
        %v2768 = vpop.f32.mrb[0].mxu0
        %2769 = vdwg.mxu0
        %2770 = vmatprep.subr.bf16.mxu0 %v2241
        %2771 = vmatpush1.bf16.msra.mxu0 %v2240
        %2772 = vmatprep.subr.bf16.mxu0 %v2243
        %2773 = vmatpush1.bf16.msra.mxu0 %v2242
        %2774 = vmatprep.subr.bf16.mxu0 %v2245
        %2775 = vmatpush1.bf16.msra.mxu0 %v2244
        %2776 = vmatprep.subr.bf16.mxu0 %v2247
        %2777 = vmatpush1.bf16.msra.mxu0 %v2246
        %2778 = vmatprep.subr.bf16.mxu0 %v2249
        %2779 = vmatpush1.bf16.msra.mxu0 %v2248
        %2780 = vmatprep.subr.bf16.mxu0 %v2251
        %2781 = vmatpush1.bf16.msra.mxu0 %v2250
        %2782 = vmatprep.subr.bf16.mxu0 %v2253
        %2783 = vmatpush1.bf16.msra.mxu0 %v2252
        %2784 = vmatprep.subr.bf16.mxu0 %v2255
        %2785 = vmatpush1.bf16.msra.mxu0 %v2254
        %2786 = vmatprep.subr.bf16.mxu0 %v2257
        %2787 = vmatpush1.bf16.msra.mxu0 %v2256
        %2788 = vmatprep.subr.bf16.mxu0 %v2259
        %2789 = vmatpush1.bf16.msra.mxu0 %v2258
        %2790 = vmatprep.subr.bf16.mxu0 %v2261
        %2791 = vmatpush1.bf16.msra.mxu0 %v2260
        %2792 = vmatprep.subr.bf16.mxu0 %v2263
        %2793 = vmatpush1.bf16.msra.mxu0 %v2262
        %2794 = vmatprep.subr.bf16.mxu0 %v2265
        %2795 = vmatpush1.bf16.msra.mxu0 %v2264
        %2796 = vmatprep.subr.bf16.mxu0 %v2267
        %2797 = vmatpush1.bf16.msra.mxu0 %v2266
        %2798 = vmatprep.subr.bf16.mxu0 %v2269
        %2799 = vmatpush1.bf16.msra.mxu0 %v2268
        %2800 = vmatprep.subr.bf16.mxu0 %v2271
        %2801 = vmatpush1.bf16.msra.mxu0 %v2270
        %2802 = vmatprep.mubr.bf16.mxu0 %v1129
        %2803 = vmatmul.mubr.bf16.gmra.mrb[0].mxu0 %v1128
        %v2804 = vpop.f32.mrb[0].mxu0
        %v2805 = vadd.f32 %v2764, %v2804
        %v2806 = vpop.f32.mrb[0].mxu0
        %v2807 = vadd.f32 %v2766, %v2806
        %v2808 = vpop.f32.mrb[0].mxu0
        %v2809 = vpop.f32.mrb[0].mxu0
        %2810 = vdwg.mxu0
        %2811 = vmatprep.subr.bf16.mxu0 %v2273
        %2812 = vmatpush1.bf16.msra.mxu0 %v2272
        %2813 = vmatprep.subr.bf16.mxu0 %v2275
        %2814 = vmatpush1.bf16.msra.mxu0 %v2274
        %2815 = vmatprep.subr.bf16.mxu0 %v2277
        %2816 = vmatpush1.bf16.msra.mxu0 %v2276
        %2817 = vmatprep.subr.bf16.mxu0 %v2279
        %2818 = vmatpush1.bf16.msra.mxu0 %v2278
        %2819 = vmatprep.subr.bf16.mxu0 %v2281
        %2820 = vmatpush1.bf16.msra.mxu0 %v2280
        %2821 = vmatprep.subr.bf16.mxu0 %v2283
        %2822 = vmatpush1.bf16.msra.mxu0 %v2282
        %2823 = vmatprep.subr.bf16.mxu0 %v2285
        %2824 = vmatpush1.bf16.msra.mxu0 %v2284
        %2825 = vmatprep.subr.bf16.mxu0 %v2287
        %2826 = vmatpush1.bf16.msra.mxu0 %v2286
        %2827 = vmatprep.subr.bf16.mxu0 %v2289
        %2828 = vmatpush1.bf16.msra.mxu0 %v2288
        %2829 = vmatprep.subr.bf16.mxu0 %v2291
        %2830 = vmatpush1.bf16.msra.mxu0 %v2290
        %2831 = vmatprep.subr.bf16.mxu0 %v2293
        %2832 = vmatpush1.bf16.msra.mxu0 %v2292
        %2833 = vmatprep.subr.bf16.mxu0 %v2295
        %2834 = vmatpush1.bf16.msra.mxu0 %v2294
        %2835 = vmatprep.subr.bf16.mxu0 %v2297
        %2836 = vmatpush1.bf16.msra.mxu0 %v2296
        %2837 = vmatprep.subr.bf16.mxu0 %v2299
        %2838 = vmatpush1.bf16.msra.mxu0 %v2298
        %2839 = vmatprep.subr.bf16.mxu0 %v2301
        %2840 = vmatpush1.bf16.msra.mxu0 %v2300
        %2841 = vmatprep.subr.bf16.mxu0 %v2303
        %2842 = vmatpush1.bf16.msra.mxu0 %v2302
        %2843 = vmatprep.mubr.bf16.mxu0 %v1131
        %2844 = vmatmul.mubr.bf16.gmra.mrb[0].mxu0 %v1130
        %v2845 = vpop.f32.mrb[0].mxu0
        %v2846 = vadd.f32 %v2805, %v2845
        %v2847 = vpop.f32.mrb[0].mxu0
        %v2848 = vadd.f32 %v2807, %v2847
        %v2849 = vpop.f32.mrb[0].mxu0
        %v2850 = vpop.f32.mrb[0].mxu0
        %2851 = vdwg.mxu0
        %2852 = vmatprep.subr.bf16.mxu0 %v2305
        %2853 = vmatpush1.bf16.msra.mxu0 %v2304
        %2854 = vmatprep.subr.bf16.mxu0 %v2307
        %2855 = vmatpush1.bf16.msra.mxu0 %v2306
        %2856 = vmatprep.subr.bf16.mxu0 %v2309
        %2857 = vmatpush1.bf16.msra.mxu0 %v2308
        %2858 = vmatprep.subr.bf16.mxu0 %v2311
        %2859 = vmatpush1.bf16.msra.mxu0 %v2310
        %2860 = vmatprep.subr.bf16.mxu0 %v2313
        %2861 = vmatpush1.bf16.msra.mxu0 %v2312
        %2862 = vmatprep.subr.bf16.mxu0 %v2315
        %2863 = vmatpush1.bf16.msra.mxu0 %v2314
        %2864 = vmatprep.subr.bf16.mxu0 %v2317
        %2865 = vmatpush1.bf16.msra.mxu0 %v2316
        %2866 = vmatprep.subr.bf16.mxu0 %v2319
        %2867 = vmatpush1.bf16.msra.mxu0 %v2318
        %2868 = vmatprep.subr.bf16.mxu0 %v2321
        %2869 = vmatpush1.bf16.msra.mxu0 %v2320
        %2870 = vmatprep.subr.bf16.mxu0 %v2323
        %2871 = vmatpush1.bf16.msra.mxu0 %v2322
        %2872 = vmatprep.subr.bf16.mxu0 %v2325
        %2873 = vmatpush1.bf16.msra.mxu0 %v2324
        %2874 = vmatprep.subr.bf16.mxu0 %v2327
        %2875 = vmatpush1.bf16.msra.mxu0 %v2326
        %2876 = vmatprep.subr.bf16.mxu0 %v2329
        %2877 = vmatpush1.bf16.msra.mxu0 %v2328
        %2878 = vmatprep.subr.bf16.mxu0 %v2331
        %2879 = vmatpush1.bf16.msra.mxu0 %v2330
        %2880 = vmatprep.subr.bf16.mxu0 %v2333
        %2881 = vmatpush1.bf16.msra.mxu0 %v2332
        %2882 = vmatprep.subr.bf16.mxu0 %v2335
        %2883 = vmatpush1.bf16.msra.mxu0 %v2334
        %2884 = vmatprep.mubr.bf16.mxu0 %v1133
        %2885 = vmatmul.mubr.bf16.gmra.mrb[0].mxu0 %v1132
        %v2886 = vpop.f32.mrb[0].mxu0
        %v2887 = vadd.f32 %v2846, %v2886
        %v2888 = vpop.f32.mrb[0].mxu0
        %v2889 = vadd.f32 %v2848, %v2888
        %v2890 = vpop.f32.mrb[0].mxu0
        %v2891 = vpop.f32.mrb[0].mxu0
        %2892 = vdwg.mxu0
        %2893 = vmatprep.subr.bf16.mxu0 %v2337
        %2894 = vmatpush1.bf16.msra.mxu0 %v2336
        %2895 = vmatprep.subr.bf16.mxu0 %v2339
        %2896 = vmatpush1.bf16.msra.mxu0 %v2338
        %2897 = vmatprep.subr.bf16.mxu0 %v2341
        %2898 = vmatpush1.bf16.msra.mxu0 %v2340
        %2899 = vmatprep.subr.bf16.mxu0 %v2343
        %2900 = vmatpush1.bf16.msra.mxu0 %v2342
        %2901 = vmatprep.subr.bf16.mxu0 %v2345
        %2902 = vmatpush1.bf16.msra.mxu0 %v2344
        %2903 = vmatprep.subr.bf16.mxu0 %v2347
        %2904 = vmatpush1.bf16.msra.mxu0 %v2346
        %2905 = vmatprep.subr.bf16.mxu0 %v2349
        %2906 = vmatpush1.bf16.msra.mxu0 %v2348
        %2907 = vmatprep.subr.bf16.mxu0 %v2351
        %2908 = vmatpush1.bf16.msra.mxu0 %v2350
        %2909 = vmatprep.subr.bf16.mxu0 %v2353
        %2910 = vmatpush1.bf16.msra.mxu0 %v2352
        %2911 = vmatprep.subr.bf16.mxu0 %v2355
        %2912 = vmatpush1.bf16.msra.mxu0 %v2354
        %2913 = vmatprep.subr.bf16.mxu0 %v2357
        %2914 = vmatpush1.bf16.msra.mxu0 %v2356
        %2915 = vmatprep.subr.bf16.mxu0 %v2359
        %2916 = vmatpush1.bf16.msra.mxu0 %v2358
        %2917 = vmatprep.subr.bf16.mxu0 %v2361
        %2918 = vmatpush1.bf16.msra.mxu0 %v2360
        %2919 = vmatprep.subr.bf16.mxu0 %v2363
        %2920 = vmatpush1.bf16.msra.mxu0 %v2362
        %2921 = vmatprep.subr.bf16.mxu0 %v2365
        %2922 = vmatpush1.bf16.msra.mxu0 %v2364
        %2923 = vmatprep.subr.bf16.mxu0 %v2367
        %2924 = vmatpush1.bf16.msra.mxu0 %v2366
        %2925 = vmatprep.mubr.bf16.mxu0 %v1135
        %2926 = vmatmul.mubr.bf16.gmra.mrb[0].mxu0 %v1134
        %v2927 = vpop.f32.mrb[0].mxu0
        %v2928 = vadd.f32 %v2887, %v2927
        %v2929 = vpop.f32.mrb[0].mxu0
        %v2930 = vadd.f32 %v2889, %v2929
        %v2931 = vpop.f32.mrb[0].mxu0
        %v2932 = vpop.f32.mrb[0].mxu0
        %2933 = vdwg.mxu0
        %2934 = vmatprep.subr.bf16.mxu0 %v2369
        %2935 = vmatpush1.bf16.msra.mxu0 %v2368
        %2936 = vmatprep.subr.bf16.mxu0 %v2371
        %2937 = vmatpush1.bf16.msra.mxu0 %v2370
        %2938 = vmatprep.subr.bf16.mxu0 %v2373
        %2939 = vmatpush1.bf16.msra.mxu0 %v2372
        %2940 = vmatprep.subr.bf16.mxu0 %v2375
        %2941 = vmatpush1.bf16.msra.mxu0 %v2374
        %2942 = vmatprep.subr.bf16.mxu0 %v2377
        %2943 = vmatpush1.bf16.msra.mxu0 %v2376
        %2944 = vmatprep.subr.bf16.mxu0 %v2379
        %2945 = vmatpush1.bf16.msra.mxu0 %v2378
        %2946 = vmatprep.subr.bf16.mxu0 %v2381
        %2947 = vmatpush1.bf16.msra.mxu0 %v2380
        %2948 = vmatprep.subr.bf16.mxu0 %v2383
        %2949 = vmatpush1.bf16.msra.mxu0 %v2382
        %2950 = vmatprep.subr.bf16.mxu0 %v2385
        %2951 = vmatpush1.bf16.msra.mxu0 %v2384
        %2952 = vmatprep.subr.bf16.mxu0 %v2387
        %2953 = vmatpush1.bf16.msra.mxu0 %v2386
        %2954 = vmatprep.subr.bf16.mxu0 %v2389
        %2955 = vmatpush1.bf16.msra.mxu0 %v2388
        %2956 = vmatprep.subr.bf16.mxu0 %v2391
        %2957 = vmatpush1.bf16.msra.mxu0 %v2390
        %2958 = vmatprep.subr.bf16.mxu0 %v2393
        %2959 = vmatpush1.bf16.msra.mxu0 %v2392
        %2960 = vmatprep.subr.bf16.mxu0 %v2395
        %2961 = vmatpush1.bf16.msra.mxu0 %v2394
        %2962 = vmatprep.subr.bf16.mxu0 %v2397
        %2963 = vmatpush1.bf16.msra.mxu0 %v2396
        %2964 = vmatprep.subr.bf16.mxu0 %v2399
        %2965 = vmatpush1.bf16.msra.mxu0 %v2398
        %2966 = vmatprep.mubr.bf16.mxu0 %v1137
        %2967 = vmatmul.mubr.bf16.gmra.mrb[0].mxu0 %v1136
        %v2968 = vpop.f32.mrb[0].mxu0
        %v2969 = vadd.f32 %v2928, %v2968
        %v2970 = vpop.f32.mrb[0].mxu0
        %v2971 = vadd.f32 %v2930, %v2970
        %v2972 = vpop.f32.mrb[0].mxu0
        %v2973 = vpop.f32.mrb[0].mxu0
        %2974 = vdwg.mxu0
        %2975 = vmatprep.subr.bf16.mxu0 %v2401
        %2976 = vmatpush1.bf16.msra.mxu0 %v2400
        %2977 = vmatprep.subr.bf16.mxu0 %v2403
        %2978 = vmatpush1.bf16.msra.mxu0 %v2402
        %2979 = vmatprep.subr.bf16.mxu0 %v2405
        %2980 = vmatpush1.bf16.msra.mxu0 %v2404
        %2981 = vmatprep.subr.bf16.mxu0 %v2407
        %2982 = vmatpush1.bf16.msra.mxu0 %v2406
        %2983 = vmatprep.subr.bf16.mxu0 %v2409
        %2984 = vmatpush1.bf16.msra.mxu0 %v2408
        %2985 = vmatprep.subr.bf16.mxu0 %v2411
        %2986 = vmatpush1.bf16.msra.mxu0 %v2410
        %2987 = vmatprep.subr.bf16.mxu0 %v2413
        %2988 = vmatpush1.bf16.msra.mxu0 %v2412
        %2989 = vmatprep.subr.bf16.mxu0 %v2415
        %2990 = vmatpush1.bf16.msra.mxu0 %v2414
        %2991 = vmatprep.subr.bf16.mxu0 %v2417
        %2992 = vmatpush1.bf16.msra.mxu0 %v2416
        %2993 = vmatprep.subr.bf16.mxu0 %v2419
        %2994 = vmatpush1.bf16.msra.mxu0 %v2418
        %2995 = vmatprep.subr.bf16.mxu0 %v2421
        %2996 = vmatpush1.bf16.msra.mxu0 %v2420
        %2997 = vmatprep.subr.bf16.mxu0 %v2423
        %2998 = vmatpush1.bf16.msra.mxu0 %v2422
        %2999 = vmatprep.subr.bf16.mxu0 %v2425
        %3000 = vmatpush1.bf16.msra.mxu0 %v2424
        %3001 = vmatprep.subr.bf16.mxu0 %v2427
        %3002 = vmatpush1.bf16.msra.mxu0 %v2426
        %3003 = vmatprep.subr.bf16.mxu0 %v2429
        %3004 = vmatpush1.bf16.msra.mxu0 %v2428
        %3005 = vmatprep.subr.bf16.mxu0 %v2431
        %3006 = vmatpush1.bf16.msra.mxu0 %v2430
        %3007 = vmatprep.mubr.bf16.mxu0 %v1139
        %3008 = vmatmul.mubr.bf16.gmra.mrb[0].mxu0 %v1138
        %v3009 = vpop.f32.mrb[0].mxu0
        %v3010 = vadd.f32 %v2969, %v3009
        %v3011 = vpop.f32.mrb[0].mxu0
        %v3012 = vadd.f32 %v2971, %v3011
        %v3013 = vpop.f32.mrb[0].mxu0
        %v3014 = vpop.f32.mrb[0].mxu0
        %3015 = vdwg.mxu0
        %v3016 = vmax.f32 %v3010, 0.0
        %v3017 = vmax.f32 %v3012, 0.0
        %v3018 = vld [vmem:[#allocation3] sm:$0x3]
        %v3019 = vld [vmem:[%s447] sm:$0xff]
        %v3020 = vld [vmem:[%s447 + $0x8] sm:$0xff]
        %v3021 = vld [vmem:[%s447 + $0x10] sm:$0xff]
        %v3022 = vld [vmem:[%s447 + $0x18] sm:$0xff]
        %v3023 = vld [vmem:[%s447 + $0x20] sm:$0xff]
        %v3024 = vld [vmem:[%s447 + $0x28] sm:$0xff]
        %v3025 = vld [vmem:[%s447 + $0x30] sm:$0xff]
        %v3026 = vld [vmem:[%s447 + $0x38] sm:$0xff]
        %v3027 = vld [vmem:[%s447 + $0x40] sm:$0xff]
        %v3028 = vld [vmem:[%s447 + $0x48] sm:$0xff]
        %v3029 = vld [vmem:[%s447 + $0x50] sm:$0xff]
        %v3030 = vld [vmem:[%s447 + $0x58] sm:$0xff]
        %v3031 = vld [vmem:[%s447 + $0x60] sm:$0xff]
        %v3032 = vld [vmem:[%s447 + $0x68] sm:$0xff]
        %v3033 = vld [vmem:[%s447 + $0x70] sm:$0xff]
        %v3034 = vld [vmem:[%s447 + $0x78] sm:$0xff]
        %v3035 = vld [vmem:[%s447 + $0x80] sm:$0xff]
        %v3036 = vld [vmem:[%s447 + $0x88] sm:$0xff]
        %v3037 = vld [vmem:[%s447 + $0x90] sm:$0xff]
        %v3038 = vld [vmem:[%s447 + $0x98] sm:$0xff]
        %v3039 = vld [vmem:[%s447 + $0xa0] sm:$0xff]
        %v3040 = vld [vmem:[%s447 + $0xa8] sm:$0xff]
        %v3041 = vld [vmem:[%s447 + $0xb0] sm:$0xff]
        %v3042 = vld [vmem:[%s447 + $0xb8] sm:$0xff]
        %v3043 = vld [vmem:[%s447 + $0xc0] sm:$0xff]
        %v3044 = vld [vmem:[%s447 + $0xc8] sm:$0xff]
        %v3045 = vld [vmem:[%s447 + $0xd0] sm:$0xff]
        %v3046 = vld [vmem:[%s447 + $0xd8] sm:$0xff]
        %v3047 = vld [vmem:[%s447 + $0xe0] sm:$0xff]
        %v3048 = vld [vmem:[%s447 + $0xe8] sm:$0xff]
        %v3049 = vld [vmem:[%s447 + $0xf0] sm:$0xff]
        %v3050 = vld [vmem:[%s447 + $0xf8] sm:$0xff]
        %3051 = vmatprep.subr.mxu0 0.0
        %3052 = vmatpush1.msra.mxu0 %v3019
        %3053 = vmatprep.subr.mxu0 0.0
        %3054 = vmatpush1.msra.mxu0 %v3020
        %3055 = vmatprep.subr.mxu0 0.0
        %3056 = vmatpush1.msra.mxu0 %v3021
        %3057 = vmatprep.subr.mxu0 0.0
        %3058 = vmatpush1.msra.mxu0 %v3022
        %3059 = vmatprep.subr.mxu0 0.0
        %3060 = vmatpush1.msra.mxu0 %v3023
        %3061 = vmatprep.subr.mxu0 0.0
        %3062 = vmatpush1.msra.mxu0 %v3024
        %3063 = vmatprep.subr.mxu0 0.0
        %3064 = vmatpush1.msra.mxu0 %v3025
        %3065 = vmatprep.subr.mxu0 0.0
        %3066 = vmatpush1.msra.mxu0 %v3026
        %3067 = vmatprep.subr.mxu0 0.0
        %3068 = vmatpush1.msra.mxu0 %v3027
        %3069 = vmatprep.subr.mxu0 0.0
        %3070 = vmatpush1.msra.mxu0 %v3028
        %3071 = vmatprep.subr.mxu0 0.0
        %3072 = vmatpush1.msra.mxu0 %v3029
        %3073 = vmatprep.subr.mxu0 0.0
        %3074 = vmatpush1.msra.mxu0 %v3030
        %3075 = vmatprep.subr.mxu0 0.0
        %3076 = vmatpush1.msra.mxu0 %v3031
        %3077 = vmatprep.subr.mxu0 0.0
        %3078 = vmatpush1.msra.mxu0 %v3032
        %3079 = vmatprep.subr.mxu0 0.0
        %3080 = vmatpush1.msra.mxu0 %v3033
        %3081 = vmatprep.subr.mxu0 0.0
        %3082 = vmatpush1.msra.mxu0 %v3034
        %3083 = vmatprep.subr.mxu0 0.0
        %3084 = vmatpush1.msra.mxu0 %v3035
        %3085 = vmatprep.subr.mxu0 0.0
        %3086 = vmatpush1.msra.mxu0 %v3036
        %3087 = vmatprep.subr.mxu0 0.0
        %3088 = vmatpush1.msra.mxu0 %v3037
        %3089 = vmatprep.subr.mxu0 0.0
        %3090 = vmatpush1.msra.mxu0 %v3038
        %3091 = vmatprep.subr.mxu0 0.0
        %3092 = vmatpush1.msra.mxu0 %v3039
        %3093 = vmatprep.subr.mxu0 0.0
        %3094 = vmatpush1.msra.mxu0 %v3040
        %3095 = vmatprep.subr.mxu0 0.0
        %3096 = vmatpush1.msra.mxu0 %v3041
        %3097 = vmatprep.subr.mxu0 0.0
        %3098 = vmatpush1.msra.mxu0 %v3042
        %3099 = vmatprep.subr.mxu0 0.0
        %3100 = vmatpush1.msra.mxu0 %v3043
        %3101 = vmatprep.subr.mxu0 0.0
        %3102 = vmatpush1.msra.mxu0 %v3044
        %3103 = vmatprep.subr.mxu0 0.0
        %3104 = vmatpush1.msra.mxu0 %v3045
        %3105 = vmatprep.subr.mxu0 0.0
        %3106 = vmatpush1.msra.mxu0 %v3046
        %3107 = vmatprep.subr.mxu0 0.0
        %3108 = vmatpush1.msra.mxu0 %v3047
        %3109 = vmatprep.subr.mxu0 0.0
        %3110 = vmatpush1.msra.mxu0 %v3048
        %3111 = vmatprep.subr.mxu0 0.0
        %3112 = vmatpush1.msra.mxu0 %v3049
        %3113 = vmatprep.subr.mxu0 0.0
        %3114 = vmatpush1.msra.mxu0 %v3050
        %3115 = vmatprep.mubr.f32.mxu0 %v3017
        %3116 = vmatmul.mubr.f32.gmra.mrb[0].mxu0 %v3016
        %v3117 = vpop.f32.mrb[0].mxu0
        %v3118 = vadd.f32 0.0, %v3117
        %v3119 = vpop.f32.mrb[0].mxu0
        %3120 = vdwg.mxu0
        %v3121 = vadd.f32 %v3018, %v3118
        %vm3122 = vcmask 123904
        %3123 = vst.msk [vmem:[#allocation3] sm:$0x3] %vm3122, %v3121
        %p3124 = scmp.eq.s32.totalorder %s31, 3
        // Predicated region
        $region81: #{tpu_custom_call.1} parent=51 // pred_check
          %p3125 = pneg %p3124
        $region82: #{tpu_custom_call.1} parent=51 // pred_check_branch
          %3127 = sbr.rel (%p3125) target = $region84
        $region83: #{tpu_custom_call.1} parent=51 // pred_region
          %v3128 = vld [vmem:[#allocation3] sm:$0x3]
          %v3129 = vld [vmem:[#allocation13] sm:$0x1]
          %v3131 = vlaneseq
          %v3132 = vshrl.u32 %v3131, 7
          %v3133 = vsub.s32 0, %v3132
          %v3134 = vrot.slane %v3129, %v3133
          %v3136 = vadd.f32 %v3128, %v3134
          %3137 = vst.msk [vmem:[#allocation15] sm:$0x3] %vm3122, %v3136
        $region84: #{tpu_custom_call.1} parent=51 // pred_fallthru
          _
        // Predicated region
        $region85: #{tpu_custom_call.1} parent=51 // pred_check
          %p3138 = pneg %p244
        $region86: #{tpu_custom_call.1} parent=51 // pred_check_branch
          %3140 = sbr.rel (%p3138) target = $region88
        $region87: #{tpu_custom_call.1} parent=51 // pred_region
          %s3142 = ssub.s32 32, 32
          %3143 = vsyncadd [#allocation6], %s3142
          %s3144 = smul.addr %s30, 32
          %s3145 = scalar_lea.hbm %s8, %s3144
          %s3147 = sshll.u32 [#allocation15], 4
          %s3148 = int_to_ptr.vmem [resolvable:$true] %s3147
          %3150 = dma.vmem_to_hbm [thread:$0]  %s3148, 32, %s3145, [#allocation6]
        $region88: #{tpu_custom_call.1} parent=51 // pred_fallthru
          _
        // Predicated region
        $region89: #{tpu_custom_call.1} parent=51 // pred_check
          %p3151 = pneg %p244
        $region90: #{tpu_custom_call.1} parent=51 // pred_check_branch
          %3153 = sbr.rel (%p3151) target = $region92
        $region91: #{tpu_custom_call.1} parent=51 // pred_region
          %3154 = dma.done [#allocation6], 32
        $region92: #{tpu_custom_call.1} parent=51 // pred_fallthru
          _
      $region52: #{tpu_custom_call.1} parent=5 // pred_fallthru
        _
      %p3155 = scmp.le.s32.totalorder 2, %s21
      // Predicated region
      $region93: #{tpu_custom_call.1} parent=5 // pred_check
        %p3156 = pneg %p3155
      $region94: #{tpu_custom_call.1} parent=5 // pred_check_branch
        %3158 = sbr.rel (%p3156) target = $region96
      $region95: #{tpu_custom_call.1} parent=5 // pred_region
        %s3159 = ssub.s32 %s21, 2
      $region96: #{tpu_custom_call.1} parent=5 // pred_fallthru
        _
    $region6: #{tpu_custom_call.1} parent=1 // loop_footer
      %s25 = sadd.s32 1, %s21
    $region7: #{tpu_custom_call.1} parent=1 // loop_footer_branch
      %20 = sbr.rel target = $region3
    $region8: #{tpu_custom_call.1} parent=1 // loop_exit
      _
    %3160 = vsyncpa [#allocation5], 1
    %s3161 = scalar_lea.sflag [#allocation5], 1
    %3162 = vsyncpa %s3161, 1
    %3163 = vsyncpa [#allocation8], 1
    %3164 = vsyncpa [#allocation11], 1
    %s3165 = scalar_lea.sflag [#allocation11], 1
    %3166 = vsyncpa %s3165, 1
    %3167 = vsyncpa [#allocation14], 1
    %3168 = vsyncpa [#allocation6], 1
    %s3169 = scalar_lea.sflag [#allocation6], 1
    %3170 = vsyncpa %s3169, 1

</llo_original>
